<compile_context>
chip_gen: v7x
topology: tpu7x:2x2x1
jax: 0.10.0
libtpu: 0.0.40
codegen_flags: <defaults>
</compile_context>

<pallas_src>
import functools

import jax
import jax.numpy as jnp
from jax import lax
from jax.experimental import pallas as pl
from jax.experimental.pallas import tpu as pltpu


# ----------------------------------------------------------------------------
# Kernel 1: fused  relu(X @ W + b)  for the conv (im2col) matmuls.
# ----------------------------------------------------------------------------
def _matmul_bias_relu_kernel(x_ref, w_ref, b_ref, o_ref):
    y = jnp.dot(x_ref[...], w_ref[...], preferred_element_type=jnp.float32)
    o_ref[...] = jnp.maximum(y + b_ref[...], 0.0)


def matmul_bias_relu(x, w, b, *, grid_m=1):
    """relu(x @ w + b).  x:(M,K), w:(K,N) pre-transposed, b:(1,N), all f32."""
    M, K = x.shape
    N = w.shape[1]
    if grid_m > 1:
        assert M % grid_m == 0 and (M // grid_m) % 8 == 0, (M, grid_m)
    tm = M // grid_m

    cost = pl.CostEstimate(
        flops=2 * M * K * N + 2 * M * N,
        transcendentals=0,
        bytes_accessed=4 * (M * K + K * N + N + M * N),
    )
    return pl.pallas_call(
        _matmul_bias_relu_kernel,
        out_shape=jax.ShapeDtypeStruct((M, N), jnp.float32),
        grid_spec=pltpu.PrefetchScalarGridSpec(
            num_scalar_prefetch=0,
            grid=(grid_m,),
            in_specs=[
                pl.BlockSpec((tm, K), lambda i: (i, 0)),
                pl.BlockSpec((K, N), lambda i: (0, 0)),
                pl.BlockSpec((1, N), lambda i: (0, 0)),
            ],
            out_specs=pl.BlockSpec((tm, N), lambda i: (i, 0)),
        ),
        compiler_params=pltpu.CompilerParams(
            dimension_semantics=("parallel",),      # splits M across v7x's 2 TCs
            vmem_limit_bytes=32 * 1024 * 1024,
        ),
        cost_estimate=cost,
    )(x, w, b)


# ----------------------------------------------------------------------------
# Kernel 2: fused conv3 + NCHW-flatten + fc4 (K-streamed) + fc5.
#   grid axis k runs over chunks of fc4's K dimension (7 spatial positions x
#   64 channels = 448 rows of the fc4 weight per step).  Step 0 also computes
#   the conv3 matmul and writes the flattened features into VMEM scratch; the
#   last step applies the fc4 bias/ReLU and the fc5 head.
# ----------------------------------------------------------------------------
def _head_kernel(p3_ref, w3_ref, b3_ref, w4_ref, b4_ref, w5_ref, b5_ref,
                 o_ref, flat_ref, acc_ref, *, batch, hw, chunk_hw):
    k = pl.program_id(0)

    @pl.when(k == 0)
    def _init():
        # conv3 as im2col matmul + bias + ReLU.  Rows of a3 are (n, h, w).
        a3 = jnp.dot(p3_ref[...], w3_ref[...],
                     preferred_element_type=jnp.float32)
        a3 = jnp.maximum(a3 + b3_ref[...], 0.0)                # (batch*hw, 64)
        c = a3.shape[1]
        # Flatten into (n_chunks, batch, chunk_hw*c) scratch; feature order is
        # (h, w, c) -- the fc4 weight rows were permuted to match once.
        for n in range(batch):
            for t in range(hw):
                blk, pos = t // chunk_hw, t % chunk_hw
                r = n * hw + t
                flat_ref[blk, n:n + 1, pos * c:(pos + 1) * c] = a3[r:r + 1, :]
        acc_ref[...] = jnp.zeros_like(acc_ref)

    # fc4 partial product against the streamed weight chunk (chunk_hw*64, 512).
    acc_ref[...] += jnp.dot(flat_ref[k], w4_ref[...],
                            preferred_element_type=jnp.float32)

    @pl.when(k == pl.num_programs(0) - 1)
    def _finalize():
        h = jnp.maximum(acc_ref[...] + b4_ref[...], 0.0)       # fc4 ReLU
        o_ref[...] = (jnp.dot(h, w5_ref[...],
                              preferred_element_type=jnp.float32)
                      + b5_ref[...])                           # fc5 (no ReLU)


def conv3_fc4_fc5(p3, w3, b3, w4, b4, w5, b5, *, batch, hw=49, chunk_hw=7):
    m3, k3 = p3.shape                 # (batch*49, 576)
    c3 = w3.shape[1]                  # 64
    kfc, n4 = w4.shape                # (3136, 512)
    n5 = w5.shape[1]                  # n_actions
    assert kfc == hw * c3 and hw % chunk_hw == 0 and m3 == batch * hw
    n_chunks = hw // chunk_hw         # 7
    chunk_k = chunk_hw * c3           # 448

    kernel = functools.partial(_head_kernel, batch=batch, hw=hw,
                               chunk_hw=chunk_hw)
    cost = pl.CostEstimate(
        flops=2 * (m3 * k3 * c3 + batch * kfc * n4 + batch * n4 * n5),
        transcendentals=0,
        bytes_accessed=4 * (m3 * k3 + k3 * c3 + c3 + kfc * n4 + n4
                            + n4 * n5 + n5 + batch * n5),
    )
    return pl.pallas_call(
        kernel,
        out_shape=jax.ShapeDtypeStruct((batch, n5), jnp.float32),
        grid_spec=pltpu.PrefetchScalarGridSpec(
            num_scalar_prefetch=0,
            grid=(n_chunks,),
            in_specs=[
                pl.BlockSpec((m3, k3), lambda k: (0, 0)),       # conv3 patches
                pl.BlockSpec((k3, c3), lambda k: (0, 0)),       # conv3 weight
                pl.BlockSpec((1, c3), lambda k: (0, 0)),        # conv3 bias
                pl.BlockSpec((chunk_k, n4), lambda k: (k, 0)),  # fc4 W streamed
                pl.BlockSpec((1, n4), lambda k: (0, 0)),        # fc4 bias
                pl.BlockSpec((n4, n5), lambda k: (0, 0)),       # fc5 weight
                pl.BlockSpec((1, n5), lambda k: (0, 0)),        # fc5 bias
            ],
            out_specs=pl.BlockSpec((batch, n5), lambda k: (0, 0)),
            scratch_shapes=[
                pltpu.VMEM((n_chunks, batch, chunk_k), jnp.float32),  # flat feats
                pltpu.VMEM((batch, n4), jnp.float32),                 # fc4 acc
            ],
        ),
        compiler_params=pltpu.CompilerParams(
            dimension_semantics=("arbitrary",),     # reduction over fc4's K
            vmem_limit_bytes=32 * 1024 * 1024,
        ),
        cost_estimate=cost,
    )(p3, w3, b3, w4, b4, w5, b5)


# ----------------------------------------------------------------------------
# Glue: im2col via a single XLA op per conv; feature order is (C_in, kh, kw),
# matching PyTorch's weight.reshape(C_out, C_in*kh*kw).
# ----------------------------------------------------------------------------
def _patches(x, ksize, stride, dn):
    return lax.conv_general_dilated_patches(
        x,
        filter_shape=(ksize, ksize),
        window_strides=(stride, stride),
        padding="VALID",
        dimension_numbers=dn,
        precision=lax.Precision.HIGHEST,   # exact gather (identity kernel)
    )


# ----------------------------------------------------------------------------
# One-time weight repacking (run OUTSIDE the hot path; removes all per-forward
# weight transposes).
# ----------------------------------------------------------------------------
def prepare_params(params):
    f32 = jnp.float32

    def conv_w(w):  # (C_out, C_in, kh, kw) -> (C_in*kh*kw, C_out)
        co = w.shape[0]
        return jnp.transpose(w.reshape(co, -1)).astype(f32)

    p = {
        "w1": conv_w(params["conv1_w"]),
        "b1": params["conv1_b"].reshape(1, -1).astype(f32),
        "w2": conv_w(params["conv2_w"]),
        "b2": params["conv2_b"].reshape(1, -1).astype(f32),
        "w3": conv_w(params["conv3_w"]),
        "b3": params["conv3_b"].reshape(1, -1).astype(f32),
    }
    # fc4 expects PyTorch's NCHW flatten order (c, h, w); the fused head kernel
    # produces features in (h, w, c) order, so permute the weight rows once.
    w4 = params["fc4_w"].reshape(512, 64, 7, 7)
    w4 = w4.transpose(0, 2, 3, 1).reshape(512, 7 * 7 * 64)
    p["w4"] = jnp.transpose(w4).astype(f32)                    # (3136, 512)
    p["b4"] = params["fc4_b"].reshape(1, -1).astype(f32)
    p["w5"] = jnp.transpose(params["fc5_w"]).astype(f32)       # (512, A)
    p["b5"] = params["fc5_b"].reshape(1, -1).astype(f32)
    return p


# ----------------------------------------------------------------------------
# QNetwork forward
# ----------------------------------------------------------------------------
def qnetwork_forward(prep, x):
    """x: (N, C_in, 84, 84) float32 NCHW -> (N, n_actions)."""
    n = x.shape[0]
    x = x.astype(jnp.float32)

    # conv1 (k=8, s=4): 84 -> 20
    p1 = _patches(x, 8, 4, ("NCHW", "OIHW", "NHWC"))           # (N,20,20,256)
    m1 = n * 20 * 20
    gm1 = 2 if (m1 % 2 == 0 and (m1 // 2) % 8 == 0) else 1
    a1 = matmul_bias_relu(p1.reshape(m1, 256), prep["w1"], prep["b1"],
                          grid_m=gm1)                          # (N*400, 32)

    # conv2 (k=4, s=2): 20 -> 9
    p2 = _patches(a1.reshape(n, 20, 20, 32), 4, 2,
                  ("NHWC", "HWIO", "NHWC"))                    # (N,9,9,512)
    a2 = matmul_bias_relu(p2.reshape(n * 9 * 9, 512),
                          prep["w2"], prep["b2"])              # (N*81, 64)

    # conv3 (k=3, s=1): 9 -> 7, fused with flatten + fc4 + fc5.
    p3 = _patches(a2.reshape(n, 9, 9, 64), 3, 1,
                  ("NHWC", "HWIO", "NHWC"))                    # (N,7,7,576)
    return conv3_fc4_fc5(p3.reshape(n * 7 * 7, 576),
                         prep["w3"], prep["b3"], prep["w4"], prep["b4"],
                         prep["w5"], prep["b5"], batch=n)      # (N, A)


def init_params(key, c_in, n_actions):
    """Deterministic init mimicking PyTorch default (uniform +- 1/sqrt(fan_in))."""
    def uniform(key, shape, fan_in):
        bound = 1.0 / jnp.sqrt(jnp.float32(fan_in))
        return jax.random.uniform(key, shape, jnp.float32, -bound, bound)

    keys = jax.random.split(key, 10)
    params = {}
    params["conv1_w"] = uniform(keys[0], (32, c_in, 8, 8), c_in * 8 * 8)
    params["conv1_b"] = uniform(keys[1], (32,), c_in * 8 * 8)
    params["conv2_w"] = uniform(keys[2], (64, 32, 4, 4), 32 * 4 * 4)
    params["conv2_b"] = uniform(keys[3], (64,), 32 * 4 * 4)
    params["conv3_w"] = uniform(keys[4], (64, 64, 3, 3), 64 * 3 * 3)
    params["conv3_b"] = uniform(keys[5], (64,), 64 * 3 * 3)
    params["fc4_w"] = uniform(keys[6], (512, 7 * 7 * 64), 7 * 7 * 64)
    params["fc4_b"] = uniform(keys[7], (512,), 7 * 7 * 64)
    params["fc5_w"] = uniform(keys[8], (n_actions, 512), 512)
    params["fc5_b"] = uniform(keys[9], (n_actions,), 512)
    return params


if __name__ == "__main__":
    key = jax.random.PRNGKey(0)
    k_param, k_input = jax.random.split(key)

    batch, c_in, n_actions = 2, 4, 6
    # fc4 hard-codes 7*7*64 features after conv3 => input spatial must be 84x84.
    x = jax.random.normal(k_input, (batch, c_in, 84, 84), jnp.float32)

    params = init_params(k_param, c_in, n_actions)
    prep = prepare_params(params)       # one-time weight repack (off hot path)

    fwd = jax.jit(qnetwork_forward)
    out = jax.block_until_ready(fwd(prep, x))

    assert out.shape == (batch, n_actions), out.shape
    assert out.dtype == jnp.float32
    assert bool(jnp.all(jnp.isfinite(out)))

    print("KERNEL_OK")
</pallas_src>

<mosaic_0001>
module attributes {stable_mosaic.version = 11 : i64} {
  func.func @_matmul_bias_relu_kernel(%arg0: i32, %arg1: memref<400x256xf32, #tpu.memory_space<vmem>>, %arg2: memref<256x32xf32, #tpu.memory_space<vmem>>, %arg3: memref<1x32xf32, #tpu.memory_space<vmem>>, %arg4: memref<400x32xf32, #tpu.memory_space<vmem>>) attributes {dimension_semantics = [#tpu.dimension_semantics<parallel>], iteration_bounds = array<i64: 2>, scalar_prefetch = 0 : i64, scratch_operands = 0 : i64, tpu.core_type = #tpu.core_type<tc>, window_params = [{transform_indices = @transform_0, window_bounds = array<i64: 400, 256>}, {pipeline_mode = #tpu.pipeline_mode<synchronous>, transform_indices = @transform_1, window_bounds = array<i64: 256, 32>}, {pipeline_mode = #tpu.pipeline_mode<synchronous>, transform_indices = @transform_2, window_bounds = array<i64: 1, 32>}, {transform_indices = @transform_3, window_bounds = array<i64: 400, 32>}]} {
    %c0 = arith.constant 0 : index
    %c0_0 = arith.constant 0 : index
    %0 = vector.load %arg1[%c0, %c0_0] : memref<400x256xf32, #tpu.memory_space<vmem>>, vector<400x256xf32>
    %c0_1 = arith.constant 0 : index
    %c0_2 = arith.constant 0 : index
    %1 = vector.load %arg2[%c0_1, %c0_2] : memref<256x32xf32, #tpu.memory_space<vmem>>, vector<256x32xf32>
    %cst = arith.constant dense<0.000000e+00> : vector<400x32xf32>
    %2 = tpu.matmul %0, %1, %cst {dimension_numbers = #tpu.dot_dimension_numbers<[1], [0], [0], [1], [0, 0, 1, 1], [], []>} : vector<400x256xf32>, vector<256x32xf32>, vector<400x32xf32> -> vector<400x32xf32>
    %c0_3 = arith.constant 0 : index
    %c0_4 = arith.constant 0 : index
    %3 = vector.load %arg3[%c0_3, %c0_4] : memref<1x32xf32, #tpu.memory_space<vmem>>, vector<1x32xf32>
    %4 = vector.broadcast %3 : vector<1x32xf32> to vector<400x32xf32>
    %5 = arith.addf %2, %4 : vector<400x32xf32>
    %cst_5 = arith.constant 0.000000e+00 : f32
    %6 = vector.broadcast %cst_5 : f32 to vector<400x32xf32>
    %7 = arith.maximumf %5, %6 : vector<400x32xf32>
    %c0_6 = arith.constant 0 : index
    %c0_7 = arith.constant 0 : index
    %8 = vector.load %arg4[%c0_6, %c0_7] : memref<400x32xf32, #tpu.memory_space<vmem>>, vector<400x32xf32>
    tpu.vector_store %arg4[%c0_6, %c0_7], %7 {strides = array<i32>} : memref<400x32xf32, #tpu.memory_space<vmem>>, vector<400x32xf32>,
    return
  }
  func.func @transform_0(%arg0: i32) -> (i32, i32) {
    %c0_i32 = arith.constant 0 : i32
    %c0_i32_0 = arith.constant 0 : i32
    return %arg0, %c0_i32 : i32, i32
  }
  func.func @transform_1(%arg0: i32) -> (i32, i32) {
    %c0_i32 = arith.constant 0 : i32
    %c0_i32_0 = arith.constant 0 : i32
    %c0_i32_1 = arith.constant 0 : i32
    return %c0_i32, %c0_i32_0 : i32, i32
  }
  func.func @transform_2(%arg0: i32) -> (i32, i32) {
    %c0_i32 = arith.constant 0 : i32
    %c0_i32_0 = arith.constant 0 : i32
    %c0_i32_1 = arith.constant 0 : i32
    return %c0_i32, %c0_i32_0 : i32, i32
  }
  func.func @transform_3(%arg0: i32) -> (i32, i32) {
    %c0_i32 = arith.constant 0 : i32
    %c0_i32_0 = arith.constant 0 : i32
    return %arg0, %c0_i32 : i32, i32
  }
}

module attributes {stable_mosaic.version = 11 : i64} {
  func.func @_matmul_bias_relu_kernel(%arg0: i32, %arg1: memref<162x512xf32, #tpu.memory_space<vmem>>, %arg2: memref<512x64xf32, #tpu.memory_space<vmem>>, %arg3: memref<1x64xf32, #tpu.memory_space<vmem>>, %arg4: memref<162x64xf32, #tpu.memory_space<vmem>>) attributes {dimension_semantics = [#tpu.dimension_semantics<parallel>], iteration_bounds = array<i64: 1>, scalar_prefetch = 0 : i64, scratch_operands = 0 : i64, tpu.core_type = #tpu.core_type<tc>, window_params = [{transform_indices = @transform_0, window_bounds = array<i64: 162, 512>}, {pipeline_mode = #tpu.pipeline_mode<synchronous>, transform_indices = @transform_1, window_bounds = array<i64: 512, 64>}, {pipeline_mode = #tpu.pipeline_mode<synchronous>, transform_indices = @transform_2, window_bounds = array<i64: 1, 64>}, {transform_indices = @transform_3, window_bounds = array<i64: 162, 64>}]} {
    %c0 = arith.constant 0 : index
    %c0_0 = arith.constant 0 : index
    %0 = vector.load %arg1[%c0, %c0_0] : memref<162x512xf32, #tpu.memory_space<vmem>>, vector<162x512xf32>
    %c0_1 = arith.constant 0 : index
    %c0_2 = arith.constant 0 : index
    %1 = vector.load %arg2[%c0_1, %c0_2] : memref<512x64xf32, #tpu.memory_space<vmem>>, vector<512x64xf32>
    %cst = arith.constant dense<0.000000e+00> : vector<162x64xf32>
    %2 = tpu.matmul %0, %1, %cst {dimension_numbers = #tpu.dot_dimension_numbers<[1], [0], [0], [1], [0, 0, 1, 1], [], []>} : vector<162x512xf32>, vector<512x64xf32>, vector<162x64xf32> -> vector<162x64xf32>
    %c0_3 = arith.constant 0 : index
    %c0_4 = arith.constant 0 : index
    %3 = vector.load %arg3[%c0_3, %c0_4] : memref<1x64xf32, #tpu.memory_space<vmem>>, vector<1x64xf32>
    %4 = vector.broadcast %3 : vector<1x64xf32> to vector<162x64xf32>
    %5 = arith.addf %2, %4 : vector<162x64xf32>
    %cst_5 = arith.constant 0.000000e+00 : f32
    %6 = vector.broadcast %cst_5 : f32 to vector<162x64xf32>
    %7 = arith.maximumf %5, %6 : vector<162x64xf32>
    %c0_6 = arith.constant 0 : index
    %c0_7 = arith.constant 0 : index
    %8 = vector.load %arg4[%c0_6, %c0_7] : memref<162x64xf32, #tpu.memory_space<vmem>>, vector<162x64xf32>
    tpu.vector_store %arg4[%c0_6, %c0_7], %7 {strides = array<i32>} : memref<162x64xf32, #tpu.memory_space<vmem>>, vector<162x64xf32>,
    return
  }
  func.func @transform_0(%arg0: i32) -> (i32, i32) {
    %c0_i32 = arith.constant 0 : i32
    %c0_i32_0 = arith.constant 0 : i32
    return %arg0, %c0_i32 : i32, i32
  }
  func.func @transform_1(%arg0: i32) -> (i32, i32) {
    %c0_i32 = arith.constant 0 : i32
    %c0_i32_0 = arith.constant 0 : i32
    %c0_i32_1 = arith.constant 0 : i32
    return %c0_i32, %c0_i32_0 : i32, i32
  }
  func.func @transform_2(%arg0: i32) -> (i32, i32) {
    %c0_i32 = arith.constant 0 : i32
    %c0_i32_0 = arith.constant 0 : i32
    %c0_i32_1 = arith.constant 0 : i32
    return %c0_i32, %c0_i32_0 : i32, i32
  }
  func.func @transform_3(%arg0: i32) -> (i32, i32) {
    %c0_i32 = arith.constant 0 : i32
    %c0_i32_0 = arith.constant 0 : i32
    return %arg0, %c0_i32 : i32, i32
  }
}

module attributes {stable_mosaic.version = 11 : i64} {
  func.func @_head_kernel(%arg0: i32, %arg1: memref<98x576xf32, #tpu.memory_space<vmem>>, %arg2: memref<576x64xf32, #tpu.memory_space<vmem>>, %arg3: memref<1x64xf32, #tpu.memory_space<vmem>>, %arg4: memref<448x512xf32, #tpu.memory_space<vmem>>, %arg5: memref<1x512xf32, #tpu.memory_space<vmem>>, %arg6: memref<512x6xf32, #tpu.memory_space<vmem>>, %arg7: memref<1x6xf32, #tpu.memory_space<vmem>>, %arg8: memref<2x6xf32, #tpu.memory_space<vmem>>, %arg9: memref<7x2x448xf32, #tpu.memory_space<vmem>>, %arg10: memref<2x512xf32, #tpu.memory_space<vmem>>) attributes {dimension_semantics = [#tpu.dimension_semantics<arbitrary>], iteration_bounds = array<i64: 7>, scalar_prefetch = 0 : i64, scratch_operands = 2 : i64, tpu.core_type = #tpu.core_type<tc>, window_params = [{pipeline_mode = #tpu.pipeline_mode<synchronous>, transform_indices = @transform_0, window_bounds = array<i64: 98, 576>}, {pipeline_mode = #tpu.pipeline_mode<synchronous>, transform_indices = @transform_1, window_bounds = array<i64: 576, 64>}, {pipeline_mode = #tpu.pipeline_mode<synchronous>, transform_indices = @transform_2, window_bounds = array<i64: 1, 64>}, {transform_indices = @transform_3, window_bounds = array<i64: 448, 512>}, {pipeline_mode = #tpu.pipeline_mode<synchronous>, transform_indices = @transform_4, window_bounds = array<i64: 1, 512>}, {pipeline_mode = #tpu.pipeline_mode<synchronous>, transform_indices = @transform_5, window_bounds = array<i64: 512, 6>}, {pipeline_mode = #tpu.pipeline_mode<synchronous>, transform_indices = @transform_6, window_bounds = array<i64: 1, 6>}, {pipeline_mode = #tpu.pipeline_mode<synchronous>, transform_indices = @transform_7, window_bounds = array<i64: 2, 6>}]} {
    %c0_i32 = arith.constant 0 : i32
    %0 = arith.cmpi eq, %arg0, %c0_i32 : i32
    %1 = arith.extui %0 : i1 to i32
    %c0_i32_0 = arith.constant 0 : i32
    %2 = arith.cmpi ne, %1, %c0_i32_0 : i32
    scf.if %2 {
      %c0_9 = arith.constant 0 : index
      %c0_10 = arith.constant 0 : index
      %14 = vector.load %arg1[%c0_9, %c0_10] : memref<98x576xf32, #tpu.memory_space<vmem>>, vector<98x576xf32>
      %c0_11 = arith.constant 0 : index
      %c0_12 = arith.constant 0 : index
      %15 = vector.load %arg2[%c0_11, %c0_12] : memref<576x64xf32, #tpu.memory_space<vmem>>, vector<576x64xf32>
      %cst_13 = arith.constant dense<0.000000e+00> : vector<98x64xf32>
      %16 = tpu.matmul %14, %15, %cst_13 {dimension_numbers = #tpu.dot_dimension_numbers<[1], [0], [0], [1], [0, 0, 1, 1], [], []>} : vector<98x576xf32>, vector<576x64xf32>, vector<98x64xf32> -> vector<98x64xf32>
      %c0_14 = arith.constant 0 : index
      %c0_15 = arith.constant 0 : index
      %17 = vector.load %arg3[%c0_14, %c0_15] : memref<1x64xf32, #tpu.memory_space<vmem>>, vector<1x64xf32>
      %18 = vector.broadcast %17 : vector<1x64xf32> to vector<98x64xf32>
      %19 = arith.addf %16, %18 : vector<98x64xf32>
      %cst_16 = arith.constant 0.000000e+00 : f32
      %20 = vector.broadcast %cst_16 : f32 to vector<98x64xf32>
      %21 = arith.maximumf %19, %20 : vector<98x64xf32>
      %22 = vector.extract_strided_slice %21 {offsets = [0, 0], sizes = [1, 64], strides = [1, 1]} : vector<98x64xf32> to vector<1x64xf32>
      %c0_17 = arith.constant 0 : index
      %c0_18 = arith.constant 0 : index
      %c0_19 = arith.constant 0 : index
      %23 = vector.load %arg9[%c0_17, %c0_18, %c0_19] : memref<7x2x448xf32, #tpu.memory_space<vmem>>, vector<1x1x64xf32>
      %24 = vector.shape_cast %23 : vector<1x1x64xf32> to vector<1x64xf32>
      %25 = vector.shape_cast %22 : vector<1x64xf32> to vector<1x1x64xf32>
      tpu.vector_store %arg9[%c0_17, %c0_18, %c0_19], %25 {strides = array<i32>} : memref<7x2x448xf32, #tpu.memory_space<vmem>>, vector<1x1x64xf32>,
      %26 = vector.extract_strided_slice %21 {offsets = [1, 0], sizes = [1, 64], strides = [1, 1]} : vector<98x64xf32> to vector<1x64xf32>
      %c0_20 = arith.constant 0 : index
      %c0_21 = arith.constant 0 : index
      %c64 = arith.constant 64 : index
      %27 = vector.load %arg9[%c0_20, %c0_21, %c64] : memref<7x2x448xf32, #tpu.memory_space<vmem>>, vector<1x1x64xf32>
      %28 = vector.shape_cast %27 : vector<1x1x64xf32> to vector<1x64xf32>
      %29 = vector.shape_cast %26 : vector<1x64xf32> to vector<1x1x64xf32>
      tpu.vector_store %arg9[%c0_20, %c0_21, %c64], %29 {strides = array<i32>} : memref<7x2x448xf32, #tpu.memory_space<vmem>>, vector<1x1x64xf32>,
      %30 = vector.extract_strided_slice %21 {offsets = [2, 0], sizes = [1, 64], strides = [1, 1]} : vector<98x64xf32> to vector<1x64xf32>
      %c0_22 = arith.constant 0 : index
      %c0_23 = arith.constant 0 : index
      %c128 = arith.constant 128 : index
      %31 = vector.load %arg9[%c0_22, %c0_23, %c128] : memref<7x2x448xf32, #tpu.memory_space<vmem>>, vector<1x1x64xf32>
      %32 = vector.shape_cast %31 : vector<1x1x64xf32> to vector<1x64xf32>
      %33 = vector.shape_cast %30 : vector<1x64xf32> to vector<1x1x64xf32>
      tpu.vector_store %arg9[%c0_22, %c0_23, %c128], %33 {strides = array<i32>} : memref<7x2x448xf32, #tpu.memory_space<vmem>>, vector<1x1x64xf32>,
      %34 = vector.extract_strided_slice %21 {offsets = [3, 0], sizes = [1, 64], strides = [1, 1]} : vector<98x64xf32> to vector<1x64xf32>
      %c0_24 = arith.constant 0 : index
      %c0_25 = arith.constant 0 : index
      %c192 = arith.constant 192 : index
      %35 = vector.load %arg9[%c0_24, %c0_25, %c192] : memref<7x2x448xf32, #tpu.memory_space<vmem>>, vector<1x1x64xf32>
      %36 = vector.shape_cast %35 : vector<1x1x64xf32> to vector<1x64xf32>
      %37 = vector.shape_cast %34 : vector<1x64xf32> to vector<1x1x64xf32>
      tpu.vector_store %arg9[%c0_24, %c0_25, %c192], %37 {strides = array<i32>} : memref<7x2x448xf32, #tpu.memory_space<vmem>>, vector<1x1x64xf32>,
      %38 = vector.extract_strided_slice %21 {offsets = [4, 0], sizes = [1, 64], strides = [1, 1]} : vector<98x64xf32> to vector<1x64xf32>
      %c0_26 = arith.constant 0 : index
      %c0_27 = arith.constant 0 : index
      %c256 = arith.constant 256 : index
      %39 = vector.load %arg9[%c0_26, %c0_27, %c256] : memref<7x2x448xf32, #tpu.memory_space<vmem>>, vector<1x1x64xf32>
      %40 = vector.shape_cast %39 : vector<1x1x64xf32> to vector<1x64xf32>
      %41 = vector.shape_cast %38 : vector<1x64xf32> to vector<1x1x64xf32>
      tpu.vector_store %arg9[%c0_26, %c0_27, %c256], %41 {strides = array<i32>} : memref<7x2x448xf32, #tpu.memory_space<vmem>>, vector<1x1x64xf32>,
      %42 = vector.extract_strided_slice %21 {offsets = [5, 0], sizes = [1, 64], strides = [1, 1]} : vector<98x64xf32> to vector<1x64xf32>
      %c0_28 = arith.constant 0 : index
      %c0_29 = arith.constant 0 : index
      %c320 = arith.constant 320 : index
      %43 = vector.load %arg9[%c0_28, %c0_29, %c320] : memref<7x2x448xf32, #tpu.memory_space<vmem>>, vector<1x1x64xf32>
      %44 = vector.shape_cast %43 : vector<1x1x64xf32> to vector<1x64xf32>
      %45 = vector.shape_cast %42 : vector<1x64xf32> to vector<1x1x64xf32>
      tpu.vector_store %arg9[%c0_28, %c0_29, %c320], %45 {strides = array<i32>} : memref<7x2x448xf32, #tpu.memory_space<vmem>>, vector<1x1x64xf32>,
      %46 = vector.extract_strided_slice %21 {offsets = [6, 0], sizes = [1, 64], strides = [1, 1]} : vector<98x64xf32> to vector<1x64xf32>
      %c0_30 = arith.constant 0 : index
      %c0_31 = arith.constant 0 : index
      %c384 = arith.constant 384 : index
      %47 = vector.load %arg9[%c0_30, %c0_31, %c384] : memref<7x2x448xf32, #tpu.memory_space<vmem>>, vector<1x1x64xf32>
      %48 = vector.shape_cast %47 : vector<1x1x64xf32> to vector<1x64xf32>
      %49 = vector.shape_cast %46 : vector<1x64xf32> to vector<1x1x64xf32>
      tpu.vector_store %arg9[%c0_30, %c0_31, %c384], %49 {strides = array<i32>} : memref<7x2x448xf32, #tpu.memory_space<vmem>>, vector<1x1x64xf32>,
      %50 = vector.extract_strided_slice %21 {offsets = [7, 0], sizes = [1, 64], strides = [1, 1]} : vector<98x64xf32> to vector<1x64xf32>
      %c1 = arith.constant 1 : index
      %c0_32 = arith.constant 0 : index
      %c0_33 = arith.constant 0 : index
      %51 = vector.load %arg9[%c1, %c0_32, %c0_33] : memref<7x2x448xf32, #tpu.memory_space<vmem>>, vector<1x1x64xf32>
      %52 = vector.shape_cast %51 : vector<1x1x64xf32> to vector<1x64xf32>
      %53 = vector.shape_cast %50 : vector<1x64xf32> to vector<1x1x64xf32>
      tpu.vector_store %arg9[%c1, %c0_32, %c0_33], %53 {strides = array<i32>} : memref<7x2x448xf32, #tpu.memory_space<vmem>>, vector<1x1x64xf32>,
      %54 = vector.extract_strided_slice %21 {offsets = [8, 0], sizes = [1, 64], strides = [1, 1]} : vector<98x64xf32> to vector<1x64xf32>
      %c1_34 = arith.constant 1 : index
      %c0_35 = arith.constant 0 : index
      %c64_36 = arith.constant 64 : index
      %55 = vector.load %arg9[%c1_34, %c0_35, %c64_36] : memref<7x2x448xf32, #tpu.memory_space<vmem>>, vector<1x1x64xf32>
      %56 = vector.shape_cast %55 : vector<1x1x64xf32> to vector<1x64xf32>
      %57 = vector.shape_cast %54 : vector<1x64xf32> to vector<1x1x64xf32>
      tpu.vector_store %arg9[%c1_34, %c0_35, %c64_36], %57 {strides = array<i32>} : memref<7x2x448xf32, #tpu.memory_space<vmem>>, vector<1x1x64xf32>,
      %58 = vector.extract_strided_slice %21 {offsets = [9, 0], sizes = [1, 64], strides = [1, 1]} : vector<98x64xf32> to vector<1x64xf32>
      %c1_37 = arith.constant 1 : index
      %c0_38 = arith.constant 0 : index
      %c128_39 = arith.constant 128 : index
      %59 = vector.load %arg9[%c1_37, %c0_38, %c128_39] : memref<7x2x448xf32, #tpu.memory_space<vmem>>, vector<1x1x64xf32>
      %60 = vector.shape_cast %59 : vector<1x1x64xf32> to vector<1x64xf32>
      %61 = vector.shape_cast %58 : vector<1x64xf32> to vector<1x1x64xf32>
      tpu.vector_store %arg9[%c1_37, %c0_38, %c128_39], %61 {strides = array<i32>} : memref<7x2x448xf32, #tpu.memory_space<vmem>>, vector<1x1x64xf32>,
      %62 = vector.extract_strided_slice %21 {offsets = [10, 0], sizes = [1, 64], strides = [1, 1]} : vector<98x64xf32> to vector<1x64xf32>
      %c1_40 = arith.constant 1 : index
      %c0_41 = arith.constant 0 : index
      %c192_42 = arith.constant 192 : index
      %63 = vector.load %arg9[%c1_40, %c0_41, %c192_42] : memref<7x2x448xf32, #tpu.memory_space<vmem>>, vector<1x1x64xf32>
      %64 = vector.shape_cast %63 : vector<1x1x64xf32> to vector<1x64xf32>
      %65 = vector.shape_cast %62 : vector<1x64xf32> to vector<1x1x64xf32>
      tpu.vector_store %arg9[%c1_40, %c0_41, %c192_42], %65 {strides = array<i32>} : memref<7x2x448xf32, #tpu.memory_space<vmem>>, vector<1x1x64xf32>,
      %66 = vector.extract_strided_slice %21 {offsets = [11, 0], sizes = [1, 64], strides = [1, 1]} : vector<98x64xf32> to vector<1x64xf32>
      %c1_43 = arith.constant 1 : index
      %c0_44 = arith.constant 0 : index
      %c256_45 = arith.constant 256 : index
      %67 = vector.load %arg9[%c1_43, %c0_44, %c256_45] : memref<7x2x448xf32, #tpu.memory_space<vmem>>, vector<1x1x64xf32>
      %68 = vector.shape_cast %67 : vector<1x1x64xf32> to vector<1x64xf32>
      %69 = vector.shape_cast %66 : vector<1x64xf32> to vector<1x1x64xf32>
      tpu.vector_store %arg9[%c1_43, %c0_44, %c256_45], %69 {strides = array<i32>} : memref<7x2x448xf32, #tpu.memory_space<vmem>>, vector<1x1x64xf32>,
      %70 = vector.extract_strided_slice %21 {offsets = [12, 0], sizes = [1, 64], strides = [1, 1]} : vector<98x64xf32> to vector<1x64xf32>
      %c1_46 = arith.constant 1 : index
      %c0_47 = arith.constant 0 : index
      %c320_48 = arith.constant 320 : index
      %71 = vector.load %arg9[%c1_46, %c0_47, %c320_48] : memref<7x2x448xf32, #tpu.memory_space<vmem>>, vector<1x1x64xf32>
      %72 = vector.shape_cast %71 : vector<1x1x64xf32> to vector<1x64xf32>
      %73 = vector.shape_cast %70 : vector<1x64xf32> to vector<1x1x64xf32>
      tpu.vector_store %arg9[%c1_46, %c0_47, %c320_48], %73 {strides = array<i32>} : memref<7x2x448xf32, #tpu.memory_space<vmem>>, vector<1x1x64xf32>,
      %74 = vector.extract_strided_slice %21 {offsets = [13, 0], sizes = [1, 64], strides = [1, 1]} : vector<98x64xf32> to vector<1x64xf32>
      %c1_49 = arith.constant 1 : index
      %c0_50 = arith.constant 0 : index
      %c384_51 = arith.constant 384 : index
      %75 = vector.load %arg9[%c1_49, %c0_50, %c384_51] : memref<7x2x448xf32, #tpu.memory_space<vmem>>, vector<1x1x64xf32>
      %76 = vector.shape_cast %75 : vector<1x1x64xf32> to vector<1x64xf32>
      %77 = vector.shape_cast %74 : vector<1x64xf32> to vector<1x1x64xf32>
      tpu.vector_store %arg9[%c1_49, %c0_50, %c384_51], %77 {strides = array<i32>} : memref<7x2x448xf32, #tpu.memory_space<vmem>>, vector<1x1x64xf32>,
      %78 = vector.extract_strided_slice %21 {offsets = [14, 0], sizes = [1, 64], strides = [1, 1]} : vector<98x64xf32> to vector<1x64xf32>
      %c2 = arith.constant 2 : index
      %c0_52 = arith.constant 0 : index
      %c0_53 = arith.constant 0 : index
      %79 = vector.load %arg9[%c2, %c0_52, %c0_53] : memref<7x2x448xf32, #tpu.memory_space<vmem>>, vector<1x1x64xf32>
      %80 = vector.shape_cast %79 : vector<1x1x64xf32> to vector<1x64xf32>
      %81 = vector.shape_cast %78 : vector<1x64xf32> to vector<1x1x64xf32>
      tpu.vector_store %arg9[%c2, %c0_52, %c0_53], %81 {strides = array<i32>} : memref<7x2x448xf32, #tpu.memory_space<vmem>>, vector<1x1x64xf32>,
      %82 = vector.extract_strided_slice %21 {offsets = [15, 0], sizes = [1, 64], strides = [1, 1]} : vector<98x64xf32> to vector<1x64xf32>
      %c2_54 = arith.constant 2 : index
      %c0_55 = arith.constant 0 : index
      %c64_56 = arith.constant 64 : index
      %83 = vector.load %arg9[%c2_54, %c0_55, %c64_56] : memref<7x2x448xf32, #tpu.memory_space<vmem>>, vector<1x1x64xf32>
      %84 = vector.shape_cast %83 : vector<1x1x64xf32> to vector<1x64xf32>
      %85 = vector.shape_cast %82 : vector<1x64xf32> to vector<1x1x64xf32>
      tpu.vector_store %arg9[%c2_54, %c0_55, %c64_56], %85 {strides = array<i32>} : memref<7x2x448xf32, #tpu.memory_space<vmem>>, vector<1x1x64xf32>,
      %86 = vector.extract_strided_slice %21 {offsets = [16, 0], sizes = [1, 64], strides = [1, 1]} : vector<98x64xf32> to vector<1x64xf32>
      %c2_57 = arith.constant 2 : index
      %c0_58 = arith.constant 0 : index
      %c128_59 = arith.constant 128 : index
      %87 = vector.load %arg9[%c2_57, %c0_58, %c128_59] : memref<7x2x448xf32, #tpu.memory_space<vmem>>, vector<1x1x64xf32>
      %88 = vector.shape_cast %87 : vector<1x1x64xf32> to vector<1x64xf32>
      %89 = vector.shape_cast %86 : vector<1x64xf32> to vector<1x1x64xf32>
      tpu.vector_store %arg9[%c2_57, %c0_58, %c128_59], %89 {strides = array<i32>} : memref<7x2x448xf32, #tpu.memory_space<vmem>>, vector<1x1x64xf32>,
      %90 = vector.extract_strided_slice %21 {offsets = [17, 0], sizes = [1, 64], strides = [1, 1]} : vector<98x64xf32> to vector<1x64xf32>
      %c2_60 = arith.constant 2 : index
      %c0_61 = arith.constant 0 : index
      %c192_62 = arith.constant 192 : index
      %91 = vector.load %arg9[%c2_60, %c0_61, %c192_62] : memref<7x2x448xf32, #tpu.memory_space<vmem>>, vector<1x1x64xf32>
      %92 = vector.shape_cast %91 : vector<1x1x64xf32> to vector<1x64xf32>
      %93 = vector.shape_cast %90 : vector<1x64xf32> to vector<1x1x64xf32>
      tpu.vector_store %arg9[%c2_60, %c0_61, %c192_62], %93 {strides = array<i32>} : memref<7x2x448xf32, #tpu.memory_space<vmem>>, vector<1x1x64xf32>,
      %94 = vector.extract_strided_slice %21 {offsets = [18, 0], sizes = [1, 64], strides = [1, 1]} : vector<98x64xf32> to vector<1x64xf32>
      %c2_63 = arith.constant 2 : index
      %c0_64 = arith.constant 0 : index
      %c256_65 = arith.constant 256 : index
      %95 = vector.load %arg9[%c2_63, %c0_64, %c256_65] : memref<7x2x448xf32, #tpu.memory_space<vmem>>, vector<1x1x64xf32>
      %96 = vector.shape_cast %95 : vector<1x1x64xf32> to vector<1x64xf32>
      %97 = vector.shape_cast %94 : vector<1x64xf32> to vector<1x1x64xf32>
      tpu.vector_store %arg9[%c2_63, %c0_64, %c256_65], %97 {strides = array<i32>} : memref<7x2x448xf32, #tpu.memory_space<vmem>>, vector<1x1x64xf32>,
      %98 = vector.extract_strided_slice %21 {offsets = [19, 0], sizes = [1, 64], strides = [1, 1]} : vector<98x64xf32> to vector<1x64xf32>
      %c2_66 = arith.constant 2 : index
      %c0_67 = arith.constant 0 : index
      %c320_68 = arith.constant 320 : index
      %99 = vector.load %arg9[%c2_66, %c0_67, %c320_68] : memref<7x2x448xf32, #tpu.memory_space<vmem>>, vector<1x1x64xf32>
      %100 = vector.shape_cast %99 : vector<1x1x64xf32> to vector<1x64xf32>
      %101 = vector.shape_cast %98 : vector<1x64xf32> to vector<1x1x64xf32>
      tpu.vector_store %arg9[%c2_66, %c0_67, %c320_68], %101 {strides = array<i32>} : memref<7x2x448xf32, #tpu.memory_space<vmem>>, vector<1x1x64xf32>,
      %102 = vector.extract_strided_slice %21 {offsets = [20, 0], sizes = [1, 64], strides = [1, 1]} : vector<98x64xf32> to vector<1x64xf32>
      %c2_69 = arith.constant 2 : index
      %c0_70 = arith.constant 0 : index
      %c384_71 = arith.constant 384 : index
      %103 = vector.load %arg9[%c2_69, %c0_70, %c384_71] : memref<7x2x448xf32, #tpu.memory_space<vmem>>, vector<1x1x64xf32>
      %104 = vector.shape_cast %103 : vector<1x1x64xf32> to vector<1x64xf32>
      %105 = vector.shape_cast %102 : vector<1x64xf32> to vector<1x1x64xf32>
      tpu.vector_store %arg9[%c2_69, %c0_70, %c384_71], %105 {strides = array<i32>} : memref<7x2x448xf32, #tpu.memory_space<vmem>>, vector<1x1x64xf32>,
      %106 = vector.extract_strided_slice %21 {offsets = [21, 0], sizes = [1, 64], strides = [1, 1]} : vector<98x64xf32> to vector<1x64xf32>
      %c3 = arith.constant 3 : index
      %c0_72 = arith.constant 0 : index
      %c0_73 = arith.constant 0 : index
      %107 = vector.load %arg9[%c3, %c0_72, %c0_73] : memref<7x2x448xf32, #tpu.memory_space<vmem>>, vector<1x1x64xf32>
      %108 = vector.shape_cast %107 : vector<1x1x64xf32> to vector<1x64xf32>
      %109 = vector.shape_cast %106 : vector<1x64xf32> to vector<1x1x64xf32>
      tpu.vector_store %arg9[%c3, %c0_72, %c0_73], %109 {strides = array<i32>} : memref<7x2x448xf32, #tpu.memory_space<vmem>>, vector<1x1x64xf32>,
      %110 = vector.extract_strided_slice %21 {offsets = [22, 0], sizes = [1, 64], strides = [1, 1]} : vector<98x64xf32> to vector<1x64xf32>
      %c3_74 = arith.constant 3 : index
      %c0_75 = arith.constant 0 : index
      %c64_76 = arith.constant 64 : index
      %111 = vector.load %arg9[%c3_74, %c0_75, %c64_76] : memref<7x2x448xf32, #tpu.memory_space<vmem>>, vector<1x1x64xf32>
      %112 = vector.shape_cast %111 : vector<1x1x64xf32> to vector<1x64xf32>
      %113 = vector.shape_cast %110 : vector<1x64xf32> to vector<1x1x64xf32>
      tpu.vector_store %arg9[%c3_74, %c0_75, %c64_76], %113 {strides = array<i32>} : memref<7x2x448xf32, #tpu.memory_space<vmem>>, vector<1x1x64xf32>,
      %114 = vector.extract_strided_slice %21 {offsets = [23, 0], sizes = [1, 64], strides = [1, 1]} : vector<98x64xf32> to vector<1x64xf32>
      %c3_77 = arith.constant 3 : index
      %c0_78 = arith.constant 0 : index
      %c128_79 = arith.constant 128 : index
      %115 = vector.load %arg9[%c3_77, %c0_78, %c128_79] : memref<7x2x448xf32, #tpu.memory_space<vmem>>, vector<1x1x64xf32>
      %116 = vector.shape_cast %115 : vector<1x1x64xf32> to vector<1x64xf32>
      %117 = vector.shape_cast %114 : vector<1x64xf32> to vector<1x1x64xf32>
      tpu.vector_store %arg9[%c3_77, %c0_78, %c128_79], %117 {strides = array<i32>} : memref<7x2x448xf32, #tpu.memory_space<vmem>>, vector<1x1x64xf32>,
      %118 = vector.extract_strided_slice %21 {offsets = [24, 0], sizes = [1, 64], strides = [1, 1]} : vector<98x64xf32> to vector<1x64xf32>
      %c3_80 = arith.constant 3 : index
      %c0_81 = arith.constant 0 : index
      %c192_82 = arith.constant 192 : index
      %119 = vector.load %arg9[%c3_80, %c0_81, %c192_82] : memref<7x2x448xf32, #tpu.memory_space<vmem>>, vector<1x1x64xf32>
      %120 = vector.shape_cast %119 : vector<1x1x64xf32> to vector<1x64xf32>
      %121 = vector.shape_cast %118 : vector<1x64xf32> to vector<1x1x64xf32>
      tpu.vector_store %arg9[%c3_80, %c0_81, %c192_82], %121 {strides = array<i32>} : memref<7x2x448xf32, #tpu.memory_space<vmem>>, vector<1x1x64xf32>,
      %122 = vector.extract_strided_slice %21 {offsets = [25, 0], sizes = [1, 64], strides = [1, 1]} : vector<98x64xf32> to vector<1x64xf32>
      %c3_83 = arith.constant 3 : index
      %c0_84 = arith.constant 0 : index
      %c256_85 = arith.constant 256 : index
      %123 = vector.load %arg9[%c3_83, %c0_84, %c256_85] : memref<7x2x448xf32, #tpu.memory_space<vmem>>, vector<1x1x64xf32>
      %124 = vector.shape_cast %123 : vector<1x1x64xf32> to vector<1x64xf32>
      %125 = vector.shape_cast %122 : vector<1x64xf32> to vector<1x1x64xf32>
      tpu.vector_store %arg9[%c3_83, %c0_84, %c256_85], %125 {strides = array<i32>} : memref<7x2x448xf32, #tpu.memory_space<vmem>>, vector<1x1x64xf32>,
      %126 = vector.extract_strided_slice %21 {offsets = [26, 0], sizes = [1, 64], strides = [1, 1]} : vector<98x64xf32> to vector<1x64xf32>
      %c3_86 = arith.constant 3 : index
      %c0_87 = arith.constant 0 : index
      %c320_88 = arith.constant 320 : index
      %127 = vector.load %arg9[%c3_86, %c0_87, %c320_88] : memref<7x2x448xf32, #tpu.memory_space<vmem>>, vector<1x1x64xf32>
      %128 = vector.shape_cast %127 : vector<1x1x64xf32> to vector<1x64xf32>
      %129 = vector.shape_cast %126 : vector<1x64xf32> to vector<1x1x64xf32>
      tpu.vector_store %arg9[%c3_86, %c0_87, %c320_88], %129 {strides = array<i32>} : memref<7x2x448xf32, #tpu.memory_space<vmem>>, vector<1x1x64xf32>,
      %130 = vector.extract_strided_slice %21 {offsets = [27, 0], sizes = [1, 64], strides = [1, 1]} : vector<98x64xf32> to vector<1x64xf32>
      %c3_89 = arith.constant 3 : index
      %c0_90 = arith.constant 0 : index
      %c384_91 = arith.constant 384 : index
      %131 = vector.load %arg9[%c3_89, %c0_90, %c384_91] : memref<7x2x448xf32, #tpu.memory_space<vmem>>, vector<1x1x64xf32>
      %132 = vector.shape_cast %131 : vector<1x1x64xf32> to vector<1x64xf32>
      %133 = vector.shape_cast %130 : vector<1x64xf32> to vector<1x1x64xf32>
      tpu.vector_store %arg9[%c3_89, %c0_90, %c384_91], %133 {strides = array<i32>} : memref<7x2x448xf32, #tpu.memory_space<vmem>>, vector<1x1x64xf32>,
      %134 = vector.extract_strided_slice %21 {offsets = [28, 0], sizes = [1, 64], strides = [1, 1]} : vector<98x64xf32> to vector<1x64xf32>
      %c4 = arith.constant 4 : index
      %c0_92 = arith.constant 0 : index
      %c0_93 = arith.constant 0 : index
      %135 = vector.load %arg9[%c4, %c0_92, %c0_93] : memref<7x2x448xf32, #tpu.memory_space<vmem>>, vector<1x1x64xf32>
      %136 = vector.shape_cast %135 : vector<1x1x64xf32> to vector<1x64xf32>
      %137 = vector.shape_cast %134 : vector<1x64xf32> to vector<1x1x64xf32>
      tpu.vector_store %arg9[%c4, %c0_92, %c0_93], %137 {strides = array<i32>} : memref<7x2x448xf32, #tpu.memory_space<vmem>>, vector<1x1x64xf32>,
      %138 = vector.extract_strided_slice %21 {offsets = [29, 0], sizes = [1, 64], strides = [1, 1]} : vector<98x64xf32> to vector<1x64xf32>
      %c4_94 = arith.constant 4 : index
      %c0_95 = arith.constant 0 : index
      %c64_96 = arith.constant 64 : index
      %139 = vector.load %arg9[%c4_94, %c0_95, %c64_96] : memref<7x2x448xf32, #tpu.memory_space<vmem>>, vector<1x1x64xf32>
      %140 = vector.shape_cast %139 : vector<1x1x64xf32> to vector<1x64xf32>
      %141 = vector.shape_cast %138 : vector<1x64xf32> to vector<1x1x64xf32>
      tpu.vector_store %arg9[%c4_94, %c0_95, %c64_96], %141 {strides = array<i32>} : memref<7x2x448xf32, #tpu.memory_space<vmem>>, vector<1x1x64xf32>,
      %142 = vector.extract_strided_slice %21 {offsets = [30, 0], sizes = [1, 64], strides = [1, 1]} : vector<98x64xf32> to vector<1x64xf32>
      %c4_97 = arith.constant 4 : index
      %c0_98 = arith.constant 0 : index
      %c128_99 = arith.constant 128 : index
      %143 = vector.load %arg9[%c4_97, %c0_98, %c128_99] : memref<7x2x448xf32, #tpu.memory_space<vmem>>, vector<1x1x64xf32>
      %144 = vector.shape_cast %143 : vector<1x1x64xf32> to vector<1x64xf32>
      %145 = vector.shape_cast %142 : vector<1x64xf32> to vector<1x1x64xf32>
      tpu.vector_store %arg9[%c4_97, %c0_98, %c128_99], %145 {strides = array<i32>} : memref<7x2x448xf32, #tpu.memory_space<vmem>>, vector<1x1x64xf32>,
      %146 = vector.extract_strided_slice %21 {offsets = [31, 0], sizes = [1, 64], strides = [1, 1]} : vector<98x64xf32> to vector<1x64xf32>
      %c4_100 = arith.constant 4 : index
      %c0_101 = arith.constant 0 : index
      %c192_102 = arith.constant 192 : index
      %147 = vector.load %arg9[%c4_100, %c0_101, %c192_102] : memref<7x2x448xf32, #tpu.memory_space<vmem>>, vector<1x1x64xf32>
      %148 = vector.shape_cast %147 : vector<1x1x64xf32> to vector<1x64xf32>
      %149 = vector.shape_cast %146 : vector<1x64xf32> to vector<1x1x64xf32>
      tpu.vector_store %arg9[%c4_100, %c0_101, %c192_102], %149 {strides = array<i32>} : memref<7x2x448xf32, #tpu.memory_space<vmem>>, vector<1x1x64xf32>,
      %150 = vector.extract_strided_slice %21 {offsets = [32, 0], sizes = [1, 64], strides = [1, 1]} : vector<98x64xf32> to vector<1x64xf32>
      %c4_103 = arith.constant 4 : index
      %c0_104 = arith.constant 0 : index
      %c256_105 = arith.constant 256 : index
      %151 = vector.load %arg9[%c4_103, %c0_104, %c256_105] : memref<7x2x448xf32, #tpu.memory_space<vmem>>, vector<1x1x64xf32>
      %152 = vector.shape_cast %151 : vector<1x1x64xf32> to vector<1x64xf32>
      %153 = vector.shape_cast %150 : vector<1x64xf32> to vector<1x1x64xf32>
      tpu.vector_store %arg9[%c4_103, %c0_104, %c256_105], %153 {strides = array<i32>} : memref<7x2x448xf32, #tpu.memory_space<vmem>>, vector<1x1x64xf32>,
      %154 = vector.extract_strided_slice %21 {offsets = [33, 0], sizes = [1, 64], strides = [1, 1]} : vector<98x64xf32> to vector<1x64xf32>
      %c4_106 = arith.constant 4 : index
      %c0_107 = arith.constant 0 : index
      %c320_108 = arith.constant 320 : index
      %155 = vector.load %arg9[%c4_106, %c0_107, %c320_108] : memref<7x2x448xf32, #tpu.memory_space<vmem>>, vector<1x1x64xf32>
      %156 = vector.shape_cast %155 : vector<1x1x64xf32> to vector<1x64xf32>
      %157 = vector.shape_cast %154 : vector<1x64xf32> to vector<1x1x64xf32>
      tpu.vector_store %arg9[%c4_106, %c0_107, %c320_108], %157 {strides = array<i32>} : memref<7x2x448xf32, #tpu.memory_space<vmem>>, vector<1x1x64xf32>,
      %158 = vector.extract_strided_slice %21 {offsets = [34, 0], sizes = [1, 64], strides = [1, 1]} : vector<98x64xf32> to vector<1x64xf32>
      %c4_109 = arith.constant 4 : index
      %c0_110 = arith.constant 0 : index
      %c384_111 = arith.constant 384 : index
      %159 = vector.load %arg9[%c4_109, %c0_110, %c384_111] : memref<7x2x448xf32, #tpu.memory_space<vmem>>, vector<1x1x64xf32>
      %160 = vector.shape_cast %159 : vector<1x1x64xf32> to vector<1x64xf32>
      %161 = vector.shape_cast %158 : vector<1x64xf32> to vector<1x1x64xf32>
      tpu.vector_store %arg9[%c4_109, %c0_110, %c384_111], %161 {strides = array<i32>} : memref<7x2x448xf32, #tpu.memory_space<vmem>>, vector<1x1x64xf32>,
      %162 = vector.extract_strided_slice %21 {offsets = [35, 0], sizes = [1, 64], strides = [1, 1]} : vector<98x64xf32> to vector<1x64xf32>
      %c5 = arith.constant 5 : index
      %c0_112 = arith.constant 0 : index
      %c0_113 = arith.constant 0 : index
      %163 = vector.load %arg9[%c5, %c0_112, %c0_113] : memref<7x2x448xf32, #tpu.memory_space<vmem>>, vector<1x1x64xf32>
      %164 = vector.shape_cast %163 : vector<1x1x64xf32> to vector<1x64xf32>
      %165 = vector.shape_cast %162 : vector<1x64xf32> to vector<1x1x64xf32>
      tpu.vector_store %arg9[%c5, %c0_112, %c0_113], %165 {strides = array<i32>} : memref<7x2x448xf32, #tpu.memory_space<vmem>>, vector<1x1x64xf32>,
      %166 = vector.extract_strided_slice %21 {offsets = [36, 0], sizes = [1, 64], strides = [1, 1]} : vector<98x64xf32> to vector<1x64xf32>
      %c5_114 = arith.constant 5 : index
      %c0_115 = arith.constant 0 : index
      %c64_116 = arith.constant 64 : index
      %167 = vector.load %arg9[%c5_114, %c0_115, %c64_116] : memref<7x2x448xf32, #tpu.memory_space<vmem>>, vector<1x1x64xf32>
      %168 = vector.shape_cast %167 : vector<1x1x64xf32> to vector<1x64xf32>
      %169 = vector.shape_cast %166 : vector<1x64xf32> to vector<1x1x64xf32>
      tpu.vector_store %arg9[%c5_114, %c0_115, %c64_116], %169 {strides = array<i32>} : memref<7x2x448xf32, #tpu.memory_space<vmem>>, vector<1x1x64xf32>,
      %170 = vector.extract_strided_slice %21 {offsets = [37, 0], sizes = [1, 64], strides = [1, 1]} : vector<98x64xf32> to vector<1x64xf32>
      %c5_117 = arith.constant 5 : index
      %c0_118 = arith.constant 0 : index
      %c128_119 = arith.constant 128 : index
      %171 = vector.load %arg9[%c5_117, %c0_118, %c128_119] : memref<7x2x448xf32, #tpu.memory_space<vmem>>, vector<1x1x64xf32>
      %172 = vector.shape_cast %171 : vector<1x1x64xf32> to vector<1x64xf32>
      %173 = vector.shape_cast %170 : vector<1x64xf32> to vector<1x1x64xf32>
      tpu.vector_store %arg9[%c5_117, %c0_118, %c128_119], %173 {strides = array<i32>} : memref<7x2x448xf32, #tpu.memory_space<vmem>>, vector<1x1x64xf32>,
      %174 = vector.extract_strided_slice %21 {offsets = [38, 0], sizes = [1, 64], strides = [1, 1]} : vector<98x64xf32> to vector<1x64xf32>
      %c5_120 = arith.constant 5 : index
      %c0_121 = arith.constant 0 : index
      %c192_122 = arith.constant 192 : index
      %175 = vector.load %arg9[%c5_120, %c0_121, %c192_122] : memref<7x2x448xf32, #tpu.memory_space<vmem>>, vector<1x1x64xf32>
      %176 = vector.shape_cast %175 : vector<1x1x64xf32> to vector<1x64xf32>
      %177 = vector.shape_cast %174 : vector<1x64xf32> to vector<1x1x64xf32>
      tpu.vector_store %arg9[%c5_120, %c0_121, %c192_122], %177 {strides = array<i32>} : memref<7x2x448xf32, #tpu.memory_space<vmem>>, vector<1x1x64xf32>,
      %178 = vector.extract_strided_slice %21 {offsets = [39, 0], sizes = [1, 64], strides = [1, 1]} : vector<98x64xf32> to vector<1x64xf32>
      %c5_123 = arith.constant 5 : index
      %c0_124 = arith.constant 0 : index
      %c256_125 = arith.constant 256 : index
      %179 = vector.load %arg9[%c5_123, %c0_124, %c256_125] : memref<7x2x448xf32, #tpu.memory_space<vmem>>, vector<1x1x64xf32>
      %180 = vector.shape_cast %179 : vector<1x1x64xf32> to vector<1x64xf32>
      %181 = vector.shape_cast %178 : vector<1x64xf32> to vector<1x1x64xf32>
      tpu.vector_store %arg9[%c5_123, %c0_124, %c256_125], %181 {strides = array<i32>} : memref<7x2x448xf32, #tpu.memory_space<vmem>>, vector<1x1x64xf32>,
      %182 = vector.extract_strided_slice %21 {offsets = [40, 0], sizes = [1, 64], strides = [1, 1]} : vector<98x64xf32> to vector<1x64xf32>
      %c5_126 = arith.constant 5 : index
      %c0_127 = arith.constant 0 : index
      %c320_128 = arith.constant 320 : index
      %183 = vector.load %arg9[%c5_126, %c0_127, %c320_128] : memref<7x2x448xf32, #tpu.memory_space<vmem>>, vector<1x1x64xf32>
      %184 = vector.shape_cast %183 : vector<1x1x64xf32> to vector<1x64xf32>
      %185 = vector.shape_cast %182 : vector<1x64xf32> to vector<1x1x64xf32>
      tpu.vector_store %arg9[%c5_126, %c0_127, %c320_128], %185 {strides = array<i32>} : memref<7x2x448xf32, #tpu.memory_space<vmem>>, vector<1x1x64xf32>,
      %186 = vector.extract_strided_slice %21 {offsets = [41, 0], sizes = [1, 64], strides = [1, 1]} : vector<98x64xf32> to vector<1x64xf32>
      %c5_129 = arith.constant 5 : index
      %c0_130 = arith.constant 0 : index
      %c384_131 = arith.constant 384 : index
      %187 = vector.load %arg9[%c5_129, %c0_130, %c384_131] : memref<7x2x448xf32, #tpu.memory_space<vmem>>, vector<1x1x64xf32>
      %188 = vector.shape_cast %187 : vector<1x1x64xf32> to vector<1x64xf32>
      %189 = vector.shape_cast %186 : vector<1x64xf32> to vector<1x1x64xf32>
      tpu.vector_store %arg9[%c5_129, %c0_130, %c384_131], %189 {strides = array<i32>} : memref<7x2x448xf32, #tpu.memory_space<vmem>>, vector<1x1x64xf32>,
      %190 = vector.extract_strided_slice %21 {offsets = [42, 0], sizes = [1, 64], strides = [1, 1]} : vector<98x64xf32> to vector<1x64xf32>
      %c6 = arith.constant 6 : index
      %c0_132 = arith.constant 0 : index
      %c0_133 = arith.constant 0 : index
      %191 = vector.load %arg9[%c6, %c0_132, %c0_133] : memref<7x2x448xf32, #tpu.memory_space<vmem>>, vector<1x1x64xf32>
      %192 = vector.shape_cast %191 : vector<1x1x64xf32> to vector<1x64xf32>
      %193 = vector.shape_cast %190 : vector<1x64xf32> to vector<1x1x64xf32>
      tpu.vector_store %arg9[%c6, %c0_132, %c0_133], %193 {strides = array<i32>} : memref<7x2x448xf32, #tpu.memory_space<vmem>>, vector<1x1x64xf32>,
      %194 = vector.extract_strided_slice %21 {offsets = [43, 0], sizes = [1, 64], strides = [1, 1]} : vector<98x64xf32> to vector<1x64xf32>
      %c6_134 = arith.constant 6 : index
      %c0_135 = arith.constant 0 : index
      %c64_136 = arith.constant 64 : index
      %195 = vector.load %arg9[%c6_134, %c0_135, %c64_136] : memref<7x2x448xf32, #tpu.memory_space<vmem>>, vector<1x1x64xf32>
      %196 = vector.shape_cast %195 : vector<1x1x64xf32> to vector<1x64xf32>
      %197 = vector.shape_cast %194 : vector<1x64xf32> to vector<1x1x64xf32>
      tpu.vector_store %arg9[%c6_134, %c0_135, %c64_136], %197 {strides = array<i32>} : memref<7x2x448xf32, #tpu.memory_space<vmem>>, vector<1x1x64xf32>,
      %198 = vector.extract_strided_slice %21 {offsets = [44, 0], sizes = [1, 64], strides = [1, 1]} : vector<98x64xf32> to vector<1x64xf32>
      %c6_137 = arith.constant 6 : index
      %c0_138 = arith.constant 0 : index
      %c128_139 = arith.constant 128 : index
      %199 = vector.load %arg9[%c6_137, %c0_138, %c128_139] : memref<7x2x448xf32, #tpu.memory_space<vmem>>, vector<1x1x64xf32>
      %200 = vector.shape_cast %199 : vector<1x1x64xf32> to vector<1x64xf32>
      %201 = vector.shape_cast %198 : vector<1x64xf32> to vector<1x1x64xf32>
      tpu.vector_store %arg9[%c6_137, %c0_138, %c128_139], %201 {strides = array<i32>} : memref<7x2x448xf32, #tpu.memory_space<vmem>>, vector<1x1x64xf32>,
      %202 = vector.extract_strided_slice %21 {offsets = [45, 0], sizes = [1, 64], strides = [1, 1]} : vector<98x64xf32> to vector<1x64xf32>
      %c6_140 = arith.constant 6 : index
      %c0_141 = arith.constant 0 : index
      %c192_142 = arith.constant 192 : index
      %203 = vector.load %arg9[%c6_140, %c0_141, %c192_142] : memref<7x2x448xf32, #tpu.memory_space<vmem>>, vector<1x1x64xf32>
      %204 = vector.shape_cast %203 : vector<1x1x64xf32> to vector<1x64xf32>
      %205 = vector.shape_cast %202 : vector<1x64xf32> to vector<1x1x64xf32>
      tpu.vector_store %arg9[%c6_140, %c0_141, %c192_142], %205 {strides = array<i32>} : memref<7x2x448xf32, #tpu.memory_space<vmem>>, vector<1x1x64xf32>,
      %206 = vector.extract_strided_slice %21 {offsets = [46, 0], sizes = [1, 64], strides = [1, 1]} : vector<98x64xf32> to vector<1x64xf32>
      %c6_143 = arith.constant 6 : index
      %c0_144 = arith.constant 0 : index
      %c256_145 = arith.constant 256 : index
      %207 = vector.load %arg9[%c6_143, %c0_144, %c256_145] : memref<7x2x448xf32, #tpu.memory_space<vmem>>, vector<1x1x64xf32>
      %208 = vector.shape_cast %207 : vector<1x1x64xf32> to vector<1x64xf32>
      %209 = vector.shape_cast %206 : vector<1x64xf32> to vector<1x1x64xf32>
      tpu.vector_store %arg9[%c6_143, %c0_144, %c256_145], %209 {strides = array<i32>} : memref<7x2x448xf32, #tpu.memory_space<vmem>>, vector<1x1x64xf32>,
      %210 = vector.extract_strided_slice %21 {offsets = [47, 0], sizes = [1, 64], strides = [1, 1]} : vector<98x64xf32> to vector<1x64xf32>
      %c6_146 = arith.constant 6 : index
      %c0_147 = arith.constant 0 : index
      %c320_148 = arith.constant 320 : index
      %211 = vector.load %arg9[%c6_146, %c0_147, %c320_148] : memref<7x2x448xf32, #tpu.memory_space<vmem>>, vector<1x1x64xf32>
      %212 = vector.shape_cast %211 : vector<1x1x64xf32> to vector<1x64xf32>
      %213 = vector.shape_cast %210 : vector<1x64xf32> to vector<1x1x64xf32>
      tpu.vector_store %arg9[%c6_146, %c0_147, %c320_148], %213 {strides = array<i32>} : memref<7x2x448xf32, #tpu.memory_space<vmem>>, vector<1x1x64xf32>,
      %214 = vector.extract_strided_slice %21 {offsets = [48, 0], sizes = [1, 64], strides = [1, 1]} : vector<98x64xf32> to vector<1x64xf32>
      %c6_149 = arith.constant 6 : index
      %c0_150 = arith.constant 0 : index
      %c384_151 = arith.constant 384 : index
      %215 = vector.load %arg9[%c6_149, %c0_150, %c384_151] : memref<7x2x448xf32, #tpu.memory_space<vmem>>, vector<1x1x64xf32>
      %216 = vector.shape_cast %215 : vector<1x1x64xf32> to vector<1x64xf32>
      %217 = vector.shape_cast %214 : vector<1x64xf32> to vector<1x1x64xf32>
      tpu.vector_store %arg9[%c6_149, %c0_150, %c384_151], %217 {strides = array<i32>} : memref<7x2x448xf32, #tpu.memory_space<vmem>>, vector<1x1x64xf32>,
      %218 = vector.extract_strided_slice %21 {offsets = [49, 0], sizes = [1, 64], strides = [1, 1]} : vector<98x64xf32> to vector<1x64xf32>
      %c0_152 = arith.constant 0 : index
      %c1_153 = arith.constant 1 : index
      %c0_154 = arith.constant 0 : index
      %219 = vector.load %arg9[%c0_152, %c1_153, %c0_154] : memref<7x2x448xf32, #tpu.memory_space<vmem>>, vector<1x1x64xf32>
      %220 = vector.shape_cast %219 : vector<1x1x64xf32> to vector<1x64xf32>
      %221 = vector.shape_cast %218 : vector<1x64xf32> to vector<1x1x64xf32>
      tpu.vector_store %arg9[%c0_152, %c1_153, %c0_154], %221 {strides = array<i32>} : memref<7x2x448xf32, #tpu.memory_space<vmem>>, vector<1x1x64xf32>,
      %222 = vector.extract_strided_slice %21 {offsets = [50, 0], sizes = [1, 64], strides = [1, 1]} : vector<98x64xf32> to vector<1x64xf32>
      %c0_155 = arith.constant 0 : index
      %c1_156 = arith.constant 1 : index
      %c64_157 = arith.constant 64 : index
      %223 = vector.load %arg9[%c0_155, %c1_156, %c64_157] : memref<7x2x448xf32, #tpu.memory_space<vmem>>, vector<1x1x64xf32>
      %224 = vector.shape_cast %223 : vector<1x1x64xf32> to vector<1x64xf32>
      %225 = vector.shape_cast %222 : vector<1x64xf32> to vector<1x1x64xf32>
      tpu.vector_store %arg9[%c0_155, %c1_156, %c64_157], %225 {strides = array<i32>} : memref<7x2x448xf32, #tpu.memory_space<vmem>>, vector<1x1x64xf32>,
      %226 = vector.extract_strided_slice %21 {offsets = [51, 0], sizes = [1, 64], strides = [1, 1]} : vector<98x64xf32> to vector<1x64xf32>
      %c0_158 = arith.constant 0 : index
      %c1_159 = arith.constant 1 : index
      %c128_160 = arith.constant 128 : index
      %227 = vector.load %arg9[%c0_158, %c1_159, %c128_160] : memref<7x2x448xf32, #tpu.memory_space<vmem>>, vector<1x1x64xf32>
      %228 = vector.shape_cast %227 : vector<1x1x64xf32> to vector<1x64xf32>
      %229 = vector.shape_cast %226 : vector<1x64xf32> to vector<1x1x64xf32>
      tpu.vector_store %arg9[%c0_158, %c1_159, %c128_160], %229 {strides = array<i32>} : memref<7x2x448xf32, #tpu.memory_space<vmem>>, vector<1x1x64xf32>,
      %230 = vector.extract_strided_slice %21 {offsets = [52, 0], sizes = [1, 64], strides = [1, 1]} : vector<98x64xf32> to vector<1x64xf32>
      %c0_161 = arith.constant 0 : index
      %c1_162 = arith.constant 1 : index
      %c192_163 = arith.constant 192 : index
      %231 = vector.load %arg9[%c0_161, %c1_162, %c192_163] : memref<7x2x448xf32, #tpu.memory_space<vmem>>, vector<1x1x64xf32>
      %232 = vector.shape_cast %231 : vector<1x1x64xf32> to vector<1x64xf32>
      %233 = vector.shape_cast %230 : vector<1x64xf32> to vector<1x1x64xf32>
      tpu.vector_store %arg9[%c0_161, %c1_162, %c192_163], %233 {strides = array<i32>} : memref<7x2x448xf32, #tpu.memory_space<vmem>>, vector<1x1x64xf32>,
      %234 = vector.extract_strided_slice %21 {offsets = [53, 0], sizes = [1, 64], strides = [1, 1]} : vector<98x64xf32> to vector<1x64xf32>
      %c0_164 = arith.constant 0 : index
      %c1_165 = arith.constant 1 : index
      %c256_166 = arith.constant 256 : index
      %235 = vector.load %arg9[%c0_164, %c1_165, %c256_166] : memref<7x2x448xf32, #tpu.memory_space<vmem>>, vector<1x1x64xf32>
      %236 = vector.shape_cast %235 : vector<1x1x64xf32> to vector<1x64xf32>
      %237 = vector.shape_cast %234 : vector<1x64xf32> to vector<1x1x64xf32>
      tpu.vector_store %arg9[%c0_164, %c1_165, %c256_166], %237 {strides = array<i32>} : memref<7x2x448xf32, #tpu.memory_space<vmem>>, vector<1x1x64xf32>,
      %238 = vector.extract_strided_slice %21 {offsets = [54, 0], sizes = [1, 64], strides = [1, 1]} : vector<98x64xf32> to vector<1x64xf32>
      %c0_167 = arith.constant 0 : index
      %c1_168 = arith.constant 1 : index
      %c320_169 = arith.constant 320 : index
      %239 = vector.load %arg9[%c0_167, %c1_168, %c320_169] : memref<7x2x448xf32, #tpu.memory_space<vmem>>, vector<1x1x64xf32>
      %240 = vector.shape_cast %239 : vector<1x1x64xf32> to vector<1x64xf32>
      %241 = vector.shape_cast %238 : vector<1x64xf32> to vector<1x1x64xf32>
      tpu.vector_store %arg9[%c0_167, %c1_168, %c320_169], %241 {strides = array<i32>} : memref<7x2x448xf32, #tpu.memory_space<vmem>>, vector<1x1x64xf32>,
      %242 = vector.extract_strided_slice %21 {offsets = [55, 0], sizes = [1, 64], strides = [1, 1]} : vector<98x64xf32> to vector<1x64xf32>
      %c0_170 = arith.constant 0 : index
      %c1_171 = arith.constant 1 : index
      %c384_172 = arith.constant 384 : index
      %243 = vector.load %arg9[%c0_170, %c1_171, %c384_172] : memref<7x2x448xf32, #tpu.memory_space<vmem>>, vector<1x1x64xf32>
      %244 = vector.shape_cast %243 : vector<1x1x64xf32> to vector<1x64xf32>
      %245 = vector.shape_cast %242 : vector<1x64xf32> to vector<1x1x64xf32>
      tpu.vector_store %arg9[%c0_170, %c1_171, %c384_172], %245 {strides = array<i32>} : memref<7x2x448xf32, #tpu.memory_space<vmem>>, vector<1x1x64xf32>,
      %246 = vector.extract_strided_slice %21 {offsets = [56, 0], sizes = [1, 64], strides = [1, 1]} : vector<98x64xf32> to vector<1x64xf32>
      %c1_173 = arith.constant 1 : index
      %c1_174 = arith.constant 1 : index
      %c0_175 = arith.constant 0 : index
      %247 = vector.load %arg9[%c1_173, %c1_174, %c0_175] : memref<7x2x448xf32, #tpu.memory_space<vmem>>, vector<1x1x64xf32>
      %248 = vector.shape_cast %247 : vector<1x1x64xf32> to vector<1x64xf32>
      %249 = vector.shape_cast %246 : vector<1x64xf32> to vector<1x1x64xf32>
      tpu.vector_store %arg9[%c1_173, %c1_174, %c0_175], %249 {strides = array<i32>} : memref<7x2x448xf32, #tpu.memory_space<vmem>>, vector<1x1x64xf32>,
      %250 = vector.extract_strided_slice %21 {offsets = [57, 0], sizes = [1, 64], strides = [1, 1]} : vector<98x64xf32> to vector<1x64xf32>
      %c1_176 = arith.constant 1 : index
      %c1_177 = arith.constant 1 : index
      %c64_178 = arith.constant 64 : index
      %251 = vector.load %arg9[%c1_176, %c1_177, %c64_178] : memref<7x2x448xf32, #tpu.memory_space<vmem>>, vector<1x1x64xf32>
      %252 = vector.shape_cast %251 : vector<1x1x64xf32> to vector<1x64xf32>
      %253 = vector.shape_cast %250 : vector<1x64xf32> to vector<1x1x64xf32>
      tpu.vector_store %arg9[%c1_176, %c1_177, %c64_178], %253 {strides = array<i32>} : memref<7x2x448xf32, #tpu.memory_space<vmem>>, vector<1x1x64xf32>,
      %254 = vector.extract_strided_slice %21 {offsets = [58, 0], sizes = [1, 64], strides = [1, 1]} : vector<98x64xf32> to vector<1x64xf32>
      %c1_179 = arith.constant 1 : index
      %c1_180 = arith.constant 1 : index
      %c128_181 = arith.constant 128 : index
      %255 = vector.load %arg9[%c1_179, %c1_180, %c128_181] : memref<7x2x448xf32, #tpu.memory_space<vmem>>, vector<1x1x64xf32>
      %256 = vector.shape_cast %255 : vector<1x1x64xf32> to vector<1x64xf32>
      %257 = vector.shape_cast %254 : vector<1x64xf32> to vector<1x1x64xf32>
      tpu.vector_store %arg9[%c1_179, %c1_180, %c128_181], %257 {strides = array<i32>} : memref<7x2x448xf32, #tpu.memory_space<vmem>>, vector<1x1x64xf32>,
      %258 = vector.extract_strided_slice %21 {offsets = [59, 0], sizes = [1, 64], strides = [1, 1]} : vector<98x64xf32> to vector<1x64xf32>
      %c1_182 = arith.constant 1 : index
      %c1_183 = arith.constant 1 : index
      %c192_184 = arith.constant 192 : index
      %259 = vector.load %arg9[%c1_182, %c1_183, %c192_184] : memref<7x2x448xf32, #tpu.memory_space<vmem>>, vector<1x1x64xf32>
      %260 = vector.shape_cast %259 : vector<1x1x64xf32> to vector<1x64xf32>
      %261 = vector.shape_cast %258 : vector<1x64xf32> to vector<1x1x64xf32>
      tpu.vector_store %arg9[%c1_182, %c1_183, %c192_184], %261 {strides = array<i32>} : memref<7x2x448xf32, #tpu.memory_space<vmem>>, vector<1x1x64xf32>,
      %262 = vector.extract_strided_slice %21 {offsets = [60, 0], sizes = [1, 64], strides = [1, 1]} : vector<98x64xf32> to vector<1x64xf32>
      %c1_185 = arith.constant 1 : index
      %c1_186 = arith.constant 1 : index
      %c256_187 = arith.constant 256 : index
      %263 = vector.load %arg9[%c1_185, %c1_186, %c256_187] : memref<7x2x448xf32, #tpu.memory_space<vmem>>, vector<1x1x64xf32>
      %264 = vector.shape_cast %263 : vector<1x1x64xf32> to vector<1x64xf32>
      %265 = vector.shape_cast %262 : vector<1x64xf32> to vector<1x1x64xf32>
      tpu.vector_store %arg9[%c1_185, %c1_186, %c256_187], %265 {strides = array<i32>} : memref<7x2x448xf32, #tpu.memory_space<vmem>>, vector<1x1x64xf32>,
      %266 = vector.extract_strided_slice %21 {offsets = [61, 0], sizes = [1, 64], strides = [1, 1]} : vector<98x64xf32> to vector<1x64xf32>
      %c1_188 = arith.constant 1 : index
      %c1_189 = arith.constant 1 : index
      %c320_190 = arith.constant 320 : index
      %267 = vector.load %arg9[%c1_188, %c1_189, %c320_190] : memref<7x2x448xf32, #tpu.memory_space<vmem>>, vector<1x1x64xf32>
      %268 = vector.shape_cast %267 : vector<1x1x64xf32> to vector<1x64xf32>
      %269 = vector.shape_cast %266 : vector<1x64xf32> to vector<1x1x64xf32>
      tpu.vector_store %arg9[%c1_188, %c1_189, %c320_190], %269 {strides = array<i32>} : memref<7x2x448xf32, #tpu.memory_space<vmem>>, vector<1x1x64xf32>,
      %270 = vector.extract_strided_slice %21 {offsets = [62, 0], sizes = [1, 64], strides = [1, 1]} : vector<98x64xf32> to vector<1x64xf32>
      %c1_191 = arith.constant 1 : index
      %c1_192 = arith.constant 1 : index
      %c384_193 = arith.constant 384 : index
      %271 = vector.load %arg9[%c1_191, %c1_192, %c384_193] : memref<7x2x448xf32, #tpu.memory_space<vmem>>, vector<1x1x64xf32>
      %272 = vector.shape_cast %271 : vector<1x1x64xf32> to vector<1x64xf32>
      %273 = vector.shape_cast %270 : vector<1x64xf32> to vector<1x1x64xf32>
      tpu.vector_store %arg9[%c1_191, %c1_192, %c384_193], %273 {strides = array<i32>} : memref<7x2x448xf32, #tpu.memory_space<vmem>>, vector<1x1x64xf32>,
      %274 = vector.extract_strided_slice %21 {offsets = [63, 0], sizes = [1, 64], strides = [1, 1]} : vector<98x64xf32> to vector<1x64xf32>
      %c2_194 = arith.constant 2 : index
      %c1_195 = arith.constant 1 : index
      %c0_196 = arith.constant 0 : index
      %275 = vector.load %arg9[%c2_194, %c1_195, %c0_196] : memref<7x2x448xf32, #tpu.memory_space<vmem>>, vector<1x1x64xf32>
      %276 = vector.shape_cast %275 : vector<1x1x64xf32> to vector<1x64xf32>
      %277 = vector.shape_cast %274 : vector<1x64xf32> to vector<1x1x64xf32>
      tpu.vector_store %arg9[%c2_194, %c1_195, %c0_196], %277 {strides = array<i32>} : memref<7x2x448xf32, #tpu.memory_space<vmem>>, vector<1x1x64xf32>,
      %278 = vector.extract_strided_slice %21 {offsets = [64, 0], sizes = [1, 64], strides = [1, 1]} : vector<98x64xf32> to vector<1x64xf32>
      %c2_197 = arith.constant 2 : index
      %c1_198 = arith.constant 1 : index
      %c64_199 = arith.constant 64 : index
      %279 = vector.load %arg9[%c2_197, %c1_198, %c64_199] : memref<7x2x448xf32, #tpu.memory_space<vmem>>, vector<1x1x64xf32>
      %280 = vector.shape_cast %279 : vector<1x1x64xf32> to vector<1x64xf32>
      %281 = vector.shape_cast %278 : vector<1x64xf32> to vector<1x1x64xf32>
      tpu.vector_store %arg9[%c2_197, %c1_198, %c64_199], %281 {strides = array<i32>} : memref<7x2x448xf32, #tpu.memory_space<vmem>>, vector<1x1x64xf32>,
      %282 = vector.extract_strided_slice %21 {offsets = [65, 0], sizes = [1, 64], strides = [1, 1]} : vector<98x64xf32> to vector<1x64xf32>
      %c2_200 = arith.constant 2 : index
      %c1_201 = arith.constant 1 : index
      %c128_202 = arith.constant 128 : index
      %283 = vector.load %arg9[%c2_200, %c1_201, %c128_202] : memref<7x2x448xf32, #tpu.memory_space<vmem>>, vector<1x1x64xf32>
      %284 = vector.shape_cast %283 : vector<1x1x64xf32> to vector<1x64xf32>
      %285 = vector.shape_cast %282 : vector<1x64xf32> to vector<1x1x64xf32>
      tpu.vector_store %arg9[%c2_200, %c1_201, %c128_202], %285 {strides = array<i32>} : memref<7x2x448xf32, #tpu.memory_space<vmem>>, vector<1x1x64xf32>,
      %286 = vector.extract_strided_slice %21 {offsets = [66, 0], sizes = [1, 64], strides = [1, 1]} : vector<98x64xf32> to vector<1x64xf32>
      %c2_203 = arith.constant 2 : index
      %c1_204 = arith.constant 1 : index
      %c192_205 = arith.constant 192 : index
      %287 = vector.load %arg9[%c2_203, %c1_204, %c192_205] : memref<7x2x448xf32, #tpu.memory_space<vmem>>, vector<1x1x64xf32>
      %288 = vector.shape_cast %287 : vector<1x1x64xf32> to vector<1x64xf32>
      %289 = vector.shape_cast %286 : vector<1x64xf32> to vector<1x1x64xf32>
      tpu.vector_store %arg9[%c2_203, %c1_204, %c192_205], %289 {strides = array<i32>} : memref<7x2x448xf32, #tpu.memory_space<vmem>>, vector<1x1x64xf32>,
      %290 = vector.extract_strided_slice %21 {offsets = [67, 0], sizes = [1, 64], strides = [1, 1]} : vector<98x64xf32> to vector<1x64xf32>
      %c2_206 = arith.constant 2 : index
      %c1_207 = arith.constant 1 : index
      %c256_208 = arith.constant 256 : index
      %291 = vector.load %arg9[%c2_206, %c1_207, %c256_208] : memref<7x2x448xf32, #tpu.memory_space<vmem>>, vector<1x1x64xf32>
      %292 = vector.shape_cast %291 : vector<1x1x64xf32> to vector<1x64xf32>
      %293 = vector.shape_cast %290 : vector<1x64xf32> to vector<1x1x64xf32>
      tpu.vector_store %arg9[%c2_206, %c1_207, %c256_208], %293 {strides = array<i32>} : memref<7x2x448xf32, #tpu.memory_space<vmem>>, vector<1x1x64xf32>,
      %294 = vector.extract_strided_slice %21 {offsets = [68, 0], sizes = [1, 64], strides = [1, 1]} : vector<98x64xf32> to vector<1x64xf32>
      %c2_209 = arith.constant 2 : index
      %c1_210 = arith.constant 1 : index
      %c320_211 = arith.constant 320 : index
      %295 = vector.load %arg9[%c2_209, %c1_210, %c320_211] : memref<7x2x448xf32, #tpu.memory_space<vmem>>, vector<1x1x64xf32>
      %296 = vector.shape_cast %295 : vector<1x1x64xf32> to vector<1x64xf32>
      %297 = vector.shape_cast %294 : vector<1x64xf32> to vector<1x1x64xf32>
      tpu.vector_store %arg9[%c2_209, %c1_210, %c320_211], %297 {strides = array<i32>} : memref<7x2x448xf32, #tpu.memory_space<vmem>>, vector<1x1x64xf32>,
      %298 = vector.extract_strided_slice %21 {offsets = [69, 0], sizes = [1, 64], strides = [1, 1]} : vector<98x64xf32> to vector<1x64xf32>
      %c2_212 = arith.constant 2 : index
      %c1_213 = arith.constant 1 : index
      %c384_214 = arith.constant 384 : index
      %299 = vector.load %arg9[%c2_212, %c1_213, %c384_214] : memref<7x2x448xf32, #tpu.memory_space<vmem>>, vector<1x1x64xf32>
      %300 = vector.shape_cast %299 : vector<1x1x64xf32> to vector<1x64xf32>
      %301 = vector.shape_cast %298 : vector<1x64xf32> to vector<1x1x64xf32>
      tpu.vector_store %arg9[%c2_212, %c1_213, %c384_214], %301 {strides = array<i32>} : memref<7x2x448xf32, #tpu.memory_space<vmem>>, vector<1x1x64xf32>,
      %302 = vector.extract_strided_slice %21 {offsets = [70, 0], sizes = [1, 64], strides = [1, 1]} : vector<98x64xf32> to vector<1x64xf32>
      %c3_215 = arith.constant 3 : index
      %c1_216 = arith.constant 1 : index
      %c0_217 = arith.constant 0 : index
      %303 = vector.load %arg9[%c3_215, %c1_216, %c0_217] : memref<7x2x448xf32, #tpu.memory_space<vmem>>, vector<1x1x64xf32>
      %304 = vector.shape_cast %303 : vector<1x1x64xf32> to vector<1x64xf32>
      %305 = vector.shape_cast %302 : vector<1x64xf32> to vector<1x1x64xf32>
      tpu.vector_store %arg9[%c3_215, %c1_216, %c0_217], %305 {strides = array<i32>} : memref<7x2x448xf32, #tpu.memory_space<vmem>>, vector<1x1x64xf32>,
      %306 = vector.extract_strided_slice %21 {offsets = [71, 0], sizes = [1, 64], strides = [1, 1]} : vector<98x64xf32> to vector<1x64xf32>
      %c3_218 = arith.constant 3 : index
      %c1_219 = arith.constant 1 : index
      %c64_220 = arith.constant 64 : index
      %307 = vector.load %arg9[%c3_218, %c1_219, %c64_220] : memref<7x2x448xf32, #tpu.memory_space<vmem>>, vector<1x1x64xf32>
      %308 = vector.shape_cast %307 : vector<1x1x64xf32> to vector<1x64xf32>
      %309 = vector.shape_cast %306 : vector<1x64xf32> to vector<1x1x64xf32>
      tpu.vector_store %arg9[%c3_218, %c1_219, %c64_220], %309 {strides = array<i32>} : memref<7x2x448xf32, #tpu.memory_space<vmem>>, vector<1x1x64xf32>,
      %310 = vector.extract_strided_slice %21 {offsets = [72, 0], sizes = [1, 64], strides = [1, 1]} : vector<98x64xf32> to vector<1x64xf32>
      %c3_221 = arith.constant 3 : index
      %c1_222 = arith.constant 1 : index
      %c128_223 = arith.constant 128 : index
      %311 = vector.load %arg9[%c3_221, %c1_222, %c128_223] : memref<7x2x448xf32, #tpu.memory_space<vmem>>, vector<1x1x64xf32>
      %312 = vector.shape_cast %311 : vector<1x1x64xf32> to vector<1x64xf32>
      %313 = vector.shape_cast %310 : vector<1x64xf32> to vector<1x1x64xf32>
      tpu.vector_store %arg9[%c3_221, %c1_222, %c128_223], %313 {strides = array<i32>} : memref<7x2x448xf32, #tpu.memory_space<vmem>>, vector<1x1x64xf32>,
      %314 = vector.extract_strided_slice %21 {offsets = [73, 0], sizes = [1, 64], strides = [1, 1]} : vector<98x64xf32> to vector<1x64xf32>
      %c3_224 = arith.constant 3 : index
      %c1_225 = arith.constant 1 : index
      %c192_226 = arith.constant 192 : index
      %315 = vector.load %arg9[%c3_224, %c1_225, %c192_226] : memref<7x2x448xf32, #tpu.memory_space<vmem>>, vector<1x1x64xf32>
      %316 = vector.shape_cast %315 : vector<1x1x64xf32> to vector<1x64xf32>
      %317 = vector.shape_cast %314 : vector<1x64xf32> to vector<1x1x64xf32>
      tpu.vector_store %arg9[%c3_224, %c1_225, %c192_226], %317 {strides = array<i32>} : memref<7x2x448xf32, #tpu.memory_space<vmem>>, vector<1x1x64xf32>,
      %318 = vector.extract_strided_slice %21 {offsets = [74, 0], sizes = [1, 64], strides = [1, 1]} : vector<98x64xf32> to vector<1x64xf32>
      %c3_227 = arith.constant 3 : index
      %c1_228 = arith.constant 1 : index
      %c256_229 = arith.constant 256 : index
      %319 = vector.load %arg9[%c3_227, %c1_228, %c256_229] : memref<7x2x448xf32, #tpu.memory_space<vmem>>, vector<1x1x64xf32>
      %320 = vector.shape_cast %319 : vector<1x1x64xf32> to vector<1x64xf32>
      %321 = vector.shape_cast %318 : vector<1x64xf32> to vector<1x1x64xf32>
      tpu.vector_store %arg9[%c3_227, %c1_228, %c256_229], %321 {strides = array<i32>} : memref<7x2x448xf32, #tpu.memory_space<vmem>>, vector<1x1x64xf32>,
      %322 = vector.extract_strided_slice %21 {offsets = [75, 0], sizes = [1, 64], strides = [1, 1]} : vector<98x64xf32> to vector<1x64xf32>
      %c3_230 = arith.constant 3 : index
      %c1_231 = arith.constant 1 : index
      %c320_232 = arith.constant 320 : index
      %323 = vector.load %arg9[%c3_230, %c1_231, %c320_232] : memref<7x2x448xf32, #tpu.memory_space<vmem>>, vector<1x1x64xf32>
      %324 = vector.shape_cast %323 : vector<1x1x64xf32> to vector<1x64xf32>
      %325 = vector.shape_cast %322 : vector<1x64xf32> to vector<1x1x64xf32>
      tpu.vector_store %arg9[%c3_230, %c1_231, %c320_232], %325 {strides = array<i32>} : memref<7x2x448xf32, #tpu.memory_space<vmem>>, vector<1x1x64xf32>,
      %326 = vector.extract_strided_slice %21 {offsets = [76, 0], sizes = [1, 64], strides = [1, 1]} : vector<98x64xf32> to vector<1x64xf32>
      %c3_233 = arith.constant 3 : index
      %c1_234 = arith.constant 1 : index
      %c384_235 = arith.constant 384 : index
      %327 = vector.load %arg9[%c3_233, %c1_234, %c384_235] : memref<7x2x448xf32, #tpu.memory_space<vmem>>, vector<1x1x64xf32>
      %328 = vector.shape_cast %327 : vector<1x1x64xf32> to vector<1x64xf32>
      %329 = vector.shape_cast %326 : vector<1x64xf32> to vector<1x1x64xf32>
      tpu.vector_store %arg9[%c3_233, %c1_234, %c384_235], %329 {strides = array<i32>} : memref<7x2x448xf32, #tpu.memory_space<vmem>>, vector<1x1x64xf32>,
      %330 = vector.extract_strided_slice %21 {offsets = [77, 0], sizes = [1, 64], strides = [1, 1]} : vector<98x64xf32> to vector<1x64xf32>
      %c4_236 = arith.constant 4 : index
      %c1_237 = arith.constant 1 : index
      %c0_238 = arith.constant 0 : index
      %331 = vector.load %arg9[%c4_236, %c1_237, %c0_238] : memref<7x2x448xf32, #tpu.memory_space<vmem>>, vector<1x1x64xf32>
      %332 = vector.shape_cast %331 : vector<1x1x64xf32> to vector<1x64xf32>
      %333 = vector.shape_cast %330 : vector<1x64xf32> to vector<1x1x64xf32>
      tpu.vector_store %arg9[%c4_236, %c1_237, %c0_238], %333 {strides = array<i32>} : memref<7x2x448xf32, #tpu.memory_space<vmem>>, vector<1x1x64xf32>,
      %334 = vector.extract_strided_slice %21 {offsets = [78, 0], sizes = [1, 64], strides = [1, 1]} : vector<98x64xf32> to vector<1x64xf32>
      %c4_239 = arith.constant 4 : index
      %c1_240 = arith.constant 1 : index
      %c64_241 = arith.constant 64 : index
      %335 = vector.load %arg9[%c4_239, %c1_240, %c64_241] : memref<7x2x448xf32, #tpu.memory_space<vmem>>, vector<1x1x64xf32>
      %336 = vector.shape_cast %335 : vector<1x1x64xf32> to vector<1x64xf32>
      %337 = vector.shape_cast %334 : vector<1x64xf32> to vector<1x1x64xf32>
      tpu.vector_store %arg9[%c4_239, %c1_240, %c64_241], %337 {strides = array<i32>} : memref<7x2x448xf32, #tpu.memory_space<vmem>>, vector<1x1x64xf32>,
      %338 = vector.extract_strided_slice %21 {offsets = [79, 0], sizes = [1, 64], strides = [1, 1]} : vector<98x64xf32> to vector<1x64xf32>
      %c4_242 = arith.constant 4 : index
      %c1_243 = arith.constant 1 : index
      %c128_244 = arith.constant 128 : index
      %339 = vector.load %arg9[%c4_242, %c1_243, %c128_244] : memref<7x2x448xf32, #tpu.memory_space<vmem>>, vector<1x1x64xf32>
      %340 = vector.shape_cast %339 : vector<1x1x64xf32> to vector<1x64xf32>
      %341 = vector.shape_cast %338 : vector<1x64xf32> to vector<1x1x64xf32>
      tpu.vector_store %arg9[%c4_242, %c1_243, %c128_244], %341 {strides = array<i32>} : memref<7x2x448xf32, #tpu.memory_space<vmem>>, vector<1x1x64xf32>,
      %342 = vector.extract_strided_slice %21 {offsets = [80, 0], sizes = [1, 64], strides = [1, 1]} : vector<98x64xf32> to vector<1x64xf32>
      %c4_245 = arith.constant 4 : index
      %c1_246 = arith.constant 1 : index
      %c192_247 = arith.constant 192 : index
      %343 = vector.load %arg9[%c4_245, %c1_246, %c192_247] : memref<7x2x448xf32, #tpu.memory_space<vmem>>, vector<1x1x64xf32>
      %344 = vector.shape_cast %343 : vector<1x1x64xf32> to vector<1x64xf32>
      %345 = vector.shape_cast %342 : vector<1x64xf32> to vector<1x1x64xf32>
      tpu.vector_store %arg9[%c4_245, %c1_246, %c192_247], %345 {strides = array<i32>} : memref<7x2x448xf32, #tpu.memory_space<vmem>>, vector<1x1x64xf32>,
      %346 = vector.extract_strided_slice %21 {offsets = [81, 0], sizes = [1, 64], strides = [1, 1]} : vector<98x64xf32> to vector<1x64xf32>
      %c4_248 = arith.constant 4 : index
      %c1_249 = arith.constant 1 : index
      %c256_250 = arith.constant 256 : index
      %347 = vector.load %arg9[%c4_248, %c1_249, %c256_250] : memref<7x2x448xf32, #tpu.memory_space<vmem>>, vector<1x1x64xf32>
      %348 = vector.shape_cast %347 : vector<1x1x64xf32> to vector<1x64xf32>
      %349 = vector.shape_cast %346 : vector<1x64xf32> to vector<1x1x64xf32>
      tpu.vector_store %arg9[%c4_248, %c1_249, %c256_250], %349 {strides = array<i32>} : memref<7x2x448xf32, #tpu.memory_space<vmem>>, vector<1x1x64xf32>,
      %350 = vector.extract_strided_slice %21 {offsets = [82, 0], sizes = [1, 64], strides = [1, 1]} : vector<98x64xf32> to vector<1x64xf32>
      %c4_251 = arith.constant 4 : index
      %c1_252 = arith.constant 1 : index
      %c320_253 = arith.constant 320 : index
      %351 = vector.load %arg9[%c4_251, %c1_252, %c320_253] : memref<7x2x448xf32, #tpu.memory_space<vmem>>, vector<1x1x64xf32>
      %352 = vector.shape_cast %351 : vector<1x1x64xf32> to vector<1x64xf32>
      %353 = vector.shape_cast %350 : vector<1x64xf32> to vector<1x1x64xf32>
      tpu.vector_store %arg9[%c4_251, %c1_252, %c320_253], %353 {strides = array<i32>} : memref<7x2x448xf32, #tpu.memory_space<vmem>>, vector<1x1x64xf32>,
      %354 = vector.extract_strided_slice %21 {offsets = [83, 0], sizes = [1, 64], strides = [1, 1]} : vector<98x64xf32> to vector<1x64xf32>
      %c4_254 = arith.constant 4 : index
      %c1_255 = arith.constant 1 : index
      %c384_256 = arith.constant 384 : index
      %355 = vector.load %arg9[%c4_254, %c1_255, %c384_256] : memref<7x2x448xf32, #tpu.memory_space<vmem>>, vector<1x1x64xf32>
      %356 = vector.shape_cast %355 : vector<1x1x64xf32> to vector<1x64xf32>
      %357 = vector.shape_cast %354 : vector<1x64xf32> to vector<1x1x64xf32>
      tpu.vector_store %arg9[%c4_254, %c1_255, %c384_256], %357 {strides = array<i32>} : memref<7x2x448xf32, #tpu.memory_space<vmem>>, vector<1x1x64xf32>,
      %358 = vector.extract_strided_slice %21 {offsets = [84, 0], sizes = [1, 64], strides = [1, 1]} : vector<98x64xf32> to vector<1x64xf32>
      %c5_257 = arith.constant 5 : index
      %c1_258 = arith.constant 1 : index
      %c0_259 = arith.constant 0 : index
      %359 = vector.load %arg9[%c5_257, %c1_258, %c0_259] : memref<7x2x448xf32, #tpu.memory_space<vmem>>, vector<1x1x64xf32>
      %360 = vector.shape_cast %359 : vector<1x1x64xf32> to vector<1x64xf32>
      %361 = vector.shape_cast %358 : vector<1x64xf32> to vector<1x1x64xf32>
      tpu.vector_store %arg9[%c5_257, %c1_258, %c0_259], %361 {strides = array<i32>} : memref<7x2x448xf32, #tpu.memory_space<vmem>>, vector<1x1x64xf32>,
      %362 = vector.extract_strided_slice %21 {offsets = [85, 0], sizes = [1, 64], strides = [1, 1]} : vector<98x64xf32> to vector<1x64xf32>
      %c5_260 = arith.constant 5 : index
      %c1_261 = arith.constant 1 : index
      %c64_262 = arith.constant 64 : index
      %363 = vector.load %arg9[%c5_260, %c1_261, %c64_262] : memref<7x2x448xf32, #tpu.memory_space<vmem>>, vector<1x1x64xf32>
      %364 = vector.shape_cast %363 : vector<1x1x64xf32> to vector<1x64xf32>
      %365 = vector.shape_cast %362 : vector<1x64xf32> to vector<1x1x64xf32>
      tpu.vector_store %arg9[%c5_260, %c1_261, %c64_262], %365 {strides = array<i32>} : memref<7x2x448xf32, #tpu.memory_space<vmem>>, vector<1x1x64xf32>,
      %366 = vector.extract_strided_slice %21 {offsets = [86, 0], sizes = [1, 64], strides = [1, 1]} : vector<98x64xf32> to vector<1x64xf32>
      %c5_263 = arith.constant 5 : index
      %c1_264 = arith.constant 1 : index
      %c128_265 = arith.constant 128 : index
      %367 = vector.load %arg9[%c5_263, %c1_264, %c128_265] : memref<7x2x448xf32, #tpu.memory_space<vmem>>, vector<1x1x64xf32>
      %368 = vector.shape_cast %367 : vector<1x1x64xf32> to vector<1x64xf32>
      %369 = vector.shape_cast %366 : vector<1x64xf32> to vector<1x1x64xf32>
      tpu.vector_store %arg9[%c5_263, %c1_264, %c128_265], %369 {strides = array<i32>} : memref<7x2x448xf32, #tpu.memory_space<vmem>>, vector<1x1x64xf32>,
      %370 = vector.extract_strided_slice %21 {offsets = [87, 0], sizes = [1, 64], strides = [1, 1]} : vector<98x64xf32> to vector<1x64xf32>
      %c5_266 = arith.constant 5 : index
      %c1_267 = arith.constant 1 : index
      %c192_268 = arith.constant 192 : index
      %371 = vector.load %arg9[%c5_266, %c1_267, %c192_268] : memref<7x2x448xf32, #tpu.memory_space<vmem>>, vector<1x1x64xf32>
      %372 = vector.shape_cast %371 : vector<1x1x64xf32> to vector<1x64xf32>
      %373 = vector.shape_cast %370 : vector<1x64xf32> to vector<1x1x64xf32>
      tpu.vector_store %arg9[%c5_266, %c1_267, %c192_268], %373 {strides = array<i32>} : memref<7x2x448xf32, #tpu.memory_space<vmem>>, vector<1x1x64xf32>,
      %374 = vector.extract_strided_slice %21 {offsets = [88, 0], sizes = [1, 64], strides = [1, 1]} : vector<98x64xf32> to vector<1x64xf32>
      %c5_269 = arith.constant 5 : index
      %c1_270 = arith.constant 1 : index
      %c256_271 = arith.constant 256 : index
      %375 = vector.load %arg9[%c5_269, %c1_270, %c256_271] : memref<7x2x448xf32, #tpu.memory_space<vmem>>, vector<1x1x64xf32>
      %376 = vector.shape_cast %375 : vector<1x1x64xf32> to vector<1x64xf32>
      %377 = vector.shape_cast %374 : vector<1x64xf32> to vector<1x1x64xf32>
      tpu.vector_store %arg9[%c5_269, %c1_270, %c256_271], %377 {strides = array<i32>} : memref<7x2x448xf32, #tpu.memory_space<vmem>>, vector<1x1x64xf32>,
      %378 = vector.extract_strided_slice %21 {offsets = [89, 0], sizes = [1, 64], strides = [1, 1]} : vector<98x64xf32> to vector<1x64xf32>
      %c5_272 = arith.constant 5 : index
      %c1_273 = arith.constant 1 : index
      %c320_274 = arith.constant 320 : index
      %379 = vector.load %arg9[%c5_272, %c1_273, %c320_274] : memref<7x2x448xf32, #tpu.memory_space<vmem>>, vector<1x1x64xf32>
      %380 = vector.shape_cast %379 : vector<1x1x64xf32> to vector<1x64xf32>
      %381 = vector.shape_cast %378 : vector<1x64xf32> to vector<1x1x64xf32>
      tpu.vector_store %arg9[%c5_272, %c1_273, %c320_274], %381 {strides = array<i32>} : memref<7x2x448xf32, #tpu.memory_space<vmem>>, vector<1x1x64xf32>,
      %382 = vector.extract_strided_slice %21 {offsets = [90, 0], sizes = [1, 64], strides = [1, 1]} : vector<98x64xf32> to vector<1x64xf32>
      %c5_275 = arith.constant 5 : index
      %c1_276 = arith.constant 1 : index
      %c384_277 = arith.constant 384 : index
      %383 = vector.load %arg9[%c5_275, %c1_276, %c384_277] : memref<7x2x448xf32, #tpu.memory_space<vmem>>, vector<1x1x64xf32>
      %384 = vector.shape_cast %383 : vector<1x1x64xf32> to vector<1x64xf32>
      %385 = vector.shape_cast %382 : vector<1x64xf32> to vector<1x1x64xf32>
      tpu.vector_store %arg9[%c5_275, %c1_276, %c384_277], %385 {strides = array<i32>} : memref<7x2x448xf32, #tpu.memory_space<vmem>>, vector<1x1x64xf32>,
      %386 = vector.extract_strided_slice %21 {offsets = [91, 0], sizes = [1, 64], strides = [1, 1]} : vector<98x64xf32> to vector<1x64xf32>
      %c6_278 = arith.constant 6 : index
      %c1_279 = arith.constant 1 : index
      %c0_280 = arith.constant 0 : index
      %387 = vector.load %arg9[%c6_278, %c1_279, %c0_280] : memref<7x2x448xf32, #tpu.memory_space<vmem>>, vector<1x1x64xf32>
      %388 = vector.shape_cast %387 : vector<1x1x64xf32> to vector<1x64xf32>
      %389 = vector.shape_cast %386 : vector<1x64xf32> to vector<1x1x64xf32>
      tpu.vector_store %arg9[%c6_278, %c1_279, %c0_280], %389 {strides = array<i32>} : memref<7x2x448xf32, #tpu.memory_space<vmem>>, vector<1x1x64xf32>,
      %390 = vector.extract_strided_slice %21 {offsets = [92, 0], sizes = [1, 64], strides = [1, 1]} : vector<98x64xf32> to vector<1x64xf32>
      %c6_281 = arith.constant 6 : index
      %c1_282 = arith.constant 1 : index
      %c64_283 = arith.constant 64 : index
      %391 = vector.load %arg9[%c6_281, %c1_282, %c64_283] : memref<7x2x448xf32, #tpu.memory_space<vmem>>, vector<1x1x64xf32>
      %392 = vector.shape_cast %391 : vector<1x1x64xf32> to vector<1x64xf32>
      %393 = vector.shape_cast %390 : vector<1x64xf32> to vector<1x1x64xf32>
      tpu.vector_store %arg9[%c6_281, %c1_282, %c64_283], %393 {strides = array<i32>} : memref<7x2x448xf32, #tpu.memory_space<vmem>>, vector<1x1x64xf32>,
      %394 = vector.extract_strided_slice %21 {offsets = [93, 0], sizes = [1, 64], strides = [1, 1]} : vector<98x64xf32> to vector<1x64xf32>
      %c6_284 = arith.constant 6 : index
      %c1_285 = arith.constant 1 : index
      %c128_286 = arith.constant 128 : index
      %395 = vector.load %arg9[%c6_284, %c1_285, %c128_286] : memref<7x2x448xf32, #tpu.memory_space<vmem>>, vector<1x1x64xf32>
      %396 = vector.shape_cast %395 : vector<1x1x64xf32> to vector<1x64xf32>
      %397 = vector.shape_cast %394 : vector<1x64xf32> to vector<1x1x64xf32>
      tpu.vector_store %arg9[%c6_284, %c1_285, %c128_286], %397 {strides = array<i32>} : memref<7x2x448xf32, #tpu.memory_space<vmem>>, vector<1x1x64xf32>,
      %398 = vector.extract_strided_slice %21 {offsets = [94, 0], sizes = [1, 64], strides = [1, 1]} : vector<98x64xf32> to vector<1x64xf32>
      %c6_287 = arith.constant 6 : index
      %c1_288 = arith.constant 1 : index
      %c192_289 = arith.constant 192 : index
      %399 = vector.load %arg9[%c6_287, %c1_288, %c192_289] : memref<7x2x448xf32, #tpu.memory_space<vmem>>, vector<1x1x64xf32>
      %400 = vector.shape_cast %399 : vector<1x1x64xf32> to vector<1x64xf32>
      %401 = vector.shape_cast %398 : vector<1x64xf32> to vector<1x1x64xf32>
      tpu.vector_store %arg9[%c6_287, %c1_288, %c192_289], %401 {strides = array<i32>} : memref<7x2x448xf32, #tpu.memory_space<vmem>>, vector<1x1x64xf32>,
      %402 = vector.extract_strided_slice %21 {offsets = [95, 0], sizes = [1, 64], strides = [1, 1]} : vector<98x64xf32> to vector<1x64xf32>
      %c6_290 = arith.constant 6 : index
      %c1_291 = arith.constant 1 : index
      %c256_292 = arith.constant 256 : index
      %403 = vector.load %arg9[%c6_290, %c1_291, %c256_292] : memref<7x2x448xf32, #tpu.memory_space<vmem>>, vector<1x1x64xf32>
      %404 = vector.shape_cast %403 : vector<1x1x64xf32> to vector<1x64xf32>
      %405 = vector.shape_cast %402 : vector<1x64xf32> to vector<1x1x64xf32>
      tpu.vector_store %arg9[%c6_290, %c1_291, %c256_292], %405 {strides = array<i32>} : memref<7x2x448xf32, #tpu.memory_space<vmem>>, vector<1x1x64xf32>,
      %406 = vector.extract_strided_slice %21 {offsets = [96, 0], sizes = [1, 64], strides = [1, 1]} : vector<98x64xf32> to vector<1x64xf32>
      %c6_293 = arith.constant 6 : index
      %c1_294 = arith.constant 1 : index
      %c320_295 = arith.constant 320 : index
      %407 = vector.load %arg9[%c6_293, %c1_294, %c320_295] : memref<7x2x448xf32, #tpu.memory_space<vmem>>, vector<1x1x64xf32>
      %408 = vector.shape_cast %407 : vector<1x1x64xf32> to vector<1x64xf32>
      %409 = vector.shape_cast %406 : vector<1x64xf32> to vector<1x1x64xf32>
      tpu.vector_store %arg9[%c6_293, %c1_294, %c320_295], %409 {strides = array<i32>} : memref<7x2x448xf32, #tpu.memory_space<vmem>>, vector<1x1x64xf32>,
      %410 = vector.extract_strided_slice %21 {offsets = [97, 0], sizes = [1, 64], strides = [1, 1]} : vector<98x64xf32> to vector<1x64xf32>
      %c6_296 = arith.constant 6 : index
      %c1_297 = arith.constant 1 : index
      %c384_298 = arith.constant 384 : index
      %411 = vector.load %arg9[%c6_296, %c1_297, %c384_298] : memref<7x2x448xf32, #tpu.memory_space<vmem>>, vector<1x1x64xf32>
      %412 = vector.shape_cast %411 : vector<1x1x64xf32> to vector<1x64xf32>
      %413 = vector.shape_cast %410 : vector<1x64xf32> to vector<1x1x64xf32>
      tpu.vector_store %arg9[%c6_296, %c1_297, %c384_298], %413 {strides = array<i32>} : memref<7x2x448xf32, #tpu.memory_space<vmem>>, vector<1x1x64xf32>,
      %cst_299 = arith.constant 0.000000e+00 : f32
      %414 = vector.broadcast %cst_299 : f32 to vector<2x512xf32>
      %c0_300 = arith.constant 0 : index
      %c0_301 = arith.constant 0 : index
      %415 = vector.load %arg10[%c0_300, %c0_301] : memref<2x512xf32, #tpu.memory_space<vmem>>, vector<2x512xf32>
      tpu.vector_store %arg10[%c0_300, %c0_301], %414 {strides = array<i32>} : memref<2x512xf32, #tpu.memory_space<vmem>>, vector<2x512xf32>,
    } else {
    }
    %c0 = arith.constant 0 : index
    %c0_1 = arith.constant 0 : index
    %3 = vector.load %arg10[%c0, %c0_1] : memref<2x512xf32, #tpu.memory_space<vmem>>, vector<2x512xf32>
    %4 = arith.index_cast %arg0 : i32 to index
    %c0_2 = arith.constant 0 : index
    %c0_3 = arith.constant 0 : index
    %5 = vector.load %arg9[%4, %c0_2, %c0_3] : memref<7x2x448xf32, #tpu.memory_space<vmem>>, vector<1x2x448xf32>
    %6 = vector.shape_cast %5 : vector<1x2x448xf32> to vector<2x448xf32>
    %c0_4 = arith.constant 0 : index
    %c0_5 = arith.constant 0 : index
    %7 = vector.load %arg4[%c0_4, %c0_5] : memref<448x512xf32, #tpu.memory_space<vmem>>, vector<448x512xf32>
    %cst = arith.constant dense<0.000000e+00> : vector<2x512xf32>
    %8 = tpu.matmul %6, %7, %cst {dimension_numbers = #tpu.dot_dimension_numbers<[1], [0], [0], [1], [0, 0, 1, 1], [], []>} : vector<2x448xf32>, vector<448x512xf32>, vector<2x512xf32> -> vector<2x512xf32>
    %9 = arith.addf %3, %8 : vector<2x512xf32>
    %c0_6 = arith.constant 0 : index
    %c0_7 = arith.constant 0 : index
    %10 = vector.load %arg10[%c0_6, %c0_7] : memref<2x512xf32, #tpu.memory_space<vmem>>, vector<2x512xf32>
    tpu.vector_store %arg10[%c0_6, %c0_7], %9 {strides = array<i32>} : memref<2x512xf32, #tpu.memory_space<vmem>>, vector<2x512xf32>,
    %c6_i32 = arith.constant 6 : i32
    %11 = arith.cmpi eq, %arg0, %c6_i32 : i32
    %12 = arith.extui %11 : i1 to i32
    %c0_i32_8 = arith.constant 0 : i32
    %13 = arith.cmpi ne, %12, %c0_i32_8 : i32
    scf.if %13 {
      %c0_9 = arith.constant 0 : index
      %c0_10 = arith.constant 0 : index
      %14 = vector.load %arg10[%c0_9, %c0_10] : memref<2x512xf32, #tpu.memory_space<vmem>>, vector<2x512xf32>
      %c0_11 = arith.constant 0 : index
      %c0_12 = arith.constant 0 : index
      %15 = vector.load %arg5[%c0_11, %c0_12] : memref<1x512xf32, #tpu.memory_space<vmem>>, vector<1x512xf32>
      %16 = vector.broadcast %15 : vector<1x512xf32> to vector<2x512xf32>
      %17 = arith.addf %14, %16 : vector<2x512xf32>
      %cst_13 = arith.constant 0.000000e+00 : f32
      %18 = vector.broadcast %cst_13 : f32 to vector<2x512xf32>
      %19 = arith.maximumf %17, %18 : vector<2x512xf32>
      %c0_14 = arith.constant 0 : index
      %c0_15 = arith.constant 0 : index
      %20 = vector.load %arg6[%c0_14, %c0_15] : memref<512x6xf32, #tpu.memory_space<vmem>>, vector<512x6xf32>
      %cst_16 = arith.constant dense<0.000000e+00> : vector<2x6xf32>
      %21 = tpu.matmul %19, %20, %cst_16 {dimension_numbers = #tpu.dot_dimension_numbers<[1], [0], [0], [1], [0, 0, 1, 1], [], []>} : vector<2x512xf32>, vector<512x6xf32>, vector<2x6xf32> -> vector<2x6xf32>
      %c0_17 = arith.constant 0 : index
      %c0_18 = arith.constant 0 : index
      %22 = vector.load %arg7[%c0_17, %c0_18] : memref<1x6xf32, #tpu.memory_space<vmem>>, vector<1x6xf32>
      %23 = vector.broadcast %22 : vector<1x6xf32> to vector<2x6xf32>
      %24 = arith.addf %21, %23 : vector<2x6xf32>
      %c0_19 = arith.constant 0 : index
      %c0_20 = arith.constant 0 : index
      %25 = vector.load %arg8[%c0_19, %c0_20] : memref<2x6xf32, #tpu.memory_space<vmem>>, vector<2x6xf32>
      tpu.vector_store %arg8[%c0_19, %c0_20], %24 {strides = array<i32>} : memref<2x6xf32, #tpu.memory_space<vmem>>, vector<2x6xf32>,
    } else {
    }
    return
  }
  func.func @transform_0(%arg0: i32) -> (i32, i32) {
    %c0_i32 = arith.constant 0 : i32
    %c0_i32_0 = arith.constant 0 : i32
    %c0_i32_1 = arith.constant 0 : i32
    return %c0_i32, %c0_i32_0 : i32, i32
  }
  func.func @transform_1(%arg0: i32) -> (i32, i32) {
    %c0_i32 = arith.constant 0 : i32
    %c0_i32_0 = arith.constant 0 : i32
    %c0_i32_1 = arith.constant 0 : i32
    return %c0_i32, %c0_i32_0 : i32, i32
  }
  func.func @transform_2(%arg0: i32) -> (i32, i32) {
    %c0_i32 = arith.constant 0 : i32
    %c0_i32_0 = arith.constant 0 : i32
    %c0_i32_1 = arith.constant 0 : i32
    return %c0_i32, %c0_i32_0 : i32, i32
  }
  func.func @transform_3(%arg0: i32) -> (i32, i32) {
    %c0_i32 = arith.constant 0 : i32
    %c0_i32_0 = arith.constant 0 : i32
    return %arg0, %c0_i32 : i32, i32
  }
  func.func @transform_4(%arg0: i32) -> (i32, i32) {
    %c0_i32 = arith.constant 0 : i32
    %c0_i32_0 = arith.constant 0 : i32
    %c0_i32_1 = arith.constant 0 : i32
    return %c0_i32, %c0_i32_0 : i32, i32
  }
  func.func @transform_5(%arg0: i32) -> (i32, i32) {
    %c0_i32 = arith.constant 0 : i32
    %c0_i32_0 = arith.constant 0 : i32
    %c0_i32_1 = arith.constant 0 : i32
    return %c0_i32, %c0_i32_0 : i32, i32
  }
  func.func @transform_6(%arg0: i32) -> (i32, i32) {
    %c0_i32 = arith.constant 0 : i32
    %c0_i32_0 = arith.constant 0 : i32
    %c0_i32_1 = arith.constant 0 : i32
    return %c0_i32, %c0_i32_0 : i32, i32
  }
  func.func @transform_7(%arg0: i32) -> (i32, i32) {
    %c0_i32 = arith.constant 0 : i32
    %c0_i32_0 = arith.constant 0 : i32
    %c0_i32_1 = arith.constant 0 : i32
    return %c0_i32, %c0_i32_0 : i32, i32
  }
}

</mosaic_0001>

<llo_original>
// kernel: qnetwork_forward.3
$region0: #{qnetwork_forward.3}
  #allocation0 [shape = 'u32[]', space=smem, size = 0x4, offset = 0x4, fixed_abs, tag = 'smem constant byte address 0x4 - core index']
  #allocation1 [shape = 'u32[144,128]{1,0:T(1,128)}', space=vmem, size = 0x12000, scoped, tag = 'internal scratch']
  %s0 = inlined_call_operand.vmem [shape: f32[800,256], index: 0, kind: input, shape index: {}]
  %s1 = inlined_call_operand.vmem [shape: f32[256,32], index: 1, kind: input, shape index: {}]
  %s2 = inlined_call_operand.vmem [shape: f32[1,32], index: 2, kind: input, shape index: {}]
  %s3 = inlined_call_operand.vmem [shape: f32[800,32], index: 3, kind: output, shape index: {}]
  %s4 = sld [smem:[#allocation0]]
  $region45: #{qnetwork_forward.3} parent=0
    _
  %s6 = ssub.s32 1, %s4
  %s7 = scalar_select 0, %s6, %s4
  loop: start=0, step=1, limit=4
  $region2: #{qnetwork_forward.3} parent=0 // loop_pre_header
    _
  $region3: #{qnetwork_forward.3} parent=0 // loop_header
    %s9 = sphi 0, %s13
    %p10 = scmp.ge.s32.totalorder %s9, 4
    %s19 = sphi 0, %s21
    %s22 = sphi 0, %s19
    %s23 = sphi 0, %s22
    %s39 = sphi 0, %s23
    %s43 = sphi 0, %s43
    %s45 = sphi 0, %s43
    %s46 = sphi 0, %s45
    %s60 = sphi 0, %s46
    %s64 = sphi 0, %s64
    %s66 = sphi 0, %s64
    %s67 = sphi 0, %s66
    %s81 = sphi 0, %s67
    %s87 = sphi 0, %s89
    %s90 = sphi 0, %s87
    %s91 = sphi 0, %s90
    %s107 = sphi 0, %s91
  $region4: #{qnetwork_forward.3} parent=0 // loop_header_branch
    %12 = sbr.rel (%p10) target = $region8
  $region5: #{qnetwork_forward.3} parent=0 // loop_body
    %s14 = ssub.s32 %s9, 1
    %s15 = ssub.s32 %s9, 2
    %s16 = sadd.s32 %s9, 1
    %s17 = ssub.s32 %s9, %s16
    %p18 = scmp.eq.s32.totalorder %s17, 0
    %s20 = sadd.s32 %s19, 1
    %s21 = scalar_select %p18, %s19, %s20
    %p24 = pneg %p18
    %p25 = scmp.eq.s32.totalorder %s9, 1
    %p26 = por %p24, %p25
    %p27 = scmp.ne.s32.totalorder %s19, %s22
    %p28 = scmp.eq.s32.totalorder %s9, 0
    %p29 = por %p27, %p28
    %p30 = scmp.ne.s32.totalorder %s19, %s22
    %p31 = scmp.eq.s32.totalorder %s14, 1
    %p32 = por %p30, %p31
    %p33 = scmp.ne.s32.totalorder %s22, %s23
    %p34 = scmp.eq.s32.totalorder %s14, 0
    %p35 = por %p33, %p34
    %p36 = scmp.ne.s32.totalorder %s22, %s23
    %p37 = scmp.eq.s32.totalorder %s15, 1
    %p38 = por %p36, %p37
    %p40 = scmp.ne.s32.totalorder %s23, %s39
    %p41 = scmp.eq.s32.totalorder %s15, 0
    %p42 = por %p40, %p41
    %s44 = sadd.s32 %s43, 1
    %p47 = scmp.eq.s32.totalorder %s9, 1
    %p48 = scmp.ne.s32.totalorder %s43, %s45
    %p49 = scmp.eq.s32.totalorder %s9, 0
    %p50 = por %p48, %p49
    %p51 = scmp.ne.s32.totalorder %s43, %s45
    %p52 = scmp.eq.s32.totalorder %s14, 1
    %p53 = por %p51, %p52
    %p54 = scmp.ne.s32.totalorder %s45, %s46
    %p55 = scmp.eq.s32.totalorder %s14, 0
    %p56 = por %p54, %p55
    %p57 = scmp.ne.s32.totalorder %s45, %s46
    %p58 = scmp.eq.s32.totalorder %s15, 1
    %p59 = por %p57, %p58
    %p61 = scmp.ne.s32.totalorder %s46, %s60
    %p62 = scmp.eq.s32.totalorder %s15, 0
    %p63 = por %p61, %p62
    %s65 = sadd.s32 %s64, 1
    %p68 = scmp.eq.s32.totalorder %s9, 1
    %p69 = scmp.ne.s32.totalorder %s64, %s66
    %p70 = scmp.eq.s32.totalorder %s9, 0
    %p71 = por %p69, %p70
    %p72 = scmp.ne.s32.totalorder %s64, %s66
    %p73 = scmp.eq.s32.totalorder %s14, 1
    %p74 = por %p72, %p73
    %p75 = scmp.ne.s32.totalorder %s66, %s67
    %p76 = scmp.eq.s32.totalorder %s14, 0
    %p77 = por %p75, %p76
    %p78 = scmp.ne.s32.totalorder %s66, %s67
    %p79 = scmp.eq.s32.totalorder %s15, 1
    %p80 = por %p78, %p79
    %p82 = scmp.ne.s32.totalorder %s67, %s81
    %p83 = scmp.eq.s32.totalorder %s15, 0
    %p84 = por %p82, %p83
    %s85 = ssub.s32 %s9, %s16
    %p86 = scmp.eq.s32.totalorder %s85, 0
    %s88 = sadd.s32 %s87, 1
    %s89 = scalar_select %p86, %s87, %s88
    %p92 = pneg %p86
    %p93 = scmp.eq.s32.totalorder %s9, 1
    %p94 = por %p92, %p93
    %p95 = scmp.ne.s32.totalorder %s87, %s90
    %p96 = scmp.eq.s32.totalorder %s9, 0
    %p97 = por %p95, %p96
    %p98 = scmp.ne.s32.totalorder %s87, %s90
    %p99 = scmp.eq.s32.totalorder %s14, 1
    %p100 = por %p98, %p99
    %p101 = scmp.ne.s32.totalorder %s90, %s91
    %p102 = scmp.eq.s32.totalorder %s14, 0
    %p103 = por %p101, %p102
    %p104 = scmp.ne.s32.totalorder %s90, %s91
    %p105 = scmp.eq.s32.totalorder %s15, 1
    %p106 = por %p104, %p105
    %p108 = scmp.ne.s32.totalorder %s91, %s107
    %p109 = scmp.eq.s32.totalorder %s15, 0
    %p110 = por %p108, %p109
    %p111 = scmp.le.s32.totalorder 1, %s9
    %p112 = scmp.lt.s32.totalorder %s9, 3
    %p113 = pnand %p111, %p112
    %p114 = pneg %p113
    // Predicated region
    $region9: #{qnetwork_forward.3} parent=5 // pred_check
      _
    $region10: #{qnetwork_forward.3} parent=5 // pred_check_branch
      %116 = sbr.rel (%p113) target = $region12
    $region11: #{qnetwork_forward.3} parent=5 // pred_region
      %s117 = ssub.s32 %s9, 1
      // Predicated region
      $region13: #{qnetwork_forward.3} parent=11 // pred_check
        %p118 = pneg %p56
      $region14: #{qnetwork_forward.3} parent=11 // pred_check_branch
        %120 = sbr.rel (%p118) target = $region16
      $region15: #{qnetwork_forward.3} parent=11 // pred_region
        _
      $region16: #{qnetwork_forward.3} parent=11 // pred_fallthru
        _
      // Predicated region
      $region17: #{qnetwork_forward.3} parent=11 // pred_check
        %p121 = pneg %p77
      $region18: #{qnetwork_forward.3} parent=11 // pred_check_branch
        %123 = sbr.rel (%p121) target = $region20
      $region19: #{qnetwork_forward.3} parent=11 // pred_region
        _
      $region20: #{qnetwork_forward.3} parent=11 // pred_fallthru
        _
    $region12: #{qnetwork_forward.3} parent=5 // pred_fallthru
      _
    %p124 = scmp.lt.s32.totalorder %s9, 2
    // Predicated region
    $region21: #{qnetwork_forward.3} parent=5 // pred_check
      %p125 = pneg %p124
    $region22: #{qnetwork_forward.3} parent=5 // pred_check_branch
      %127 = sbr.rel (%p125) target = $region24
    $region23: #{qnetwork_forward.3} parent=5 // pred_region
      // Predicated region
      $region25: #{qnetwork_forward.3} parent=23 // pred_check
        %p128 = pneg %p29
      $region26: #{qnetwork_forward.3} parent=23 // pred_check_branch
        %130 = sbr.rel (%p128) target = $region28
      $region27: #{qnetwork_forward.3} parent=23 // pred_region
        %s131 = smul.u32 50, %s9
        %p132 = scmp.lt.s32.totalorder %s131, 99
        %s133 = scalar_select %p132, %s131, 99
        %s134 = smul.addr %s133, 2
        %s135 = smul.addr %s134, 8
        %s136 = scalar_lea.vmem %s0, %s135
        %s137 = smul.u32 50, %s9
      $region28: #{qnetwork_forward.3} parent=23 // pred_fallthru
        _
    $region24: #{qnetwork_forward.3} parent=5 // pred_fallthru
      _
    %p138 = scmp.le.s32.totalorder 1, %s9
    %p139 = scmp.lt.s32.totalorder %s9, 3
    %p140 = pnand %p138, %p139
    %p141 = pneg %p140
    // Predicated region
    $region29: #{qnetwork_forward.3} parent=5 // pred_check
      _
    $region30: #{qnetwork_forward.3} parent=5 // pred_check_branch
      %143 = sbr.rel (%p140) target = $region32
    $region31: #{qnetwork_forward.3} parent=5 // pred_region
      %s144 = ssub.s32 %s9, 1
      %s145 = smul.u32 50, %s14
      %p146 = scmp.lt.s32.totalorder %s145, 99
      %s147 = scalar_select %p146, %s145, 99
      %s148 = smul.addr %s147, 2
      %s149 = smul.addr %s148, 8
      %s150 = scalar_lea.vmem %s0, %s149
      %p151 = pneg %p35
      %p152 = pneg %p32
      %p153 = pneg %p56
      %p154 = pneg %p53
      %p155 = pneg %p77
      %p156 = pneg %p74
      %p157 = pneg %p103
      %p158 = pneg %p100
      %s159 = smul.u32 50, %s14
      %p160 = scmp.lt.s32.totalorder %s159, 99
      %s161 = scalar_select %p160, %s159, 99
      %s162 = smul.addr %s161, 8
      %s163 = scalar_lea.vmem %s3, %s162
      %s164 = smul.u32 50, %s14
      %p165 = scmp.lt.s32.totalorder %s164, 99
      %s166 = scalar_select %p165, %s164, 99
      %s167 = smul.addr %s166, 2
      %s168 = smul.addr %s167, 8
      %s169 = scalar_lea.vmem %s0, %s168
      %s170 = smul.u32 50, %s14
      %s171 = smul.u32 50, %s14
      %p172 = scmp.lt.s32.totalorder %s171, 99
      %s173 = scalar_select %p172, %s171, 99
      %s174 = smul.addr %s173, 8
      %s175 = scalar_lea.vmem %s3, %s174
      %s176 = smul.u32 50, %s14
      %v177 = vld [vmem:[%s169] sm:$0xff]
      %v178 = vld [vmem:[%s169 + $0x8] sm:$0xff]
      %v179 = vld [vmem:[%s169 + $0x10] sm:$0xff]
      %v180 = vld [vmem:[%s169 + $0x18] sm:$0xff]
      %v181 = vld [vmem:[%s169 + $0x20] sm:$0xff]
      %v182 = vld [vmem:[%s169 + $0x28] sm:$0xff]
      %v183 = vld [vmem:[%s169 + $0x30] sm:$0xff]
      %v184 = vld [vmem:[%s169 + $0x38] sm:$0xff]
      %v185 = vld [vmem:[%s169 + $0x40] sm:$0xff]
      %v186 = vld [vmem:[%s169 + $0x48] sm:$0xff]
      %v187 = vld [vmem:[%s169 + $0x50] sm:$0xff]
      %v188 = vld [vmem:[%s169 + $0x58] sm:$0xff]
      %v189 = vld [vmem:[%s169 + $0x60] sm:$0xff]
      %v190 = vld [vmem:[%s169 + $0x68] sm:$0xff]
      %v191 = vld [vmem:[%s169 + $0x70] sm:$0xff]
      %v192 = vld [vmem:[%s169 + $0x78] sm:$0xff]
      %v193 = vld [vmem:[%s169 + $0x80] sm:$0xff]
      %v194 = vld [vmem:[%s169 + $0x88] sm:$0xff]
      %v195 = vld [vmem:[%s169 + $0x90] sm:$0xff]
      %v196 = vld [vmem:[%s169 + $0x98] sm:$0xff]
      %v197 = vld [vmem:[%s169 + $0xa0] sm:$0xff]
      %v198 = vld [vmem:[%s169 + $0xa8] sm:$0xff]
      %v199 = vld [vmem:[%s169 + $0xb0] sm:$0xff]
      %v200 = vld [vmem:[%s169 + $0xb8] sm:$0xff]
      %v201 = vld [vmem:[%s169 + $0xc0] sm:$0xff]
      %v202 = vld [vmem:[%s169 + $0xc8] sm:$0xff]
      %v203 = vld [vmem:[%s169 + $0xd0] sm:$0xff]
      %v204 = vld [vmem:[%s169 + $0xd8] sm:$0xff]
      %v205 = vld [vmem:[%s169 + $0xe0] sm:$0xff]
      %v206 = vld [vmem:[%s169 + $0xe8] sm:$0xff]
      %v207 = vld [vmem:[%s169 + $0xf0] sm:$0xff]
      %v208 = vld [vmem:[%s169 + $0xf8] sm:$0xff]
      %v209 = vld [vmem:[%s169 + $0x100] sm:$0xff]
      %v210 = vld [vmem:[%s169 + $0x108] sm:$0xff]
      %v211 = vld [vmem:[%s169 + $0x110] sm:$0xff]
      %v212 = vld [vmem:[%s169 + $0x118] sm:$0xff]
      %v213 = vld [vmem:[%s169 + $0x120] sm:$0xff]
      %v214 = vld [vmem:[%s169 + $0x128] sm:$0xff]
      %v215 = vld [vmem:[%s169 + $0x130] sm:$0xff]
      %v216 = vld [vmem:[%s169 + $0x138] sm:$0xff]
      %v217 = vld [vmem:[%s169 + $0x140] sm:$0xff]
      %v218 = vld [vmem:[%s169 + $0x148] sm:$0xff]
      %v219 = vld [vmem:[%s169 + $0x150] sm:$0xff]
      %v220 = vld [vmem:[%s169 + $0x158] sm:$0xff]
      %v221 = vld [vmem:[%s169 + $0x160] sm:$0xff]
      %v222 = vld [vmem:[%s169 + $0x168] sm:$0xff]
      %v223 = vld [vmem:[%s169 + $0x170] sm:$0xff]
      %v224 = vld [vmem:[%s169 + $0x178] sm:$0xff]
      %v225 = vld [vmem:[%s169 + $0x180] sm:$0xff]
      %v226 = vld [vmem:[%s169 + $0x188] sm:$0xff]
      %v227 = vld [vmem:[%s169 + $0x190] sm:$0xff]
      %v228 = vld [vmem:[%s169 + $0x198] sm:$0xff]
      %v229 = vld [vmem:[%s169 + $0x1a0] sm:$0xff]
      %v230 = vld [vmem:[%s169 + $0x1a8] sm:$0xff]
      %v231 = vld [vmem:[%s169 + $0x1b0] sm:$0xff]
      %v232 = vld [vmem:[%s169 + $0x1b8] sm:$0xff]
      %v233 = vld [vmem:[%s169 + $0x1c0] sm:$0xff]
      %v234 = vld [vmem:[%s169 + $0x1c8] sm:$0xff]
      %v235 = vld [vmem:[%s169 + $0x1d0] sm:$0xff]
      %v236 = vld [vmem:[%s169 + $0x1d8] sm:$0xff]
      %v237 = vld [vmem:[%s169 + $0x1e0] sm:$0xff]
      %v238 = vld [vmem:[%s169 + $0x1e8] sm:$0xff]
      %v239 = vld [vmem:[%s169 + $0x1f0] sm:$0xff]
      %v240 = vld [vmem:[%s169 + $0x1f8] sm:$0xff]
      %v241 = vld [vmem:[%s169 + $0x200] sm:$0xff]
      %v242 = vld [vmem:[%s169 + $0x208] sm:$0xff]
      %v243 = vld [vmem:[%s169 + $0x210] sm:$0xff]
      %v244 = vld [vmem:[%s169 + $0x218] sm:$0xff]
      %v245 = vld [vmem:[%s169 + $0x220] sm:$0xff]
      %v246 = vld [vmem:[%s169 + $0x228] sm:$0xff]
      %v247 = vld [vmem:[%s169 + $0x230] sm:$0xff]
      %v248 = vld [vmem:[%s169 + $0x238] sm:$0xff]
      %v249 = vld [vmem:[%s169 + $0x240] sm:$0xff]
      %v250 = vld [vmem:[%s169 + $0x248] sm:$0xff]
      %v251 = vld [vmem:[%s169 + $0x250] sm:$0xff]
      %v252 = vld [vmem:[%s169 + $0x258] sm:$0xff]
      %v253 = vld [vmem:[%s169 + $0x260] sm:$0xff]
      %v254 = vld [vmem:[%s169 + $0x268] sm:$0xff]
      %v255 = vld [vmem:[%s169 + $0x270] sm:$0xff]
      %v256 = vld [vmem:[%s169 + $0x278] sm:$0xff]
      %v257 = vld [vmem:[%s169 + $0x280] sm:$0xff]
      %v258 = vld [vmem:[%s169 + $0x288] sm:$0xff]
      %v259 = vld [vmem:[%s169 + $0x290] sm:$0xff]
      %v260 = vld [vmem:[%s169 + $0x298] sm:$0xff]
      %v261 = vld [vmem:[%s169 + $0x2a0] sm:$0xff]
      %v262 = vld [vmem:[%s169 + $0x2a8] sm:$0xff]
      %v263 = vld [vmem:[%s169 + $0x2b0] sm:$0xff]
      %v264 = vld [vmem:[%s169 + $0x2b8] sm:$0xff]
      %v265 = vld [vmem:[%s169 + $0x2c0] sm:$0xff]
      %v266 = vld [vmem:[%s169 + $0x2c8] sm:$0xff]
      %v267 = vld [vmem:[%s169 + $0x2d0] sm:$0xff]
      %v268 = vld [vmem:[%s169 + $0x2d8] sm:$0xff]
      %v269 = vld [vmem:[%s169 + $0x2e0] sm:$0xff]
      %v270 = vld [vmem:[%s169 + $0x2e8] sm:$0xff]
      %v271 = vld [vmem:[%s169 + $0x2f0] sm:$0xff]
      %v272 = vld [vmem:[%s169 + $0x2f8] sm:$0xff]
      %v273 = vld [vmem:[%s169 + $0x300] sm:$0xff]
      %v274 = vld [vmem:[%s169 + $0x308] sm:$0xff]
      %v275 = vld [vmem:[%s169 + $0x310] sm:$0xff]
      %v276 = vld [vmem:[%s169 + $0x318] sm:$0xff]
      %v277 = vld [vmem:[%s1] sm:$0xff]
      %v278 = vld [vmem:[%s1 + $0x8] sm:$0xff]
      %v279 = vld [vmem:[%s1 + $0x10] sm:$0xff]
      %v280 = vld [vmem:[%s1 + $0x18] sm:$0xff]
      %v281 = vld [vmem:[%s1 + $0x20] sm:$0xff]
      %v282 = vld [vmem:[%s1 + $0x28] sm:$0xff]
      %v283 = vld [vmem:[%s1 + $0x30] sm:$0xff]
      %v284 = vld [vmem:[%s1 + $0x38] sm:$0xff]
      %v285 = vld [vmem:[%s1 + $0x40] sm:$0xff]
      %v286 = vld [vmem:[%s1 + $0x48] sm:$0xff]
      %v287 = vld [vmem:[%s1 + $0x50] sm:$0xff]
      %v288 = vld [vmem:[%s1 + $0x58] sm:$0xff]
      %v289 = vld [vmem:[%s1 + $0x60] sm:$0xff]
      %v290 = vld [vmem:[%s1 + $0x68] sm:$0xff]
      %v291 = vld [vmem:[%s1 + $0x70] sm:$0xff]
      %v292 = vld [vmem:[%s1 + $0x78] sm:$0xff]
      %v293 = vld [vmem:[%s1 + $0x80] sm:$0xff]
      %v294 = vld [vmem:[%s1 + $0x88] sm:$0xff]
      %v295 = vld [vmem:[%s1 + $0x90] sm:$0xff]
      %v296 = vld [vmem:[%s1 + $0x98] sm:$0xff]
      %v297 = vld [vmem:[%s1 + $0xa0] sm:$0xff]
      %v298 = vld [vmem:[%s1 + $0xa8] sm:$0xff]
      %v299 = vld [vmem:[%s1 + $0xb0] sm:$0xff]
      %v300 = vld [vmem:[%s1 + $0xb8] sm:$0xff]
      %v301 = vld [vmem:[%s1 + $0xc0] sm:$0xff]
      %v302 = vld [vmem:[%s1 + $0xc8] sm:$0xff]
      %v303 = vld [vmem:[%s1 + $0xd0] sm:$0xff]
      %v304 = vld [vmem:[%s1 + $0xd8] sm:$0xff]
      %v305 = vld [vmem:[%s1 + $0xe0] sm:$0xff]
      %v306 = vld [vmem:[%s1 + $0xe8] sm:$0xff]
      %v307 = vld [vmem:[%s1 + $0xf0] sm:$0xff]
      %v308 = vld [vmem:[%s1 + $0xf8] sm:$0xff]
      %v309 = vld [vmem:[%s2] sm:$0x1]
      %v311 = vlaneseq
      %v312 = vshrl.u32 %v311, 7
      %v313 = vsub.s32 0, %v312
      %v314 = vrot.slane %v309, %v313
      %316 = vmatprep.subr.mxu0 0.0
      %317 = vmatpush1.msra.mxu0 %v277
      %318 = vmatprep.subr.mxu0 0.0
      %319 = vmatpush1.msra.mxu0 %v278
      %320 = vmatprep.subr.mxu0 0.0
      %321 = vmatpush1.msra.mxu0 %v279
      %322 = vmatprep.subr.mxu0 0.0
      %323 = vmatpush1.msra.mxu0 %v280
      %324 = vmatprep.subr.mxu0 0.0
      %325 = vmatpush1.msra.mxu0 %v281
      %326 = vmatprep.subr.mxu0 0.0
      %327 = vmatpush1.msra.mxu0 %v282
      %328 = vmatprep.subr.mxu0 0.0
      %329 = vmatpush1.msra.mxu0 %v283
      %330 = vmatprep.subr.mxu0 0.0
      %331 = vmatpush1.msra.mxu0 %v284
      %332 = vmatprep.subr.mxu0 0.0
      %333 = vmatpush1.msra.mxu0 %v285
      %334 = vmatprep.subr.mxu0 0.0
      %335 = vmatpush1.msra.mxu0 %v286
      %336 = vmatprep.subr.mxu0 0.0
      %337 = vmatpush1.msra.mxu0 %v287
      %338 = vmatprep.subr.mxu0 0.0
      %339 = vmatpush1.msra.mxu0 %v288
      %340 = vmatprep.subr.mxu0 0.0
      %341 = vmatpush1.msra.mxu0 %v289
      %342 = vmatprep.subr.mxu0 0.0
      %343 = vmatpush1.msra.mxu0 %v290
      %344 = vmatprep.subr.mxu0 0.0
      %345 = vmatpush1.msra.mxu0 %v291
      %346 = vmatprep.subr.mxu0 0.0
      %347 = vmatpush1.msra.mxu0 %v292
      %348 = vmatprep.subr.mxu0 0.0
      %349 = vmatpush1.msra.mxu0 %v293
      %350 = vmatprep.subr.mxu0 0.0
      %351 = vmatpush1.msra.mxu0 %v294
      %352 = vmatprep.subr.mxu0 0.0
      %353 = vmatpush1.msra.mxu0 %v295
      %354 = vmatprep.subr.mxu0 0.0
      %355 = vmatpush1.msra.mxu0 %v296
      %356 = vmatprep.subr.mxu0 0.0
      %357 = vmatpush1.msra.mxu0 %v297
      %358 = vmatprep.subr.mxu0 0.0
      %359 = vmatpush1.msra.mxu0 %v298
      %360 = vmatprep.subr.mxu0 0.0
      %361 = vmatpush1.msra.mxu0 %v299
      %362 = vmatprep.subr.mxu0 0.0
      %363 = vmatpush1.msra.mxu0 %v300
      %364 = vmatprep.subr.mxu0 0.0
      %365 = vmatpush1.msra.mxu0 %v301
      %366 = vmatprep.subr.mxu0 0.0
      %367 = vmatpush1.msra.mxu0 %v302
      %368 = vmatprep.subr.mxu0 0.0
      %369 = vmatpush1.msra.mxu0 %v303
      %370 = vmatprep.subr.mxu0 0.0
      %371 = vmatpush1.msra.mxu0 %v304
      %372 = vmatprep.subr.mxu0 0.0
      %373 = vmatpush1.msra.mxu0 %v305
      %374 = vmatprep.subr.mxu0 0.0
      %375 = vmatpush1.msra.mxu0 %v306
      %376 = vmatprep.subr.mxu0 0.0
      %377 = vmatpush1.msra.mxu0 %v307
      %378 = vmatprep.subr.mxu0 0.0
      %379 = vmatpush1.msra.mxu0 %v308
      %380 = vmatprep.mubr.f32.mxu0 %v178
      %381 = vmatmul.mubr.f32.gmra.mrb[0].mxu0 %v177
      %v382 = vpop.f32.mrb[0].mxu0
      %v383 = vadd.f32 %v314, %v382
      %v384 = vpop.f32.mrb[0].mxu0
      %385 = vmatprep.mubr.f32.mxu0 %v180
      %386 = vmatmul.mubr.f32.gmra.mrb[0].mxu0 %v179
      %v387 = vpop.f32.mrb[0].mxu0
      %v388 = vadd.f32 %v314, %v387
      %v389 = vpop.f32.mrb[0].mxu0
      %390 = vmatprep.mubr.f32.mxu0 %v182
      %391 = vmatmul.mubr.f32.gmra.mrb[0].mxu0 %v181
      %v392 = vpop.f32.mrb[0].mxu0
      %v393 = vadd.f32 %v314, %v392
      %v394 = vpop.f32.mrb[0].mxu0
      %395 = vmatprep.mubr.f32.mxu0 %v184
      %396 = vmatmul.mubr.f32.gmra.mrb[0].mxu0 %v183
      %v397 = vpop.f32.mrb[0].mxu0
      %v398 = vadd.f32 %v314, %v397
      %v399 = vpop.f32.mrb[0].mxu0
      %400 = vmatprep.mubr.f32.mxu0 %v186
      %401 = vmatmul.mubr.f32.gmra.mrb[0].mxu0 %v185
      %v402 = vpop.f32.mrb[0].mxu0
      %v403 = vadd.f32 %v314, %v402
      %v404 = vpop.f32.mrb[0].mxu0
      %405 = vmatprep.mubr.f32.mxu0 %v188
      %406 = vmatmul.mubr.f32.gmra.mrb[0].mxu0 %v187
      %v407 = vpop.f32.mrb[0].mxu0
      %v408 = vadd.f32 %v314, %v407
      %v409 = vpop.f32.mrb[0].mxu0
      %410 = vmatprep.mubr.f32.mxu0 %v190
      %411 = vmatmul.mubr.f32.gmra.mrb[0].mxu0 %v189
      %v412 = vpop.f32.mrb[0].mxu0
      %v413 = vadd.f32 %v314, %v412
      %v414 = vpop.f32.mrb[0].mxu0
      %415 = vmatprep.mubr.f32.mxu0 %v192
      %416 = vmatmul.mubr.f32.gmra.mrb[0].mxu0 %v191
      %v417 = vpop.f32.mrb[0].mxu0
      %v418 = vadd.f32 %v314, %v417
      %v419 = vpop.f32.mrb[0].mxu0
      %420 = vmatprep.mubr.f32.mxu0 %v194
      %421 = vmatmul.mubr.f32.gmra.mrb[0].mxu0 %v193
      %v422 = vpop.f32.mrb[0].mxu0
      %v423 = vadd.f32 %v314, %v422
      %v424 = vpop.f32.mrb[0].mxu0
      %425 = vmatprep.mubr.f32.mxu0 %v196
      %426 = vmatmul.mubr.f32.gmra.mrb[0].mxu0 %v195
      %v427 = vpop.f32.mrb[0].mxu0
      %v428 = vadd.f32 %v314, %v427
      %v429 = vpop.f32.mrb[0].mxu0
      %430 = vmatprep.mubr.f32.mxu0 %v198
      %431 = vmatmul.mubr.f32.gmra.mrb[0].mxu0 %v197
      %v432 = vpop.f32.mrb[0].mxu0
      %v433 = vadd.f32 %v314, %v432
      %v434 = vpop.f32.mrb[0].mxu0
      %435 = vmatprep.mubr.f32.mxu0 %v200
      %436 = vmatmul.mubr.f32.gmra.mrb[0].mxu0 %v199
      %v437 = vpop.f32.mrb[0].mxu0
      %v438 = vadd.f32 %v314, %v437
      %v439 = vpop.f32.mrb[0].mxu0
      %440 = vmatprep.mubr.f32.mxu0 %v202
      %441 = vmatmul.mubr.f32.gmra.mrb[0].mxu0 %v201
      %v442 = vpop.f32.mrb[0].mxu0
      %v443 = vadd.f32 %v314, %v442
      %v444 = vpop.f32.mrb[0].mxu0
      %445 = vmatprep.mubr.f32.mxu0 %v204
      %446 = vmatmul.mubr.f32.gmra.mrb[0].mxu0 %v203
      %v447 = vpop.f32.mrb[0].mxu0
      %v448 = vadd.f32 %v314, %v447
      %v449 = vpop.f32.mrb[0].mxu0
      %450 = vmatprep.mubr.f32.mxu0 %v206
      %451 = vmatmul.mubr.f32.gmra.mrb[0].mxu0 %v205
      %v452 = vpop.f32.mrb[0].mxu0
      %v453 = vadd.f32 %v314, %v452
      %v454 = vpop.f32.mrb[0].mxu0
      %455 = vmatprep.mubr.f32.mxu0 %v208
      %456 = vmatmul.mubr.f32.gmra.mrb[0].mxu0 %v207
      %v457 = vpop.f32.mrb[0].mxu0
      %v458 = vadd.f32 %v314, %v457
      %v459 = vpop.f32.mrb[0].mxu0
      %460 = vmatprep.mubr.f32.mxu0 %v210
      %461 = vmatmul.mubr.f32.gmra.mrb[0].mxu0 %v209
      %v462 = vpop.f32.mrb[0].mxu0
      %v463 = vadd.f32 %v314, %v462
      %v464 = vpop.f32.mrb[0].mxu0
      %465 = vmatprep.mubr.f32.mxu0 %v212
      %466 = vmatmul.mubr.f32.gmra.mrb[0].mxu0 %v211
      %v467 = vpop.f32.mrb[0].mxu0
      %v468 = vadd.f32 %v314, %v467
      %v469 = vpop.f32.mrb[0].mxu0
      %470 = vmatprep.mubr.f32.mxu0 %v214
      %471 = vmatmul.mubr.f32.gmra.mrb[0].mxu0 %v213
      %v472 = vpop.f32.mrb[0].mxu0
      %v473 = vadd.f32 %v314, %v472
      %v474 = vpop.f32.mrb[0].mxu0
      %475 = vmatprep.mubr.f32.mxu0 %v216
      %476 = vmatmul.mubr.f32.gmra.mrb[0].mxu0 %v215
      %v477 = vpop.f32.mrb[0].mxu0
      %v478 = vadd.f32 %v314, %v477
      %v479 = vpop.f32.mrb[0].mxu0
      %480 = vmatprep.mubr.f32.mxu0 %v218
      %481 = vmatmul.mubr.f32.gmra.mrb[0].mxu0 %v217
      %v482 = vpop.f32.mrb[0].mxu0
      %v483 = vadd.f32 %v314, %v482
      %v484 = vpop.f32.mrb[0].mxu0
      %485 = vmatprep.mubr.f32.mxu0 %v220
      %486 = vmatmul.mubr.f32.gmra.mrb[0].mxu0 %v219
      %v487 = vpop.f32.mrb[0].mxu0
      %v488 = vadd.f32 %v314, %v487
      %v489 = vpop.f32.mrb[0].mxu0
      %490 = vmatprep.mubr.f32.mxu0 %v222
      %491 = vmatmul.mubr.f32.gmra.mrb[0].mxu0 %v221
      %v492 = vpop.f32.mrb[0].mxu0
      %v493 = vadd.f32 %v314, %v492
      %v494 = vpop.f32.mrb[0].mxu0
      %495 = vmatprep.mubr.f32.mxu0 %v224
      %496 = vmatmul.mubr.f32.gmra.mrb[0].mxu0 %v223
      %v497 = vpop.f32.mrb[0].mxu0
      %v498 = vadd.f32 %v314, %v497
      %v499 = vpop.f32.mrb[0].mxu0
      %500 = vmatprep.mubr.f32.mxu0 %v226
      %501 = vmatmul.mubr.f32.gmra.mrb[0].mxu0 %v225
      %v502 = vpop.f32.mrb[0].mxu0
      %v503 = vadd.f32 %v314, %v502
      %v504 = vpop.f32.mrb[0].mxu0
      %505 = vmatprep.mubr.f32.mxu0 %v228
      %506 = vmatmul.mubr.f32.gmra.mrb[0].mxu0 %v227
      %v507 = vpop.f32.mrb[0].mxu0
      %v508 = vadd.f32 %v314, %v507
      %v509 = vpop.f32.mrb[0].mxu0
      %510 = vmatprep.mubr.f32.mxu0 %v230
      %511 = vmatmul.mubr.f32.gmra.mrb[0].mxu0 %v229
      %v512 = vpop.f32.mrb[0].mxu0
      %v513 = vadd.f32 %v314, %v512
      %v514 = vpop.f32.mrb[0].mxu0
      %515 = vmatprep.mubr.f32.mxu0 %v232
      %516 = vmatmul.mubr.f32.gmra.mrb[0].mxu0 %v231
      %v517 = vpop.f32.mrb[0].mxu0
      %v518 = vadd.f32 %v314, %v517
      %v519 = vpop.f32.mrb[0].mxu0
      %520 = vmatprep.mubr.f32.mxu0 %v234
      %521 = vmatmul.mubr.f32.gmra.mrb[0].mxu0 %v233
      %v522 = vpop.f32.mrb[0].mxu0
      %v523 = vadd.f32 %v314, %v522
      %v524 = vpop.f32.mrb[0].mxu0
      %525 = vmatprep.mubr.f32.mxu0 %v236
      %526 = vmatmul.mubr.f32.gmra.mrb[0].mxu0 %v235
      %v527 = vpop.f32.mrb[0].mxu0
      %v528 = vadd.f32 %v314, %v527
      %v529 = vpop.f32.mrb[0].mxu0
      %530 = vmatprep.mubr.f32.mxu0 %v238
      %531 = vmatmul.mubr.f32.gmra.mrb[0].mxu0 %v237
      %v532 = vpop.f32.mrb[0].mxu0
      %v533 = vadd.f32 %v314, %v532
      %v534 = vpop.f32.mrb[0].mxu0
      %535 = vmatprep.mubr.f32.mxu0 %v240
      %536 = vmatmul.mubr.f32.gmra.mrb[0].mxu0 %v239
      %v537 = vpop.f32.mrb[0].mxu0
      %v538 = vadd.f32 %v314, %v537
      %v539 = vpop.f32.mrb[0].mxu0
      %540 = vmatprep.mubr.f32.mxu0 %v242
      %541 = vmatmul.mubr.f32.gmra.mrb[0].mxu0 %v241
      %v542 = vpop.f32.mrb[0].mxu0
      %v543 = vadd.f32 %v314, %v542
      %v544 = vpop.f32.mrb[0].mxu0
      %545 = vmatprep.mubr.f32.mxu0 %v244
      %546 = vmatmul.mubr.f32.gmra.mrb[0].mxu0 %v243
      %v547 = vpop.f32.mrb[0].mxu0
      %v548 = vadd.f32 %v314, %v547
      %v549 = vpop.f32.mrb[0].mxu0
      %550 = vmatprep.mubr.f32.mxu0 %v246
      %551 = vmatmul.mubr.f32.gmra.mrb[0].mxu0 %v245
      %v552 = vpop.f32.mrb[0].mxu0
      %v553 = vadd.f32 %v314, %v552
      %v554 = vpop.f32.mrb[0].mxu0
      %555 = vmatprep.mubr.f32.mxu0 %v248
      %556 = vmatmul.mubr.f32.gmra.mrb[0].mxu0 %v247
      %v557 = vpop.f32.mrb[0].mxu0
      %v558 = vadd.f32 %v314, %v557
      %v559 = vpop.f32.mrb[0].mxu0
      %560 = vmatprep.mubr.f32.mxu0 %v250
      %561 = vmatmul.mubr.f32.gmra.mrb[0].mxu0 %v249
      %v562 = vpop.f32.mrb[0].mxu0
      %v563 = vadd.f32 %v314, %v562
      %v564 = vpop.f32.mrb[0].mxu0
      %565 = vmatprep.mubr.f32.mxu0 %v252
      %566 = vmatmul.mubr.f32.gmra.mrb[0].mxu0 %v251
      %v567 = vpop.f32.mrb[0].mxu0
      %v568 = vadd.f32 %v314, %v567
      %v569 = vpop.f32.mrb[0].mxu0
      %570 = vmatprep.mubr.f32.mxu0 %v254
      %571 = vmatmul.mubr.f32.gmra.mrb[0].mxu0 %v253
      %v572 = vpop.f32.mrb[0].mxu0
      %v573 = vadd.f32 %v314, %v572
      %v574 = vpop.f32.mrb[0].mxu0
      %575 = vmatprep.mubr.f32.mxu0 %v256
      %576 = vmatmul.mubr.f32.gmra.mrb[0].mxu0 %v255
      %v577 = vpop.f32.mrb[0].mxu0
      %v578 = vadd.f32 %v314, %v577
      %v579 = vpop.f32.mrb[0].mxu0
      %580 = vmatprep.mubr.f32.mxu0 %v258
      %581 = vmatmul.mubr.f32.gmra.mrb[0].mxu0 %v257
      %v582 = vpop.f32.mrb[0].mxu0
      %v583 = vadd.f32 %v314, %v582
      %v584 = vpop.f32.mrb[0].mxu0
      %585 = vmatprep.mubr.f32.mxu0 %v260
      %586 = vmatmul.mubr.f32.gmra.mrb[0].mxu0 %v259
      %v587 = vpop.f32.mrb[0].mxu0
      %v588 = vadd.f32 %v314, %v587
      %v589 = vpop.f32.mrb[0].mxu0
      %590 = vmatprep.mubr.f32.mxu0 %v262
      %591 = vmatmul.mubr.f32.gmra.mrb[0].mxu0 %v261
      %v592 = vpop.f32.mrb[0].mxu0
      %v593 = vadd.f32 %v314, %v592
      %v594 = vpop.f32.mrb[0].mxu0
      %595 = vmatprep.mubr.f32.mxu0 %v264
      %596 = vmatmul.mubr.f32.gmra.mrb[0].mxu0 %v263
      %v597 = vpop.f32.mrb[0].mxu0
      %v598 = vadd.f32 %v314, %v597
      %v599 = vpop.f32.mrb[0].mxu0
      %600 = vmatprep.mubr.f32.mxu0 %v266
      %601 = vmatmul.mubr.f32.gmra.mrb[0].mxu0 %v265
      %v602 = vpop.f32.mrb[0].mxu0
      %v603 = vadd.f32 %v314, %v602
      %v604 = vpop.f32.mrb[0].mxu0
      %605 = vmatprep.mubr.f32.mxu0 %v268
      %606 = vmatmul.mubr.f32.gmra.mrb[0].mxu0 %v267
      %v607 = vpop.f32.mrb[0].mxu0
      %v608 = vadd.f32 %v314, %v607
      %v609 = vpop.f32.mrb[0].mxu0
      %610 = vmatprep.mubr.f32.mxu0 %v270
      %611 = vmatmul.mubr.f32.gmra.mrb[0].mxu0 %v269
      %v612 = vpop.f32.mrb[0].mxu0
      %v613 = vadd.f32 %v314, %v612
      %v614 = vpop.f32.mrb[0].mxu0
      %615 = vmatprep.mubr.f32.mxu0 %v272
      %616 = vmatmul.mubr.f32.gmra.mrb[0].mxu0 %v271
      %v617 = vpop.f32.mrb[0].mxu0
      %v618 = vadd.f32 %v314, %v617
      %v619 = vpop.f32.mrb[0].mxu0
      %620 = vmatprep.mubr.f32.mxu0 %v274
      %621 = vmatmul.mubr.f32.gmra.mrb[0].mxu0 %v273
      %v622 = vpop.f32.mrb[0].mxu0
      %v623 = vadd.f32 %v314, %v622
      %v624 = vpop.f32.mrb[0].mxu0
      %625 = vmatprep.mubr.f32.mxu0 %v276
      %626 = vmatmul.mubr.f32.gmra.mrb[0].mxu0 %v275
      %v627 = vpop.f32.mrb[0].mxu0
      %v628 = vadd.f32 %v314, %v627
      %v629 = vpop.f32.mrb[0].mxu0
      %630 = vdwg.mxu0
      %v631 = vmax.f32 %v383, 0.0
      %v632 = vmax.f32 %v388, 0.0
      %v633 = vmax.f32 %v393, 0.0
      %v634 = vmax.f32 %v398, 0.0
      %v635 = vmax.f32 %v403, 0.0
      %v636 = vmax.f32 %v408, 0.0
      %v637 = vmax.f32 %v413, 0.0
      %v638 = vmax.f32 %v418, 0.0
      %v639 = vmax.f32 %v423, 0.0
      %v640 = vmax.f32 %v428, 0.0
      %v641 = vmax.f32 %v433, 0.0
      %v642 = vmax.f32 %v438, 0.0
      %v643 = vmax.f32 %v443, 0.0
      %v644 = vmax.f32 %v448, 0.0
      %v645 = vmax.f32 %v453, 0.0
      %v646 = vmax.f32 %v458, 0.0
      %v647 = vmax.f32 %v463, 0.0
      %v648 = vmax.f32 %v468, 0.0
      %v649 = vmax.f32 %v473, 0.0
      %v650 = vmax.f32 %v478, 0.0
      %v651 = vmax.f32 %v483, 0.0
      %v652 = vmax.f32 %v488, 0.0
      %v653 = vmax.f32 %v493, 0.0
      %v654 = vmax.f32 %v498, 0.0
      %v655 = vmax.f32 %v503, 0.0
      %v656 = vmax.f32 %v508, 0.0
      %v657 = vmax.f32 %v513, 0.0
      %v658 = vmax.f32 %v518, 0.0
      %v659 = vmax.f32 %v523, 0.0
      %v660 = vmax.f32 %v528, 0.0
      %v661 = vmax.f32 %v533, 0.0
      %v662 = vmax.f32 %v538, 0.0
      %v663 = vmax.f32 %v543, 0.0
      %v664 = vmax.f32 %v548, 0.0
      %v665 = vmax.f32 %v553, 0.0
      %v666 = vmax.f32 %v558, 0.0
      %v667 = vmax.f32 %v563, 0.0
      %v668 = vmax.f32 %v568, 0.0
      %v669 = vmax.f32 %v573, 0.0
      %v670 = vmax.f32 %v578, 0.0
      %v671 = vmax.f32 %v583, 0.0
      %v672 = vmax.f32 %v588, 0.0
      %v673 = vmax.f32 %v593, 0.0
      %v674 = vmax.f32 %v598, 0.0
      %v675 = vmax.f32 %v603, 0.0
      %v676 = vmax.f32 %v608, 0.0
      %v677 = vmax.f32 %v613, 0.0
      %v678 = vmax.f32 %v618, 0.0
      %v679 = vmax.f32 %v623, 0.0
      %v680 = vmax.f32 %v628, 0.0
      %vm681 = vcmask 261120
      %682 = vst.msk [vmem:[%s175] sm:$0xff] %vm681, %v631
      %683 = vst.msk [vmem:[%s175 + $0x8] sm:$0xff] %vm681, %v632
      %684 = vst.msk [vmem:[%s175 + $0x10] sm:$0xff] %vm681, %v633
      %685 = vst.msk [vmem:[%s175 + $0x18] sm:$0xff] %vm681, %v634
      %686 = vst.msk [vmem:[%s175 + $0x20] sm:$0xff] %vm681, %v635
      %687 = vst.msk [vmem:[%s175 + $0x28] sm:$0xff] %vm681, %v636
      %688 = vst.msk [vmem:[%s175 + $0x30] sm:$0xff] %vm681, %v637
      %689 = vst.msk [vmem:[%s175 + $0x38] sm:$0xff] %vm681, %v638
      %690 = vst.msk [vmem:[%s175 + $0x40] sm:$0xff] %vm681, %v639
      %691 = vst.msk [vmem:[%s175 + $0x48] sm:$0xff] %vm681, %v640
      %692 = vst.msk [vmem:[%s175 + $0x50] sm:$0xff] %vm681, %v641
      %693 = vst.msk [vmem:[%s175 + $0x58] sm:$0xff] %vm681, %v642
      %694 = vst.msk [vmem:[%s175 + $0x60] sm:$0xff] %vm681, %v643
      %695 = vst.msk [vmem:[%s175 + $0x68] sm:$0xff] %vm681, %v644
      %696 = vst.msk [vmem:[%s175 + $0x70] sm:$0xff] %vm681, %v645
      %697 = vst.msk [vmem:[%s175 + $0x78] sm:$0xff] %vm681, %v646
      %698 = vst.msk [vmem:[%s175 + $0x80] sm:$0xff] %vm681, %v647
      %699 = vst.msk [vmem:[%s175 + $0x88] sm:$0xff] %vm681, %v648
      %700 = vst.msk [vmem:[%s175 + $0x90] sm:$0xff] %vm681, %v649
      %701 = vst.msk [vmem:[%s175 + $0x98] sm:$0xff] %vm681, %v650
      %702 = vst.msk [vmem:[%s175 + $0xa0] sm:$0xff] %vm681, %v651
      %703 = vst.msk [vmem:[%s175 + $0xa8] sm:$0xff] %vm681, %v652
      %704 = vst.msk [vmem:[%s175 + $0xb0] sm:$0xff] %vm681, %v653
      %705 = vst.msk [vmem:[%s175 + $0xb8] sm:$0xff] %vm681, %v654
      %706 = vst.msk [vmem:[%s175 + $0xc0] sm:$0xff] %vm681, %v655
      %707 = vst.msk [vmem:[%s175 + $0xc8] sm:$0xff] %vm681, %v656
      %708 = vst.msk [vmem:[%s175 + $0xd0] sm:$0xff] %vm681, %v657
      %709 = vst.msk [vmem:[%s175 + $0xd8] sm:$0xff] %vm681, %v658
      %710 = vst.msk [vmem:[%s175 + $0xe0] sm:$0xff] %vm681, %v659
      %711 = vst.msk [vmem:[%s175 + $0xe8] sm:$0xff] %vm681, %v660
      %712 = vst.msk [vmem:[%s175 + $0xf0] sm:$0xff] %vm681, %v661
      %713 = vst.msk [vmem:[%s175 + $0xf8] sm:$0xff] %vm681, %v662
      %714 = vst.msk [vmem:[%s175 + $0x100] sm:$0xff] %vm681, %v663
      %715 = vst.msk [vmem:[%s175 + $0x108] sm:$0xff] %vm681, %v664
      %716 = vst.msk [vmem:[%s175 + $0x110] sm:$0xff] %vm681, %v665
      %717 = vst.msk [vmem:[%s175 + $0x118] sm:$0xff] %vm681, %v666
      %718 = vst.msk [vmem:[%s175 + $0x120] sm:$0xff] %vm681, %v667
      %719 = vst.msk [vmem:[%s175 + $0x128] sm:$0xff] %vm681, %v668
      %720 = vst.msk [vmem:[%s175 + $0x130] sm:$0xff] %vm681, %v669
      %721 = vst.msk [vmem:[%s175 + $0x138] sm:$0xff] %vm681, %v670
      %722 = vst.msk [vmem:[%s175 + $0x140] sm:$0xff] %vm681, %v671
      %723 = vst.msk [vmem:[%s175 + $0x148] sm:$0xff] %vm681, %v672
      %724 = vst.msk [vmem:[%s175 + $0x150] sm:$0xff] %vm681, %v673
      %725 = vst.msk [vmem:[%s175 + $0x158] sm:$0xff] %vm681, %v674
      %726 = vst.msk [vmem:[%s175 + $0x160] sm:$0xff] %vm681, %v675
      %727 = vst.msk [vmem:[%s175 + $0x168] sm:$0xff] %vm681, %v676
      %728 = vst.msk [vmem:[%s175 + $0x170] sm:$0xff] %vm681, %v677
      %729 = vst.msk [vmem:[%s175 + $0x178] sm:$0xff] %vm681, %v678
      %730 = vst.msk [vmem:[%s175 + $0x180] sm:$0xff] %vm681, %v679
      %731 = vst.msk [vmem:[%s175 + $0x188] sm:$0xff] %vm681, %v680
      %s732 = smul.u32 50, %s14
      %p733 = scmp.lt.s32.totalorder %s732, 99
      %s734 = scalar_select %p733, %s732, 99
      %s735 = smul.addr %s734, 8
      %s736 = scalar_lea.vmem %s3, %s735
      // Predicated region
      $region33: #{qnetwork_forward.3} parent=31 // pred_check
        %p737 = pneg %p100
      $region34: #{qnetwork_forward.3} parent=31 // pred_check_branch
        %739 = sbr.rel (%p737) target = $region36
      $region35: #{qnetwork_forward.3} parent=31 // pred_region
        %s740 = smul.u32 50, %s14
      $region36: #{qnetwork_forward.3} parent=31 // pred_fallthru
        _
    $region32: #{qnetwork_forward.3} parent=5 // pred_fallthru
      _
    %p741 = scmp.le.s32.totalorder 2, %s9
    // Predicated region
    $region37: #{qnetwork_forward.3} parent=5 // pred_check
      %p742 = pneg %p741
    $region38: #{qnetwork_forward.3} parent=5 // pred_check_branch
      %744 = sbr.rel (%p742) target = $region40
    $region39: #{qnetwork_forward.3} parent=5 // pred_region
      %s745 = ssub.s32 %s9, 2
      // Predicated region
      $region41: #{qnetwork_forward.3} parent=39 // pred_check
        %p746 = pneg %p106
      $region42: #{qnetwork_forward.3} parent=39 // pred_check_branch
        %748 = sbr.rel (%p746) target = $region44
      $region43: #{qnetwork_forward.3} parent=39 // pred_region
        %s749 = smul.u32 50, %s15
        %p750 = scmp.lt.s32.totalorder %s749, 99
        %s751 = scalar_select %p750, %s749, 99
        %s752 = smul.addr %s751, 8
        %s753 = scalar_lea.vmem %s3, %s752
      $region44: #{qnetwork_forward.3} parent=39 // pred_fallthru
        _
    $region40: #{qnetwork_forward.3} parent=5 // pred_fallthru
      _
  $region6: #{qnetwork_forward.3} parent=0 // loop_footer
    %s13 = sadd.s32 1, %s9
  $region7: #{qnetwork_forward.3} parent=0 // loop_footer_branch
    %8 = sbr.rel target = $region3
  $region8: #{qnetwork_forward.3} parent=0 // loop_exit
    _

// kernel: qnetwork_forward.4
$region0: #{qnetwork_forward.4}
  #allocation0 [shape = 'u32[]', space=smem, size = 0x4, offset = 0x4, fixed_abs, tag = 'smem constant byte address 0x4 - core index']
  #allocation1 [shape = 'u32[144,128]{1,0:T(1,128)}', space=vmem, size = 0x12000, scoped, tag = 'internal scratch']
  %s0 = inlined_call_operand.vmem [shape: f32[162,512], index: 0, kind: input, shape index: {}]
  %s1 = inlined_call_operand.vmem [shape: f32[512,64], index: 1, kind: input, shape index: {}]
  %s2 = inlined_call_operand.vmem [shape: f32[1,64], index: 2, kind: input, shape index: {}]
  %s3 = inlined_call_operand.vmem [shape: f32[162,64], index: 3, kind: output, shape index: {}]
  %s4 = sld [smem:[#allocation0]]
  $region22: #{qnetwork_forward.4} parent=0
    _
  %s6 = ssub.s32 1, %s4
  %s7 = scalar_select 0, %s6, %s4
  // Predicated region
  $region2: #{qnetwork_forward.4} parent=0 // pred_check
    _
  $region3: #{qnetwork_forward.4} parent=0 // pred_check_branch
    %9 = sbr.rel (0) target = $region5
  $region4: #{qnetwork_forward.4} parent=0 // pred_region
    _
  $region5: #{qnetwork_forward.4} parent=0 // pred_fallthru
    _
  // Predicated region
  $region6: #{qnetwork_forward.4} parent=0 // pred_check
    _
  $region7: #{qnetwork_forward.4} parent=0 // pred_check_branch
    %11 = sbr.rel (0) target = $region9
  $region8: #{qnetwork_forward.4} parent=0 // pred_region
    _
  $region9: #{qnetwork_forward.4} parent=0 // pred_fallthru
    _
  // Predicated region
  $region10: #{qnetwork_forward.4} parent=0 // pred_check
    _
  $region11: #{qnetwork_forward.4} parent=0 // pred_check_branch
    %13 = sbr.rel (0) target = $region13
  $region12: #{qnetwork_forward.4} parent=0 // pred_region
    _
  $region13: #{qnetwork_forward.4} parent=0 // pred_fallthru
    _
  %v14 = vld [vmem:[%s0] sm:$0xff]
  %v15 = vld [vmem:[%s0 + $0x8] sm:$0xff]
  %v16 = vld [vmem:[%s0 + $0x10] sm:$0xff]
  %v17 = vld [vmem:[%s0 + $0x18] sm:$0xff]
  %v18 = vld [vmem:[%s0 + $0x20] sm:$0xff]
  %v19 = vld [vmem:[%s0 + $0x28] sm:$0xff]
  %v20 = vld [vmem:[%s0 + $0x30] sm:$0xff]
  %v21 = vld [vmem:[%s0 + $0x38] sm:$0xff]
  %v22 = vld [vmem:[%s0 + $0x40] sm:$0xff]
  %v23 = vld [vmem:[%s0 + $0x48] sm:$0xff]
  %v24 = vld [vmem:[%s0 + $0x50] sm:$0xff]
  %v25 = vld [vmem:[%s0 + $0x58] sm:$0xff]
  %v26 = vld [vmem:[%s0 + $0x60] sm:$0xff]
  %v27 = vld [vmem:[%s0 + $0x68] sm:$0xff]
  %v28 = vld [vmem:[%s0 + $0x70] sm:$0xff]
  %v29 = vld [vmem:[%s0 + $0x78] sm:$0xff]
  %v30 = vld [vmem:[%s0 + $0x80] sm:$0xff]
  %v31 = vld [vmem:[%s0 + $0x88] sm:$0xff]
  %v32 = vld [vmem:[%s0 + $0x90] sm:$0xff]
  %v33 = vld [vmem:[%s0 + $0x98] sm:$0xff]
  %v34 = vld [vmem:[%s0 + $0xa0] sm:$0xff]
  %v35 = vld [vmem:[%s0 + $0xa8] sm:$0xff]
  %v36 = vld [vmem:[%s0 + $0xb0] sm:$0xff]
  %v37 = vld [vmem:[%s0 + $0xb8] sm:$0xff]
  %v38 = vld [vmem:[%s0 + $0xc0] sm:$0xff]
  %v39 = vld [vmem:[%s0 + $0xc8] sm:$0xff]
  %v40 = vld [vmem:[%s0 + $0xd0] sm:$0xff]
  %v41 = vld [vmem:[%s0 + $0xd8] sm:$0xff]
  %v42 = vld [vmem:[%s0 + $0xe0] sm:$0xff]
  %v43 = vld [vmem:[%s0 + $0xe8] sm:$0xff]
  %v44 = vld [vmem:[%s0 + $0xf0] sm:$0xff]
  %v45 = vld [vmem:[%s0 + $0xf8] sm:$0xff]
  %v46 = vld [vmem:[%s0 + $0x100] sm:$0xff]
  %v47 = vld [vmem:[%s0 + $0x108] sm:$0xff]
  %v48 = vld [vmem:[%s0 + $0x110] sm:$0xff]
  %v49 = vld [vmem:[%s0 + $0x118] sm:$0xff]
  %v50 = vld [vmem:[%s0 + $0x120] sm:$0xff]
  %v51 = vld [vmem:[%s0 + $0x128] sm:$0xff]
  %v52 = vld [vmem:[%s0 + $0x130] sm:$0xff]
  %v53 = vld [vmem:[%s0 + $0x138] sm:$0xff]
  %v54 = vld [vmem:[%s0 + $0x140] sm:$0xff]
  %v55 = vld [vmem:[%s0 + $0x148] sm:$0xff]
  %v56 = vld [vmem:[%s0 + $0x150] sm:$0xff]
  %v57 = vld [vmem:[%s0 + $0x158] sm:$0xff]
  %v58 = vld [vmem:[%s0 + $0x160] sm:$0xff]
  %v59 = vld [vmem:[%s0 + $0x168] sm:$0xff]
  %v60 = vld [vmem:[%s0 + $0x170] sm:$0xff]
  %v61 = vld [vmem:[%s0 + $0x178] sm:$0xff]
  %v62 = vld [vmem:[%s0 + $0x180] sm:$0xff]
  %v63 = vld [vmem:[%s0 + $0x188] sm:$0xff]
  %v64 = vld [vmem:[%s0 + $0x190] sm:$0xff]
  %v65 = vld [vmem:[%s0 + $0x198] sm:$0xff]
  %v66 = vld [vmem:[%s0 + $0x1a0] sm:$0xff]
  %v67 = vld [vmem:[%s0 + $0x1a8] sm:$0xff]
  %v68 = vld [vmem:[%s0 + $0x1b0] sm:$0xff]
  %v69 = vld [vmem:[%s0 + $0x1b8] sm:$0xff]
  %v70 = vld [vmem:[%s0 + $0x1c0] sm:$0xff]
  %v71 = vld [vmem:[%s0 + $0x1c8] sm:$0xff]
  %v72 = vld [vmem:[%s0 + $0x1d0] sm:$0xff]
  %v73 = vld [vmem:[%s0 + $0x1d8] sm:$0xff]
  %v74 = vld [vmem:[%s0 + $0x1e0] sm:$0xff]
  %v75 = vld [vmem:[%s0 + $0x1e8] sm:$0xff]
  %v76 = vld [vmem:[%s0 + $0x1f0] sm:$0xff]
  %v77 = vld [vmem:[%s0 + $0x1f8] sm:$0xff]
  %v78 = vld [vmem:[%s0 + $0x200] sm:$0xff]
  %v79 = vld [vmem:[%s0 + $0x208] sm:$0xff]
  %v80 = vld [vmem:[%s0 + $0x210] sm:$0xff]
  %v81 = vld [vmem:[%s0 + $0x218] sm:$0xff]
  %v82 = vld [vmem:[%s0 + $0x220] sm:$0xff]
  %v83 = vld [vmem:[%s0 + $0x228] sm:$0xff]
  %v84 = vld [vmem:[%s0 + $0x230] sm:$0xff]
  %v85 = vld [vmem:[%s0 + $0x238] sm:$0xff]
  %v86 = vld [vmem:[%s0 + $0x240] sm:$0xff]
  %v87 = vld [vmem:[%s0 + $0x248] sm:$0xff]
  %v88 = vld [vmem:[%s0 + $0x250] sm:$0xff]
  %v89 = vld [vmem:[%s0 + $0x258] sm:$0xff]
  %v90 = vld [vmem:[%s0 + $0x260] sm:$0xff]
  %v91 = vld [vmem:[%s0 + $0x268] sm:$0xff]
  %v92 = vld [vmem:[%s0 + $0x270] sm:$0xff]
  %v93 = vld [vmem:[%s0 + $0x278] sm:$0xff]
  %v94 = vld [vmem:[%s0 + $0x280] sm:$0x3]
  %v95 = vld [vmem:[%s0 + $0x288] sm:$0x3]
  %v96 = vld [vmem:[%s0 + $0x290] sm:$0x3]
  %v97 = vld [vmem:[%s0 + $0x298] sm:$0x3]
  %v98 = vld [vmem:[%s1] sm:$0xff]
  %v99 = vld [vmem:[%s1 + $0x8] sm:$0xff]
  %v100 = vld [vmem:[%s1 + $0x10] sm:$0xff]
  %v101 = vld [vmem:[%s1 + $0x18] sm:$0xff]
  %v102 = vld [vmem:[%s1 + $0x20] sm:$0xff]
  %v103 = vld [vmem:[%s1 + $0x28] sm:$0xff]
  %v104 = vld [vmem:[%s1 + $0x30] sm:$0xff]
  %v105 = vld [vmem:[%s1 + $0x38] sm:$0xff]
  %v106 = vld [vmem:[%s1 + $0x40] sm:$0xff]
  %v107 = vld [vmem:[%s1 + $0x48] sm:$0xff]
  %v108 = vld [vmem:[%s1 + $0x50] sm:$0xff]
  %v109 = vld [vmem:[%s1 + $0x58] sm:$0xff]
  %v110 = vld [vmem:[%s1 + $0x60] sm:$0xff]
  %v111 = vld [vmem:[%s1 + $0x68] sm:$0xff]
  %v112 = vld [vmem:[%s1 + $0x70] sm:$0xff]
  %v113 = vld [vmem:[%s1 + $0x78] sm:$0xff]
  %v114 = vld [vmem:[%s1 + $0x80] sm:$0xff]
  %v115 = vld [vmem:[%s1 + $0x88] sm:$0xff]
  %v116 = vld [vmem:[%s1 + $0x90] sm:$0xff]
  %v117 = vld [vmem:[%s1 + $0x98] sm:$0xff]
  %v118 = vld [vmem:[%s1 + $0xa0] sm:$0xff]
  %v119 = vld [vmem:[%s1 + $0xa8] sm:$0xff]
  %v120 = vld [vmem:[%s1 + $0xb0] sm:$0xff]
  %v121 = vld [vmem:[%s1 + $0xb8] sm:$0xff]
  %v122 = vld [vmem:[%s1 + $0xc0] sm:$0xff]
  %v123 = vld [vmem:[%s1 + $0xc8] sm:$0xff]
  %v124 = vld [vmem:[%s1 + $0xd0] sm:$0xff]
  %v125 = vld [vmem:[%s1 + $0xd8] sm:$0xff]
  %v126 = vld [vmem:[%s1 + $0xe0] sm:$0xff]
  %v127 = vld [vmem:[%s1 + $0xe8] sm:$0xff]
  %v128 = vld [vmem:[%s1 + $0xf0] sm:$0xff]
  %v129 = vld [vmem:[%s1 + $0xf8] sm:$0xff]
  %v130 = vld [vmem:[%s1 + $0x100] sm:$0xff]
  %v131 = vld [vmem:[%s1 + $0x108] sm:$0xff]
  %v132 = vld [vmem:[%s1 + $0x110] sm:$0xff]
  %v133 = vld [vmem:[%s1 + $0x118] sm:$0xff]
  %v134 = vld [vmem:[%s1 + $0x120] sm:$0xff]
  %v135 = vld [vmem:[%s1 + $0x128] sm:$0xff]
  %v136 = vld [vmem:[%s1 + $0x130] sm:$0xff]
  %v137 = vld [vmem:[%s1 + $0x138] sm:$0xff]
  %v138 = vld [vmem:[%s1 + $0x140] sm:$0xff]
  %v139 = vld [vmem:[%s1 + $0x148] sm:$0xff]
  %v140 = vld [vmem:[%s1 + $0x150] sm:$0xff]
  %v141 = vld [vmem:[%s1 + $0x158] sm:$0xff]
  %v142 = vld [vmem:[%s1 + $0x160] sm:$0xff]
  %v143 = vld [vmem:[%s1 + $0x168] sm:$0xff]
  %v144 = vld [vmem:[%s1 + $0x170] sm:$0xff]
  %v145 = vld [vmem:[%s1 + $0x178] sm:$0xff]
  %v146 = vld [vmem:[%s1 + $0x180] sm:$0xff]
  %v147 = vld [vmem:[%s1 + $0x188] sm:$0xff]
  %v148 = vld [vmem:[%s1 + $0x190] sm:$0xff]
  %v149 = vld [vmem:[%s1 + $0x198] sm:$0xff]
  %v150 = vld [vmem:[%s1 + $0x1a0] sm:$0xff]
  %v151 = vld [vmem:[%s1 + $0x1a8] sm:$0xff]
  %v152 = vld [vmem:[%s1 + $0x1b0] sm:$0xff]
  %v153 = vld [vmem:[%s1 + $0x1b8] sm:$0xff]
  %v154 = vld [vmem:[%s1 + $0x1c0] sm:$0xff]
  %v155 = vld [vmem:[%s1 + $0x1c8] sm:$0xff]
  %v156 = vld [vmem:[%s1 + $0x1d0] sm:$0xff]
  %v157 = vld [vmem:[%s1 + $0x1d8] sm:$0xff]
  %v158 = vld [vmem:[%s1 + $0x1e0] sm:$0xff]
  %v159 = vld [vmem:[%s1 + $0x1e8] sm:$0xff]
  %v160 = vld [vmem:[%s1 + $0x1f0] sm:$0xff]
  %v161 = vld [vmem:[%s1 + $0x1f8] sm:$0xff]
  %v162 = vld [vmem:[%s2] sm:$0x1]
  %v164 = vlaneseq
  %v165 = vshrl.u32 %v164, 7
  %v166 = vsub.s32 0, %v165
  %v167 = vrot.slane %v162, %v166
  %169 = vmatprep.subr.mxu0 0.0
  %170 = vmatpush1.msra.mxu0 %v98
  %171 = vmatprep.subr.mxu0 0.0
  %172 = vmatpush1.msra.mxu0 %v99
  %173 = vmatprep.subr.mxu0 0.0
  %174 = vmatpush1.msra.mxu0 %v100
  %175 = vmatprep.subr.mxu0 0.0
  %176 = vmatpush1.msra.mxu0 %v101
  %177 = vmatprep.subr.mxu0 0.0
  %178 = vmatpush1.msra.mxu0 %v102
  %179 = vmatprep.subr.mxu0 0.0
  %180 = vmatpush1.msra.mxu0 %v103
  %181 = vmatprep.subr.mxu0 0.0
  %182 = vmatpush1.msra.mxu0 %v104
  %183 = vmatprep.subr.mxu0 0.0
  %184 = vmatpush1.msra.mxu0 %v105
  %185 = vmatprep.subr.mxu0 0.0
  %186 = vmatpush1.msra.mxu0 %v106
  %187 = vmatprep.subr.mxu0 0.0
  %188 = vmatpush1.msra.mxu0 %v107
  %189 = vmatprep.subr.mxu0 0.0
  %190 = vmatpush1.msra.mxu0 %v108
  %191 = vmatprep.subr.mxu0 0.0
  %192 = vmatpush1.msra.mxu0 %v109
  %193 = vmatprep.subr.mxu0 0.0
  %194 = vmatpush1.msra.mxu0 %v110
  %195 = vmatprep.subr.mxu0 0.0
  %196 = vmatpush1.msra.mxu0 %v111
  %197 = vmatprep.subr.mxu0 0.0
  %198 = vmatpush1.msra.mxu0 %v112
  %199 = vmatprep.subr.mxu0 0.0
  %200 = vmatpush1.msra.mxu0 %v113
  %201 = vmatprep.subr.mxu0 0.0
  %202 = vmatpush1.msra.mxu0 %v114
  %203 = vmatprep.subr.mxu0 0.0
  %204 = vmatpush1.msra.mxu0 %v115
  %205 = vmatprep.subr.mxu0 0.0
  %206 = vmatpush1.msra.mxu0 %v116
  %207 = vmatprep.subr.mxu0 0.0
  %208 = vmatpush1.msra.mxu0 %v117
  %209 = vmatprep.subr.mxu0 0.0
  %210 = vmatpush1.msra.mxu0 %v118
  %211 = vmatprep.subr.mxu0 0.0
  %212 = vmatpush1.msra.mxu0 %v119
  %213 = vmatprep.subr.mxu0 0.0
  %214 = vmatpush1.msra.mxu0 %v120
  %215 = vmatprep.subr.mxu0 0.0
  %216 = vmatpush1.msra.mxu0 %v121
  %217 = vmatprep.subr.mxu0 0.0
  %218 = vmatpush1.msra.mxu0 %v122
  %219 = vmatprep.subr.mxu0 0.0
  %220 = vmatpush1.msra.mxu0 %v123
  %221 = vmatprep.subr.mxu0 0.0
  %222 = vmatpush1.msra.mxu0 %v124
  %223 = vmatprep.subr.mxu0 0.0
  %224 = vmatpush1.msra.mxu0 %v125
  %225 = vmatprep.subr.mxu0 0.0
  %226 = vmatpush1.msra.mxu0 %v126
  %227 = vmatprep.subr.mxu0 0.0
  %228 = vmatpush1.msra.mxu0 %v127
  %229 = vmatprep.subr.mxu0 0.0
  %230 = vmatpush1.msra.mxu0 %v128
  %231 = vmatprep.subr.mxu0 0.0
  %232 = vmatpush1.msra.mxu0 %v129
  %233 = vmatprep.mubr.f32.mxu0 %v15
  %234 = vmatmul.mubr.f32.gmra.mrb[0].mxu0 %v14
  %v235 = vpop.f32.mrb[0].mxu0
  %v236 = vadd.f32 %v167, %v235
  %v237 = vpop.f32.mrb[0].mxu0
  %238 = vmatprep.mubr.f32.mxu0 %v19
  %239 = vmatmul.mubr.f32.gmra.mrb[0].mxu0 %v18
  %v240 = vpop.f32.mrb[0].mxu0
  %v241 = vadd.f32 %v167, %v240
  %v242 = vpop.f32.mrb[0].mxu0
  %243 = vmatprep.mubr.f32.mxu0 %v23
  %244 = vmatmul.mubr.f32.gmra.mrb[0].mxu0 %v22
  %v245 = vpop.f32.mrb[0].mxu0
  %v246 = vadd.f32 %v167, %v245
  %v247 = vpop.f32.mrb[0].mxu0
  %248 = vmatprep.mubr.f32.mxu0 %v27
  %249 = vmatmul.mubr.f32.gmra.mrb[0].mxu0 %v26
  %v250 = vpop.f32.mrb[0].mxu0
  %v251 = vadd.f32 %v167, %v250
  %v252 = vpop.f32.mrb[0].mxu0
  %253 = vmatprep.mubr.f32.mxu0 %v31
  %254 = vmatmul.mubr.f32.gmra.mrb[0].mxu0 %v30
  %v255 = vpop.f32.mrb[0].mxu0
  %v256 = vadd.f32 %v167, %v255
  %v257 = vpop.f32.mrb[0].mxu0
  %258 = vmatprep.mubr.f32.mxu0 %v35
  %259 = vmatmul.mubr.f32.gmra.mrb[0].mxu0 %v34
  %v260 = vpop.f32.mrb[0].mxu0
  %v261 = vadd.f32 %v167, %v260
  %v262 = vpop.f32.mrb[0].mxu0
  %263 = vmatprep.mubr.f32.mxu0 %v39
  %264 = vmatmul.mubr.f32.gmra.mrb[0].mxu0 %v38
  %v265 = vpop.f32.mrb[0].mxu0
  %v266 = vadd.f32 %v167, %v265
  %v267 = vpop.f32.mrb[0].mxu0
  %268 = vmatprep.mubr.f32.mxu0 %v43
  %269 = vmatmul.mubr.f32.gmra.mrb[0].mxu0 %v42
  %v270 = vpop.f32.mrb[0].mxu0
  %v271 = vadd.f32 %v167, %v270
  %v272 = vpop.f32.mrb[0].mxu0
  %273 = vmatprep.mubr.f32.mxu0 %v47
  %274 = vmatmul.mubr.f32.gmra.mrb[0].mxu0 %v46
  %v275 = vpop.f32.mrb[0].mxu0
  %v276 = vadd.f32 %v167, %v275
  %v277 = vpop.f32.mrb[0].mxu0
  %278 = vmatprep.mubr.f32.mxu0 %v51
  %279 = vmatmul.mubr.f32.gmra.mrb[0].mxu0 %v50
  %v280 = vpop.f32.mrb[0].mxu0
  %v281 = vadd.f32 %v167, %v280
  %v282 = vpop.f32.mrb[0].mxu0
  %283 = vmatprep.mubr.f32.mxu0 %v55
  %284 = vmatmul.mubr.f32.gmra.mrb[0].mxu0 %v54
  %v285 = vpop.f32.mrb[0].mxu0
  %v286 = vadd.f32 %v167, %v285
  %v287 = vpop.f32.mrb[0].mxu0
  %288 = vmatprep.mubr.f32.mxu0 %v59
  %289 = vmatmul.mubr.f32.gmra.mrb[0].mxu0 %v58
  %v290 = vpop.f32.mrb[0].mxu0
  %v291 = vadd.f32 %v167, %v290
  %v292 = vpop.f32.mrb[0].mxu0
  %293 = vmatprep.mubr.f32.mxu0 %v63
  %294 = vmatmul.mubr.f32.gmra.mrb[0].mxu0 %v62
  %v295 = vpop.f32.mrb[0].mxu0
  %v296 = vadd.f32 %v167, %v295
  %v297 = vpop.f32.mrb[0].mxu0
  %298 = vmatprep.mubr.f32.mxu0 %v67
  %299 = vmatmul.mubr.f32.gmra.mrb[0].mxu0 %v66
  %v300 = vpop.f32.mrb[0].mxu0
  %v301 = vadd.f32 %v167, %v300
  %v302 = vpop.f32.mrb[0].mxu0
  %303 = vmatprep.mubr.f32.mxu0 %v71
  %304 = vmatmul.mubr.f32.gmra.mrb[0].mxu0 %v70
  %v305 = vpop.f32.mrb[0].mxu0
  %v306 = vadd.f32 %v167, %v305
  %v307 = vpop.f32.mrb[0].mxu0
  %308 = vmatprep.mubr.f32.mxu0 %v75
  %309 = vmatmul.mubr.f32.gmra.mrb[0].mxu0 %v74
  %v310 = vpop.f32.mrb[0].mxu0
  %v311 = vadd.f32 %v167, %v310
  %v312 = vpop.f32.mrb[0].mxu0
  %313 = vmatprep.mubr.f32.mxu0 %v79
  %314 = vmatmul.mubr.f32.gmra.mrb[0].mxu0 %v78
  %v315 = vpop.f32.mrb[0].mxu0
  %v316 = vadd.f32 %v167, %v315
  %v317 = vpop.f32.mrb[0].mxu0
  %318 = vmatprep.mubr.f32.mxu0 %v83
  %319 = vmatmul.mubr.f32.gmra.mrb[0].mxu0 %v82
  %v320 = vpop.f32.mrb[0].mxu0
  %v321 = vadd.f32 %v167, %v320
  %v322 = vpop.f32.mrb[0].mxu0
  %323 = vmatprep.mubr.f32.mxu0 %v87
  %324 = vmatmul.mubr.f32.gmra.mrb[0].mxu0 %v86
  %v325 = vpop.f32.mrb[0].mxu0
  %v326 = vadd.f32 %v167, %v325
  %v327 = vpop.f32.mrb[0].mxu0
  %328 = vmatprep.mubr.f32.mxu0 %v91
  %329 = vmatmul.mubr.f32.gmra.mrb[0].mxu0 %v90
  %v330 = vpop.f32.mrb[0].mxu0
  %v331 = vadd.f32 %v167, %v330
  %v332 = vpop.f32.mrb[0].mxu0
  %333 = vmatprep.mubr.f32.mxu0 %v95
  %334 = vmatmul.mubr.f32.gmra.mrb[0].mxu0 %v94
  %v335 = vpop.f32.mrb[0].mxu0
  %v336 = vadd.f32 %v167, %v335
  %v337 = vpop.f32.mrb[0].mxu0
  %338 = vdwg.mxu0
  %339 = vmatprep.subr.mxu0 0.0
  %340 = vmatpush1.msra.mxu0 %v130
  %341 = vmatprep.subr.mxu0 0.0
  %342 = vmatpush1.msra.mxu0 %v131
  %343 = vmatprep.subr.mxu0 0.0
  %344 = vmatpush1.msra.mxu0 %v132
  %345 = vmatprep.subr.mxu0 0.0
  %346 = vmatpush1.msra.mxu0 %v133
  %347 = vmatprep.subr.mxu0 0.0
  %348 = vmatpush1.msra.mxu0 %v134
  %349 = vmatprep.subr.mxu0 0.0
  %350 = vmatpush1.msra.mxu0 %v135
  %351 = vmatprep.subr.mxu0 0.0
  %352 = vmatpush1.msra.mxu0 %v136
  %353 = vmatprep.subr.mxu0 0.0
  %354 = vmatpush1.msra.mxu0 %v137
  %355 = vmatprep.subr.mxu0 0.0
  %356 = vmatpush1.msra.mxu0 %v138
  %357 = vmatprep.subr.mxu0 0.0
  %358 = vmatpush1.msra.mxu0 %v139
  %359 = vmatprep.subr.mxu0 0.0
  %360 = vmatpush1.msra.mxu0 %v140
  %361 = vmatprep.subr.mxu0 0.0
  %362 = vmatpush1.msra.mxu0 %v141
  %363 = vmatprep.subr.mxu0 0.0
  %364 = vmatpush1.msra.mxu0 %v142
  %365 = vmatprep.subr.mxu0 0.0
  %366 = vmatpush1.msra.mxu0 %v143
  %367 = vmatprep.subr.mxu0 0.0
  %368 = vmatpush1.msra.mxu0 %v144
  %369 = vmatprep.subr.mxu0 0.0
  %370 = vmatpush1.msra.mxu0 %v145
  %371 = vmatprep.subr.mxu0 0.0
  %372 = vmatpush1.msra.mxu0 %v146
  %373 = vmatprep.subr.mxu0 0.0
  %374 = vmatpush1.msra.mxu0 %v147
  %375 = vmatprep.subr.mxu0 0.0
  %376 = vmatpush1.msra.mxu0 %v148
  %377 = vmatprep.subr.mxu0 0.0
  %378 = vmatpush1.msra.mxu0 %v149
  %379 = vmatprep.subr.mxu0 0.0
  %380 = vmatpush1.msra.mxu0 %v150
  %381 = vmatprep.subr.mxu0 0.0
  %382 = vmatpush1.msra.mxu0 %v151
  %383 = vmatprep.subr.mxu0 0.0
  %384 = vmatpush1.msra.mxu0 %v152
  %385 = vmatprep.subr.mxu0 0.0
  %386 = vmatpush1.msra.mxu0 %v153
  %387 = vmatprep.subr.mxu0 0.0
  %388 = vmatpush1.msra.mxu0 %v154
  %389 = vmatprep.subr.mxu0 0.0
  %390 = vmatpush1.msra.mxu0 %v155
  %391 = vmatprep.subr.mxu0 0.0
  %392 = vmatpush1.msra.mxu0 %v156
  %393 = vmatprep.subr.mxu0 0.0
  %394 = vmatpush1.msra.mxu0 %v157
  %395 = vmatprep.subr.mxu0 0.0
  %396 = vmatpush1.msra.mxu0 %v158
  %397 = vmatprep.subr.mxu0 0.0
  %398 = vmatpush1.msra.mxu0 %v159
  %399 = vmatprep.subr.mxu0 0.0
  %400 = vmatpush1.msra.mxu0 %v160
  %401 = vmatprep.subr.mxu0 0.0
  %402 = vmatpush1.msra.mxu0 %v161
  %403 = vmatprep.mubr.f32.mxu0 %v17
  %404 = vmatmul.mubr.f32.gmra.mrb[0].mxu0 %v16
  %v405 = vpop.f32.mrb[0].mxu0
  %v406 = vadd.f32 %v236, %v405
  %v407 = vpop.f32.mrb[0].mxu0
  %408 = vmatprep.mubr.f32.mxu0 %v21
  %409 = vmatmul.mubr.f32.gmra.mrb[0].mxu0 %v20
  %v410 = vpop.f32.mrb[0].mxu0
  %v411 = vadd.f32 %v241, %v410
  %v412 = vpop.f32.mrb[0].mxu0
  %413 = vmatprep.mubr.f32.mxu0 %v25
  %414 = vmatmul.mubr.f32.gmra.mrb[0].mxu0 %v24
  %v415 = vpop.f32.mrb[0].mxu0
  %v416 = vadd.f32 %v246, %v415
  %v417 = vpop.f32.mrb[0].mxu0
  %418 = vmatprep.mubr.f32.mxu0 %v29
  %419 = vmatmul.mubr.f32.gmra.mrb[0].mxu0 %v28
  %v420 = vpop.f32.mrb[0].mxu0
  %v421 = vadd.f32 %v251, %v420
  %v422 = vpop.f32.mrb[0].mxu0
  %423 = vmatprep.mubr.f32.mxu0 %v33
  %424 = vmatmul.mubr.f32.gmra.mrb[0].mxu0 %v32
  %v425 = vpop.f32.mrb[0].mxu0
  %v426 = vadd.f32 %v256, %v425
  %v427 = vpop.f32.mrb[0].mxu0
  %428 = vmatprep.mubr.f32.mxu0 %v37
  %429 = vmatmul.mubr.f32.gmra.mrb[0].mxu0 %v36
  %v430 = vpop.f32.mrb[0].mxu0
  %v431 = vadd.f32 %v261, %v430
  %v432 = vpop.f32.mrb[0].mxu0
  %433 = vmatprep.mubr.f32.mxu0 %v41
  %434 = vmatmul.mubr.f32.gmra.mrb[0].mxu0 %v40
  %v435 = vpop.f32.mrb[0].mxu0
  %v436 = vadd.f32 %v266, %v435
  %v437 = vpop.f32.mrb[0].mxu0
  %438 = vmatprep.mubr.f32.mxu0 %v45
  %439 = vmatmul.mubr.f32.gmra.mrb[0].mxu0 %v44
  %v440 = vpop.f32.mrb[0].mxu0
  %v441 = vadd.f32 %v271, %v440
  %v442 = vpop.f32.mrb[0].mxu0
  %443 = vmatprep.mubr.f32.mxu0 %v49
  %444 = vmatmul.mubr.f32.gmra.mrb[0].mxu0 %v48
  %v445 = vpop.f32.mrb[0].mxu0
  %v446 = vadd.f32 %v276, %v445
  %v447 = vpop.f32.mrb[0].mxu0
  %448 = vmatprep.mubr.f32.mxu0 %v53
  %449 = vmatmul.mubr.f32.gmra.mrb[0].mxu0 %v52
  %v450 = vpop.f32.mrb[0].mxu0
  %v451 = vadd.f32 %v281, %v450
  %v452 = vpop.f32.mrb[0].mxu0
  %453 = vmatprep.mubr.f32.mxu0 %v57
  %454 = vmatmul.mubr.f32.gmra.mrb[0].mxu0 %v56
  %v455 = vpop.f32.mrb[0].mxu0
  %v456 = vadd.f32 %v286, %v455
  %v457 = vpop.f32.mrb[0].mxu0
  %458 = vmatprep.mubr.f32.mxu0 %v61
  %459 = vmatmul.mubr.f32.gmra.mrb[0].mxu0 %v60
  %v460 = vpop.f32.mrb[0].mxu0
  %v461 = vadd.f32 %v291, %v460
  %v462 = vpop.f32.mrb[0].mxu0
  %463 = vmatprep.mubr.f32.mxu0 %v65
  %464 = vmatmul.mubr.f32.gmra.mrb[0].mxu0 %v64
  %v465 = vpop.f32.mrb[0].mxu0
  %v466 = vadd.f32 %v296, %v465
  %v467 = vpop.f32.mrb[0].mxu0
  %468 = vmatprep.mubr.f32.mxu0 %v69
  %469 = vmatmul.mubr.f32.gmra.mrb[0].mxu0 %v68
  %v470 = vpop.f32.mrb[0].mxu0
  %v471 = vadd.f32 %v301, %v470
  %v472 = vpop.f32.mrb[0].mxu0
  %473 = vmatprep.mubr.f32.mxu0 %v73
  %474 = vmatmul.mubr.f32.gmra.mrb[0].mxu0 %v72
  %v475 = vpop.f32.mrb[0].mxu0
  %v476 = vadd.f32 %v306, %v475
  %v477 = vpop.f32.mrb[0].mxu0
  %478 = vmatprep.mubr.f32.mxu0 %v77
  %479 = vmatmul.mubr.f32.gmra.mrb[0].mxu0 %v76
  %v480 = vpop.f32.mrb[0].mxu0
  %v481 = vadd.f32 %v311, %v480
  %v482 = vpop.f32.mrb[0].mxu0
  %483 = vmatprep.mubr.f32.mxu0 %v81
  %484 = vmatmul.mubr.f32.gmra.mrb[0].mxu0 %v80
  %v485 = vpop.f32.mrb[0].mxu0
  %v486 = vadd.f32 %v316, %v485
  %v487 = vpop.f32.mrb[0].mxu0
  %488 = vmatprep.mubr.f32.mxu0 %v85
  %489 = vmatmul.mubr.f32.gmra.mrb[0].mxu0 %v84
  %v490 = vpop.f32.mrb[0].mxu0
  %v491 = vadd.f32 %v321, %v490
  %v492 = vpop.f32.mrb[0].mxu0
  %493 = vmatprep.mubr.f32.mxu0 %v89
  %494 = vmatmul.mubr.f32.gmra.mrb[0].mxu0 %v88
  %v495 = vpop.f32.mrb[0].mxu0
  %v496 = vadd.f32 %v326, %v495
  %v497 = vpop.f32.mrb[0].mxu0
  %498 = vmatprep.mubr.f32.mxu0 %v93
  %499 = vmatmul.mubr.f32.gmra.mrb[0].mxu0 %v92
  %v500 = vpop.f32.mrb[0].mxu0
  %v501 = vadd.f32 %v331, %v500
  %v502 = vpop.f32.mrb[0].mxu0
  %503 = vmatprep.mubr.f32.mxu0 %v97
  %504 = vmatmul.mubr.f32.gmra.mrb[0].mxu0 %v96
  %v505 = vpop.f32.mrb[0].mxu0
  %v506 = vadd.f32 %v336, %v505
  %v507 = vpop.f32.mrb[0].mxu0
  %508 = vdwg.mxu0
  %v509 = vmax.f32 %v406, 0.0
  %v510 = vmax.f32 %v411, 0.0
  %v511 = vmax.f32 %v416, 0.0
  %v512 = vmax.f32 %v421, 0.0
  %v513 = vmax.f32 %v426, 0.0
  %v514 = vmax.f32 %v431, 0.0
  %v515 = vmax.f32 %v436, 0.0
  %v516 = vmax.f32 %v441, 0.0
  %v517 = vmax.f32 %v446, 0.0
  %v518 = vmax.f32 %v451, 0.0
  %v519 = vmax.f32 %v456, 0.0
  %v520 = vmax.f32 %v461, 0.0
  %v521 = vmax.f32 %v466, 0.0
  %v522 = vmax.f32 %v471, 0.0
  %v523 = vmax.f32 %v476, 0.0
  %v524 = vmax.f32 %v481, 0.0
  %v525 = vmax.f32 %v486, 0.0
  %v526 = vmax.f32 %v491, 0.0
  %v527 = vmax.f32 %v496, 0.0
  %v528 = vmax.f32 %v501, 0.0
  %v529 = vmax.f32 %v506, 0.0
  %vm530 = vcmask 523264
  %531 = vst.msk [vmem:[%s3] sm:$0xff] %vm530, %v509
  %532 = vst.msk [vmem:[%s3 + $0x8] sm:$0xff] %vm530, %v510
  %533 = vst.msk [vmem:[%s3 + $0x10] sm:$0xff] %vm530, %v511
  %534 = vst.msk [vmem:[%s3 + $0x18] sm:$0xff] %vm530, %v512
  %535 = vst.msk [vmem:[%s3 + $0x20] sm:$0xff] %vm530, %v513
  %536 = vst.msk [vmem:[%s3 + $0x28] sm:$0xff] %vm530, %v514
  %537 = vst.msk [vmem:[%s3 + $0x30] sm:$0xff] %vm530, %v515
  %538 = vst.msk [vmem:[%s3 + $0x38] sm:$0xff] %vm530, %v516
  %539 = vst.msk [vmem:[%s3 + $0x40] sm:$0xff] %vm530, %v517
  %540 = vst.msk [vmem:[%s3 + $0x48] sm:$0xff] %vm530, %v518
  %541 = vst.msk [vmem:[%s3 + $0x50] sm:$0xff] %vm530, %v519
  %542 = vst.msk [vmem:[%s3 + $0x58] sm:$0xff] %vm530, %v520
  %543 = vst.msk [vmem:[%s3 + $0x60] sm:$0xff] %vm530, %v521
  %544 = vst.msk [vmem:[%s3 + $0x68] sm:$0xff] %vm530, %v522
  %545 = vst.msk [vmem:[%s3 + $0x70] sm:$0xff] %vm530, %v523
  %546 = vst.msk [vmem:[%s3 + $0x78] sm:$0xff] %vm530, %v524
  %547 = vst.msk [vmem:[%s3 + $0x80] sm:$0xff] %vm530, %v525
  %548 = vst.msk [vmem:[%s3 + $0x88] sm:$0xff] %vm530, %v526
  %549 = vst.msk [vmem:[%s3 + $0x90] sm:$0xff] %vm530, %v527
  %550 = vst.msk [vmem:[%s3 + $0x98] sm:$0xff] %vm530, %v528
  %vm551 = vcmask 517120
  %552 = vst.msk [vmem:[%s3 + $0xa0] sm:$0x3] %vm551, %v529
  // Predicated region
  $region14: #{qnetwork_forward.4} parent=0 // pred_check
    _
  $region15: #{qnetwork_forward.4} parent=0 // pred_check_branch
    %554 = sbr.rel (0) target = $region17
  $region16: #{qnetwork_forward.4} parent=0 // pred_region
    _
  $region17: #{qnetwork_forward.4} parent=0 // pred_fallthru
    _
  // Predicated region
  $region18: #{qnetwork_forward.4} parent=0 // pred_check
    _
  $region19: #{qnetwork_forward.4} parent=0 // pred_check_branch
    %556 = sbr.rel (0) target = $region21
  $region20: #{qnetwork_forward.4} parent=0 // pred_region
    _
  $region21: #{qnetwork_forward.4} parent=0 // pred_fallthru
    _

// kernel: qnetwork_forward.5
$region0: #{qnetwork_forward.5}
  #allocation0 [shape = 'u32[]', space=smem, size = 0x4, offset = 0x4, fixed_abs, tag = 'smem constant byte address 0x4 - core index']
  #allocation1 [shape = 'u32[144,128]{1,0:T(1,128)}', space=vmem, size = 0x12000, scoped, tag = 'internal scratch']
  #allocation2 [shape = 'f32[7,2,448]{2,1,0:T(2,128)}', space=vmem, size = 0x7000, scoped, tag = 'scratch operand']
  #allocation3 [shape = 'f32[2,512]{1,0:T(2,128)}', space=vmem, size = 0x1000, scoped, tag = 'scratch operand']
  %s0 = inlined_call_operand.vmem [shape: f32[98,576], index: 0, kind: input, shape index: {}]
  %s1 = inlined_call_operand.vmem [shape: f32[576,64], index: 1, kind: input, shape index: {}]
  %s2 = inlined_call_operand.vmem [shape: f32[1,64], index: 2, kind: input, shape index: {}]
  %s3 = inlined_call_operand.vmem [shape: f32[3136,512], index: 3, kind: input, shape index: {}]
  %s4 = inlined_call_operand.vmem [shape: f32[1,512], index: 4, kind: input, shape index: {}]
  %s5 = inlined_call_operand.vmem [shape: f32[512,6], index: 5, kind: input, shape index: {}]
  %s6 = inlined_call_operand.vmem [shape: f32[1,6], index: 6, kind: input, shape index: {}]
  %s7 = inlined_call_operand.hbm [shape: f32[2,6], index: 7, kind: output, shape index: {}]
  %s8 = sld [smem:[#allocation0]]
  $region69: #{qnetwork_forward.5} parent=0
    _
  %s10 = ssub.s32 1, %s8
  %s11 = scalar_select 0, %s10, %s8
  $region1: #{qnetwork_forward.5} parent=0
    #allocation4 [shape = 'u8[1024]{0}', space=vmem, size = 0x400, scoped, tag = 'output window, operand 0, single buffered']
    #allocation5 [shape = 's32[2]{0}', space=sflag, size = 0x8, scoped, tag = 'scoped memory for qnetwork_forward.5']
    %12 = vsyncpa [#allocation5], 0
    loop: start=0, step=1, limit=9
    $region2: #{qnetwork_forward.5} parent=1 // loop_pre_header
      _
    $region3: #{qnetwork_forward.5} parent=1 // loop_header
      %s14 = sphi 0, %s18
      %p15 = scmp.ge.s32.totalorder %s14, 9
      %s22 = sphi 0, %s22
      %s24 = sphi 0, %s22
      %s25 = sphi 0, %s24
      %s39 = sphi 0, %s25
      %s43 = sphi 0, %s43
      %s45 = sphi 0, %s43
      %s46 = sphi 0, %s45
      %s60 = sphi 0, %s46
      %s64 = sphi 0, %s64
      %s66 = sphi 0, %s64
      %s67 = sphi 0, %s66
      %s81 = sphi 0, %s67
      %s87 = sphi 0, %s89
      %s90 = sphi 0, %s87
      %s91 = sphi 0, %s90
      %s107 = sphi 0, %s91
      %s111 = sphi 0, %s111
      %s113 = sphi 0, %s111
      %s114 = sphi 0, %s113
      %s128 = sphi 0, %s114
      %s132 = sphi 0, %s132
      %s134 = sphi 0, %s132
      %s135 = sphi 0, %s134
      %s149 = sphi 0, %s135
      %s153 = sphi 0, %s153
      %s155 = sphi 0, %s153
      %s156 = sphi 0, %s155
      %s170 = sphi 0, %s156
      %s174 = sphi 0, %s174
      %s176 = sphi 0, %s174
      %s177 = sphi 0, %s176
      %s191 = sphi 0, %s177
    $region4: #{qnetwork_forward.5} parent=1 // loop_header_branch
      %17 = sbr.rel (%p15) target = $region8
    $region5: #{qnetwork_forward.5} parent=1 // loop_body
      %s19 = ssub.s32 %s14, 1
      %s20 = ssub.s32 %s14, 2
      %s21 = sadd.s32 %s14, 1
      %s23 = sadd.s32 %s22, 1
      %p26 = scmp.eq.s32.totalorder %s14, 6
      %p27 = scmp.ne.s32.totalorder %s22, %s24
      %p28 = scmp.eq.s32.totalorder %s14, 0
      %p29 = por %p27, %p28
      %p30 = scmp.ne.s32.totalorder %s22, %s24
      %p31 = scmp.eq.s32.totalorder %s19, 6
      %p32 = por %p30, %p31
      %p33 = scmp.ne.s32.totalorder %s24, %s25
      %p34 = scmp.eq.s32.totalorder %s19, 0
      %p35 = por %p33, %p34
      %p36 = scmp.ne.s32.totalorder %s24, %s25
      %p37 = scmp.eq.s32.totalorder %s20, 6
      %p38 = por %p36, %p37
      %p40 = scmp.ne.s32.totalorder %s25, %s39
      %p41 = scmp.eq.s32.totalorder %s20, 0
      %p42 = por %p40, %p41
      %s44 = sadd.s32 %s43, 1
      %p47 = scmp.eq.s32.totalorder %s14, 6
      %p48 = scmp.ne.s32.totalorder %s43, %s45
      %p49 = scmp.eq.s32.totalorder %s14, 0
      %p50 = por %p48, %p49
      %p51 = scmp.ne.s32.totalorder %s43, %s45
      %p52 = scmp.eq.s32.totalorder %s19, 6
      %p53 = por %p51, %p52
      %p54 = scmp.ne.s32.totalorder %s45, %s46
      %p55 = scmp.eq.s32.totalorder %s19, 0
      %p56 = por %p54, %p55
      %p57 = scmp.ne.s32.totalorder %s45, %s46
      %p58 = scmp.eq.s32.totalorder %s20, 6
      %p59 = por %p57, %p58
      %p61 = scmp.ne.s32.totalorder %s46, %s60
      %p62 = scmp.eq.s32.totalorder %s20, 0
      %p63 = por %p61, %p62
      %s65 = sadd.s32 %s64, 1
      %p68 = scmp.eq.s32.totalorder %s14, 6
      %p69 = scmp.ne.s32.totalorder %s64, %s66
      %p70 = scmp.eq.s32.totalorder %s14, 0
      %p71 = por %p69, %p70
      %p72 = scmp.ne.s32.totalorder %s64, %s66
      %p73 = scmp.eq.s32.totalorder %s19, 6
      %p74 = por %p72, %p73
      %p75 = scmp.ne.s32.totalorder %s66, %s67
      %p76 = scmp.eq.s32.totalorder %s19, 0
      %p77 = por %p75, %p76
      %p78 = scmp.ne.s32.totalorder %s66, %s67
      %p79 = scmp.eq.s32.totalorder %s20, 6
      %p80 = por %p78, %p79
      %p82 = scmp.ne.s32.totalorder %s67, %s81
      %p83 = scmp.eq.s32.totalorder %s20, 0
      %p84 = por %p82, %p83
      %s85 = ssub.s32 %s14, %s21
      %p86 = scmp.eq.s32.totalorder %s85, 0
      %s88 = sadd.s32 %s87, 1
      %s89 = scalar_select %p86, %s87, %s88
      %p92 = pneg %p86
      %p93 = scmp.eq.s32.totalorder %s14, 6
      %p94 = por %p92, %p93
      %p95 = scmp.ne.s32.totalorder %s87, %s90
      %p96 = scmp.eq.s32.totalorder %s14, 0
      %p97 = por %p95, %p96
      %p98 = scmp.ne.s32.totalorder %s87, %s90
      %p99 = scmp.eq.s32.totalorder %s19, 6
      %p100 = por %p98, %p99
      %p101 = scmp.ne.s32.totalorder %s90, %s91
      %p102 = scmp.eq.s32.totalorder %s19, 0
      %p103 = por %p101, %p102
      %p104 = scmp.ne.s32.totalorder %s90, %s91
      %p105 = scmp.eq.s32.totalorder %s20, 6
      %p106 = por %p104, %p105
      %p108 = scmp.ne.s32.totalorder %s91, %s107
      %p109 = scmp.eq.s32.totalorder %s20, 0
      %p110 = por %p108, %p109
      %s112 = sadd.s32 %s111, 1
      %p115 = scmp.eq.s32.totalorder %s14, 6
      %p116 = scmp.ne.s32.totalorder %s111, %s113
      %p117 = scmp.eq.s32.totalorder %s14, 0
      %p118 = por %p116, %p117
      %p119 = scmp.ne.s32.totalorder %s111, %s113
      %p120 = scmp.eq.s32.totalorder %s19, 6
      %p121 = por %p119, %p120
      %p122 = scmp.ne.s32.totalorder %s113, %s114
      %p123 = scmp.eq.s32.totalorder %s19, 0
      %p124 = por %p122, %p123
      %p125 = scmp.ne.s32.totalorder %s113, %s114
      %p126 = scmp.eq.s32.totalorder %s20, 6
      %p127 = por %p125, %p126
      %p129 = scmp.ne.s32.totalorder %s114, %s128
      %p130 = scmp.eq.s32.totalorder %s20, 0
      %p131 = por %p129, %p130
      %s133 = sadd.s32 %s132, 1
      %p136 = scmp.eq.s32.totalorder %s14, 6
      %p137 = scmp.ne.s32.totalorder %s132, %s134
      %p138 = scmp.eq.s32.totalorder %s14, 0
      %p139 = por %p137, %p138
      %p140 = scmp.ne.s32.totalorder %s132, %s134
      %p141 = scmp.eq.s32.totalorder %s19, 6
      %p142 = por %p140, %p141
      %p143 = scmp.ne.s32.totalorder %s134, %s135
      %p144 = scmp.eq.s32.totalorder %s19, 0
      %p145 = por %p143, %p144
      %p146 = scmp.ne.s32.totalorder %s134, %s135
      %p147 = scmp.eq.s32.totalorder %s20, 6
      %p148 = por %p146, %p147
      %p150 = scmp.ne.s32.totalorder %s135, %s149
      %p151 = scmp.eq.s32.totalorder %s20, 0
      %p152 = por %p150, %p151
      %s154 = sadd.s32 %s153, 1
      %p157 = scmp.eq.s32.totalorder %s14, 6
      %p158 = scmp.ne.s32.totalorder %s153, %s155
      %p159 = scmp.eq.s32.totalorder %s14, 0
      %p160 = por %p158, %p159
      %p161 = scmp.ne.s32.totalorder %s153, %s155
      %p162 = scmp.eq.s32.totalorder %s19, 6
      %p163 = por %p161, %p162
      %p164 = scmp.ne.s32.totalorder %s155, %s156
      %p165 = scmp.eq.s32.totalorder %s19, 0
      %p166 = por %p164, %p165
      %p167 = scmp.ne.s32.totalorder %s155, %s156
      %p168 = scmp.eq.s32.totalorder %s20, 6
      %p169 = por %p167, %p168
      %p171 = scmp.ne.s32.totalorder %s156, %s170
      %p172 = scmp.eq.s32.totalorder %s20, 0
      %p173 = por %p171, %p172
      %s175 = sadd.s32 %s174, 1
      %p178 = scmp.eq.s32.totalorder %s14, 6
      %p179 = scmp.ne.s32.totalorder %s174, %s176
      %p180 = scmp.eq.s32.totalorder %s14, 0
      %p181 = por %p179, %p180
      %p182 = scmp.ne.s32.totalorder %s174, %s176
      %p183 = scmp.eq.s32.totalorder %s19, 6
      %p184 = por %p182, %p183
      %p185 = scmp.ne.s32.totalorder %s176, %s177
      %p186 = scmp.eq.s32.totalorder %s19, 0
      %p187 = por %p185, %p186
      %p188 = scmp.ne.s32.totalorder %s176, %s177
      %p189 = scmp.eq.s32.totalorder %s20, 6
      %p190 = por %p188, %p189
      %p192 = scmp.ne.s32.totalorder %s177, %s191
      %p193 = scmp.eq.s32.totalorder %s20, 0
      %p194 = por %p192, %p193
      %p195 = scmp.le.s32.totalorder 1, %s14
      %p196 = scmp.lt.s32.totalorder %s14, 8
      %p197 = pnand %p195, %p196
      %p198 = pneg %p197
      // Predicated region
      $region9: #{qnetwork_forward.5} parent=5 // pred_check
        _
      $region10: #{qnetwork_forward.5} parent=5 // pred_check_branch
        %200 = sbr.rel (%p197) target = $region12
      $region11: #{qnetwork_forward.5} parent=5 // pred_region
        %s201 = ssub.s32 %s14, 1
        // Predicated region
        $region13: #{qnetwork_forward.5} parent=11 // pred_check
          %p202 = pneg %p35
        $region14: #{qnetwork_forward.5} parent=11 // pred_check_branch
          %204 = sbr.rel (%p202) target = $region16
        $region15: #{qnetwork_forward.5} parent=11 // pred_region
          _
        $region16: #{qnetwork_forward.5} parent=11 // pred_fallthru
          _
        // Predicated region
        $region17: #{qnetwork_forward.5} parent=11 // pred_check
          %p205 = pneg %p56
        $region18: #{qnetwork_forward.5} parent=11 // pred_check_branch
          %207 = sbr.rel (%p205) target = $region20
        $region19: #{qnetwork_forward.5} parent=11 // pred_region
          _
        $region20: #{qnetwork_forward.5} parent=11 // pred_fallthru
          _
        // Predicated region
        $region21: #{qnetwork_forward.5} parent=11 // pred_check
          %p208 = pneg %p77
        $region22: #{qnetwork_forward.5} parent=11 // pred_check_branch
          %210 = sbr.rel (%p208) target = $region24
        $region23: #{qnetwork_forward.5} parent=11 // pred_region
          _
        $region24: #{qnetwork_forward.5} parent=11 // pred_fallthru
          _
        // Predicated region
        $region25: #{qnetwork_forward.5} parent=11 // pred_check
          %p211 = pneg %p124
        $region26: #{qnetwork_forward.5} parent=11 // pred_check_branch
          %213 = sbr.rel (%p211) target = $region28
        $region27: #{qnetwork_forward.5} parent=11 // pred_region
          _
        $region28: #{qnetwork_forward.5} parent=11 // pred_fallthru
          _
        // Predicated region
        $region29: #{qnetwork_forward.5} parent=11 // pred_check
          %p214 = pneg %p145
        $region30: #{qnetwork_forward.5} parent=11 // pred_check_branch
          %216 = sbr.rel (%p214) target = $region32
        $region31: #{qnetwork_forward.5} parent=11 // pred_region
          _
        $region32: #{qnetwork_forward.5} parent=11 // pred_fallthru
          _
        // Predicated region
        $region33: #{qnetwork_forward.5} parent=11 // pred_check
          %p217 = pneg %p166
        $region34: #{qnetwork_forward.5} parent=11 // pred_check_branch
          %219 = sbr.rel (%p217) target = $region36
        $region35: #{qnetwork_forward.5} parent=11 // pred_region
          _
        $region36: #{qnetwork_forward.5} parent=11 // pred_fallthru
          _
      $region12: #{qnetwork_forward.5} parent=5 // pred_fallthru
        _
      %p220 = scmp.lt.s32.totalorder %s14, 7
      // Predicated region
      $region37: #{qnetwork_forward.5} parent=5 // pred_check
        %p221 = pneg %p220
      $region38: #{qnetwork_forward.5} parent=5 // pred_check_branch
        %223 = sbr.rel (%p221) target = $region40
      $region39: #{qnetwork_forward.5} parent=5 // pred_region
        // Predicated region
        $region41: #{qnetwork_forward.5} parent=39 // pred_check
          %p224 = pneg %p97
        $region42: #{qnetwork_forward.5} parent=39 // pred_check_branch
          %226 = sbr.rel (%p224) target = $region44
        $region43: #{qnetwork_forward.5} parent=39 // pred_region
          %s227 = smul.u32 56, %s14
          %p228 = scmp.lt.s32.totalorder %s227, 391
          %s229 = scalar_select %p228, %s227, 391
          %s230 = smul.addr %s229, 4
          %s231 = smul.addr %s230, 8
          %s232 = scalar_lea.vmem %s3, %s231
          %s233 = smul.u32 56, %s14
        $region44: #{qnetwork_forward.5} parent=39 // pred_fallthru
          _
      $region40: #{qnetwork_forward.5} parent=5 // pred_fallthru
        _
      %p234 = scmp.le.s32.totalorder 1, %s14
      %p235 = scmp.lt.s32.totalorder %s14, 8
      %p236 = pnand %p234, %p235
      %p237 = pneg %p236
      // Predicated region
      $region45: #{qnetwork_forward.5} parent=5 // pred_check
        _
      $region46: #{qnetwork_forward.5} parent=5 // pred_check_branch
        %239 = sbr.rel (%p236) target = $region48
      $region47: #{qnetwork_forward.5} parent=5 // pred_region
        %s240 = ssub.s32 %s14, 1
        %p241 = pneg %p35
        %p242 = pneg %p32
        %p243 = pneg %p56
        %p244 = pneg %p53
        %p245 = pneg %p77
        %p246 = pneg %p74
        %s247 = smul.u32 56, %s19
        %p248 = scmp.lt.s32.totalorder %s247, 391
        %s249 = scalar_select %p248, %s247, 391
        %s250 = smul.addr %s249, 4
        %s251 = smul.addr %s250, 8
        %s252 = scalar_lea.vmem %s3, %s251
        %p253 = pneg %p103
        %p254 = pneg %p100
        %p255 = pneg %p124
        %p256 = pneg %p121
        %p257 = pneg %p145
        %p258 = pneg %p142
        %p259 = pneg %p166
        %p260 = pneg %p163
        %p261 = pneg %p187
        %p262 = pneg %p184
        %s263 = smul.u32 56, %s19
        %p264 = scmp.lt.s32.totalorder %s263, 391
        %s265 = scalar_select %p264, %s263, 391
        %s266 = smul.addr %s265, 4
        %s267 = smul.addr %s266, 8
        %s268 = scalar_lea.vmem %s3, %s267
        %s269 = smul.u32 56, %s19
        %p270 = scmp.eq.s32.totalorder %s19, 0
        // Predicated region
        $region49: #{qnetwork_forward.5} parent=47 // pred_check
          %p271 = pneg %p270
        $region50: #{qnetwork_forward.5} parent=47 // pred_check_branch
          %273 = sbr.rel (%p271) target = $region52
        $region51: #{qnetwork_forward.5} parent=47 // pred_region
          %v274 = vld [vmem:[%s0] sm:$0xff]
          %v275 = vld [vmem:[%s0 + $0x8] sm:$0xff]
          %v276 = vld [vmem:[%s0 + $0x10] sm:$0xff]
          %v277 = vld [vmem:[%s0 + $0x18] sm:$0xff]
          %v278 = vld [vmem:[%s0 + $0x20] sm:$0xff]
          %v279 = vld [vmem:[%s0 + $0x28] sm:$0xff]
          %v280 = vld [vmem:[%s0 + $0x30] sm:$0xff]
          %v281 = vld [vmem:[%s0 + $0x38] sm:$0xff]
          %v282 = vld [vmem:[%s0 + $0x40] sm:$0xff]
          %v283 = vld [vmem:[%s0 + $0x48] sm:$0xff]
          %v284 = vld [vmem:[%s0 + $0x50] sm:$0xff]
          %v285 = vld [vmem:[%s0 + $0x58] sm:$0xff]
          %v286 = vld [vmem:[%s0 + $0x60] sm:$0xff]
          %v287 = vld [vmem:[%s0 + $0x68] sm:$0xff]
          %v288 = vld [vmem:[%s0 + $0x70] sm:$0xff]
          %v289 = vld [vmem:[%s0 + $0x78] sm:$0xff]
          %v290 = vld [vmem:[%s0 + $0x80] sm:$0xff]
          %v291 = vld [vmem:[%s0 + $0x88] sm:$0xff]
          %v292 = vld [vmem:[%s0 + $0x90] sm:$0xff]
          %v293 = vld [vmem:[%s0 + $0x98] sm:$0xff]
          %v294 = vld [vmem:[%s0 + $0xa0] sm:$0xff]
          %v295 = vld [vmem:[%s0 + $0xa8] sm:$0xff]
          %v296 = vld [vmem:[%s0 + $0xb0] sm:$0xff]
          %v297 = vld [vmem:[%s0 + $0xb8] sm:$0xff]
          %v298 = vld [vmem:[%s0 + $0xc0] sm:$0xff]
          %v299 = vld [vmem:[%s0 + $0xc8] sm:$0xff]
          %v300 = vld [vmem:[%s0 + $0xd0] sm:$0xff]
          %v301 = vld [vmem:[%s0 + $0xd8] sm:$0xff]
          %v302 = vld [vmem:[%s0 + $0xe0] sm:$0xff]
          %v303 = vld [vmem:[%s0 + $0xe8] sm:$0xff]
          %v304 = vld [vmem:[%s0 + $0xf0] sm:$0xff]
          %v305 = vld [vmem:[%s0 + $0xf8] sm:$0xff]
          %v306 = vld [vmem:[%s0 + $0x100] sm:$0xff]
          %v307 = vld [vmem:[%s0 + $0x108] sm:$0xff]
          %v308 = vld [vmem:[%s0 + $0x110] sm:$0xff]
          %v309 = vld [vmem:[%s0 + $0x118] sm:$0xff]
          %v310 = vld [vmem:[%s0 + $0x120] sm:$0xff]
          %v311 = vld [vmem:[%s0 + $0x128] sm:$0xff]
          %v312 = vld [vmem:[%s0 + $0x130] sm:$0xff]
          %v313 = vld [vmem:[%s0 + $0x138] sm:$0xff]
          %v314 = vld [vmem:[%s0 + $0x140] sm:$0xff]
          %v315 = vld [vmem:[%s0 + $0x148] sm:$0xff]
          %v316 = vld [vmem:[%s0 + $0x150] sm:$0xff]
          %v317 = vld [vmem:[%s0 + $0x158] sm:$0xff]
          %v318 = vld [vmem:[%s0 + $0x160] sm:$0xff]
          %v319 = vld [vmem:[%s0 + $0x168] sm:$0xff]
          %v320 = vld [vmem:[%s0 + $0x170] sm:$0xff]
          %v321 = vld [vmem:[%s0 + $0x178] sm:$0xff]
          %v322 = vld [vmem:[%s0 + $0x180] sm:$0xff]
          %v323 = vld [vmem:[%s0 + $0x188] sm:$0xff]
          %v324 = vld [vmem:[%s0 + $0x190] sm:$0xff]
          %v325 = vld [vmem:[%s0 + $0x198] sm:$0xff]
          %v326 = vld [vmem:[%s0 + $0x1a0] sm:$0xff]
          %v327 = vld [vmem:[%s0 + $0x1a8] sm:$0xff]
          %v328 = vld [vmem:[%s0 + $0x1b0] sm:$0xff]
          %v329 = vld [vmem:[%s0 + $0x1b8] sm:$0xff]
          %v330 = vld [vmem:[%s0 + $0x1c0] sm:$0xff]
          %v331 = vld [vmem:[%s0 + $0x1c8] sm:$0xff]
          %v332 = vld [vmem:[%s0 + $0x1d0] sm:$0xff]
          %v333 = vld [vmem:[%s0 + $0x1d8] sm:$0xff]
          %v334 = vld [vmem:[%s0 + $0x1e0] sm:$0x3]
          %v335 = vld [vmem:[%s0 + $0x1e8] sm:$0x3]
          %v336 = vld [vmem:[%s0 + $0x1f0] sm:$0x3]
          %v337 = vld [vmem:[%s0 + $0x1f8] sm:$0x3]
          %v338 = vld [vmem:[%s0 + $0x200] sm:$0x3]
          %v339 = vld [vmem:[%s1] sm:$0xff]
          %v340 = vld [vmem:[%s1 + $0x8] sm:$0xff]
          %v341 = vld [vmem:[%s1 + $0x10] sm:$0xff]
          %v342 = vld [vmem:[%s1 + $0x18] sm:$0xff]
          %v343 = vld [vmem:[%s1 + $0x20] sm:$0xff]
          %v344 = vld [vmem:[%s1 + $0x28] sm:$0xff]
          %v345 = vld [vmem:[%s1 + $0x30] sm:$0xff]
          %v346 = vld [vmem:[%s1 + $0x38] sm:$0xff]
          %v347 = vld [vmem:[%s1 + $0x40] sm:$0xff]
          %v348 = vld [vmem:[%s1 + $0x48] sm:$0xff]
          %v349 = vld [vmem:[%s1 + $0x50] sm:$0xff]
          %v350 = vld [vmem:[%s1 + $0x58] sm:$0xff]
          %v351 = vld [vmem:[%s1 + $0x60] sm:$0xff]
          %v352 = vld [vmem:[%s1 + $0x68] sm:$0xff]
          %v353 = vld [vmem:[%s1 + $0x70] sm:$0xff]
          %v354 = vld [vmem:[%s1 + $0x78] sm:$0xff]
          %v355 = vld [vmem:[%s1 + $0x80] sm:$0xff]
          %v356 = vld [vmem:[%s1 + $0x88] sm:$0xff]
          %v357 = vld [vmem:[%s1 + $0x90] sm:$0xff]
          %v358 = vld [vmem:[%s1 + $0x98] sm:$0xff]
          %v359 = vld [vmem:[%s1 + $0xa0] sm:$0xff]
          %v360 = vld [vmem:[%s1 + $0xa8] sm:$0xff]
          %v361 = vld [vmem:[%s1 + $0xb0] sm:$0xff]
          %v362 = vld [vmem:[%s1 + $0xb8] sm:$0xff]
          %v363 = vld [vmem:[%s1 + $0xc0] sm:$0xff]
          %v364 = vld [vmem:[%s1 + $0xc8] sm:$0xff]
          %v365 = vld [vmem:[%s1 + $0xd0] sm:$0xff]
          %v366 = vld [vmem:[%s1 + $0xd8] sm:$0xff]
          %v367 = vld [vmem:[%s1 + $0xe0] sm:$0xff]
          %v368 = vld [vmem:[%s1 + $0xe8] sm:$0xff]
          %v369 = vld [vmem:[%s1 + $0xf0] sm:$0xff]
          %v370 = vld [vmem:[%s1 + $0xf8] sm:$0xff]
          %v371 = vld [vmem:[%s1 + $0x100] sm:$0xff]
          %v372 = vld [vmem:[%s1 + $0x108] sm:$0xff]
          %v373 = vld [vmem:[%s1 + $0x110] sm:$0xff]
          %v374 = vld [vmem:[%s1 + $0x118] sm:$0xff]
          %v375 = vld [vmem:[%s1 + $0x120] sm:$0xff]
          %v376 = vld [vmem:[%s1 + $0x128] sm:$0xff]
          %v377 = vld [vmem:[%s1 + $0x130] sm:$0xff]
          %v378 = vld [vmem:[%s1 + $0x138] sm:$0xff]
          %v379 = vld [vmem:[%s1 + $0x140] sm:$0xff]
          %v380 = vld [vmem:[%s1 + $0x148] sm:$0xff]
          %v381 = vld [vmem:[%s1 + $0x150] sm:$0xff]
          %v382 = vld [vmem:[%s1 + $0x158] sm:$0xff]
          %v383 = vld [vmem:[%s1 + $0x160] sm:$0xff]
          %v384 = vld [vmem:[%s1 + $0x168] sm:$0xff]
          %v385 = vld [vmem:[%s1 + $0x170] sm:$0xff]
          %v386 = vld [vmem:[%s1 + $0x178] sm:$0xff]
          %v387 = vld [vmem:[%s1 + $0x180] sm:$0xff]
          %v388 = vld [vmem:[%s1 + $0x188] sm:$0xff]
          %v389 = vld [vmem:[%s1 + $0x190] sm:$0xff]
          %v390 = vld [vmem:[%s1 + $0x198] sm:$0xff]
          %v391 = vld [vmem:[%s1 + $0x1a0] sm:$0xff]
          %v392 = vld [vmem:[%s1 + $0x1a8] sm:$0xff]
          %v393 = vld [vmem:[%s1 + $0x1b0] sm:$0xff]
          %v394 = vld [vmem:[%s1 + $0x1b8] sm:$0xff]
          %v395 = vld [vmem:[%s1 + $0x1c0] sm:$0xff]
          %v396 = vld [vmem:[%s1 + $0x1c8] sm:$0xff]
          %v397 = vld [vmem:[%s1 + $0x1d0] sm:$0xff]
          %v398 = vld [vmem:[%s1 + $0x1d8] sm:$0xff]
          %v399 = vld [vmem:[%s1 + $0x1e0] sm:$0xff]
          %v400 = vld [vmem:[%s1 + $0x1e8] sm:$0xff]
          %v401 = vld [vmem:[%s1 + $0x1f0] sm:$0xff]
          %v402 = vld [vmem:[%s1 + $0x1f8] sm:$0xff]
          %v403 = vld [vmem:[%s1 + $0x200] sm:$0xff]
          %v404 = vld [vmem:[%s1 + $0x208] sm:$0xff]
          %v405 = vld [vmem:[%s1 + $0x210] sm:$0xff]
          %v406 = vld [vmem:[%s1 + $0x218] sm:$0xff]
          %v407 = vld [vmem:[%s1 + $0x220] sm:$0xff]
          %v408 = vld [vmem:[%s1 + $0x228] sm:$0xff]
          %v409 = vld [vmem:[%s1 + $0x230] sm:$0xff]
          %v410 = vld [vmem:[%s1 + $0x238] sm:$0xff]
          %v411 = vld [vmem:[%s2] sm:$0x1]
          %v413 = vlaneseq
          %v414 = vshrl.u32 %v413, 7
          %v415 = vsub.s32 0, %v414
          %v416 = vrot.slane %v411, %v415
          %vm418 = vcmask 523264
          %v420 = vsel %vm418, %v278, 0
          %v423 = vsel %vm418, %v283, 0
          %v426 = vsel %vm418, %v288, 0
          %v429 = vsel %vm418, %v293, 0
          %v432 = vsel %vm418, %v298, 0
          %v435 = vsel %vm418, %v303, 0
          %v438 = vsel %vm418, %v308, 0
          %v441 = vsel %vm418, %v313, 0
          %v444 = vsel %vm418, %v318, 0
          %v447 = vsel %vm418, %v323, 0
          %v450 = vsel %vm418, %v328, 0
          %v453 = vsel %vm418, %v333, 0
          %v456 = vsel %vm418, %v338, 0
          %458 = vmatprep.subr.mxu0 0.0
          %459 = vmatpush1.msra.mxu0 %v339
          %460 = vmatprep.subr.mxu0 0.0
          %461 = vmatpush1.msra.mxu0 %v340
          %462 = vmatprep.subr.mxu0 0.0
          %463 = vmatpush1.msra.mxu0 %v341
          %464 = vmatprep.subr.mxu0 0.0
          %465 = vmatpush1.msra.mxu0 %v342
          %466 = vmatprep.subr.mxu0 0.0
          %467 = vmatpush1.msra.mxu0 %v343
          %468 = vmatprep.subr.mxu0 0.0
          %469 = vmatpush1.msra.mxu0 %v344
          %470 = vmatprep.subr.mxu0 0.0
          %471 = vmatpush1.msra.mxu0 %v345
          %472 = vmatprep.subr.mxu0 0.0
          %473 = vmatpush1.msra.mxu0 %v346
          %474 = vmatprep.subr.mxu0 0.0
          %475 = vmatpush1.msra.mxu0 %v347
          %476 = vmatprep.subr.mxu0 0.0
          %477 = vmatpush1.msra.mxu0 %v348
          %478 = vmatprep.subr.mxu0 0.0
          %479 = vmatpush1.msra.mxu0 %v349
          %480 = vmatprep.subr.mxu0 0.0
          %481 = vmatpush1.msra.mxu0 %v350
          %482 = vmatprep.subr.mxu0 0.0
          %483 = vmatpush1.msra.mxu0 %v351
          %484 = vmatprep.subr.mxu0 0.0
          %485 = vmatpush1.msra.mxu0 %v352
          %486 = vmatprep.subr.mxu0 0.0
          %487 = vmatpush1.msra.mxu0 %v353
          %488 = vmatprep.subr.mxu0 0.0
          %489 = vmatpush1.msra.mxu0 %v354
          %490 = vmatprep.subr.mxu0 0.0
          %491 = vmatpush1.msra.mxu0 %v355
          %492 = vmatprep.subr.mxu0 0.0
          %493 = vmatpush1.msra.mxu0 %v356
          %494 = vmatprep.subr.mxu0 0.0
          %495 = vmatpush1.msra.mxu0 %v357
          %496 = vmatprep.subr.mxu0 0.0
          %497 = vmatpush1.msra.mxu0 %v358
          %498 = vmatprep.subr.mxu0 0.0
          %499 = vmatpush1.msra.mxu0 %v359
          %500 = vmatprep.subr.mxu0 0.0
          %501 = vmatpush1.msra.mxu0 %v360
          %502 = vmatprep.subr.mxu0 0.0
          %503 = vmatpush1.msra.mxu0 %v361
          %504 = vmatprep.subr.mxu0 0.0
          %505 = vmatpush1.msra.mxu0 %v362
          %506 = vmatprep.subr.mxu0 0.0
          %507 = vmatpush1.msra.mxu0 %v363
          %508 = vmatprep.subr.mxu0 0.0
          %509 = vmatpush1.msra.mxu0 %v364
          %510 = vmatprep.subr.mxu0 0.0
          %511 = vmatpush1.msra.mxu0 %v365
          %512 = vmatprep.subr.mxu0 0.0
          %513 = vmatpush1.msra.mxu0 %v366
          %514 = vmatprep.subr.mxu0 0.0
          %515 = vmatpush1.msra.mxu0 %v367
          %516 = vmatprep.subr.mxu0 0.0
          %517 = vmatpush1.msra.mxu0 %v368
          %518 = vmatprep.subr.mxu0 0.0
          %519 = vmatpush1.msra.mxu0 %v369
          %520 = vmatprep.subr.mxu0 0.0
          %521 = vmatpush1.msra.mxu0 %v370
          %522 = vmatprep.mubr.f32.mxu0 %v275
          %523 = vmatmul.mubr.f32.gmra.mrb[0].mxu0 %v274
          %v524 = vpop.f32.mrb[0].mxu0
          %v525 = vadd.f32 %v416, %v524
          %v526 = vpop.f32.mrb[0].mxu0
          %527 = vmatprep.mubr.f32.mxu0 %v280
          %528 = vmatmul.mubr.f32.gmra.mrb[0].mxu0 %v279
          %v529 = vpop.f32.mrb[0].mxu0
          %v530 = vadd.f32 %v416, %v529
          %v531 = vpop.f32.mrb[0].mxu0
          %532 = vmatprep.mubr.f32.mxu0 %v285
          %533 = vmatmul.mubr.f32.gmra.mrb[0].mxu0 %v284
          %v534 = vpop.f32.mrb[0].mxu0
          %v535 = vadd.f32 %v416, %v534
          %v536 = vpop.f32.mrb[0].mxu0
          %537 = vmatprep.mubr.f32.mxu0 %v290
          %538 = vmatmul.mubr.f32.gmra.mrb[0].mxu0 %v289
          %v539 = vpop.f32.mrb[0].mxu0
          %v540 = vadd.f32 %v416, %v539
          %v541 = vpop.f32.mrb[0].mxu0
          %542 = vmatprep.mubr.f32.mxu0 %v295
          %543 = vmatmul.mubr.f32.gmra.mrb[0].mxu0 %v294
          %v544 = vpop.f32.mrb[0].mxu0
          %v545 = vadd.f32 %v416, %v544
          %v546 = vpop.f32.mrb[0].mxu0
          %547 = vmatprep.mubr.f32.mxu0 %v300
          %548 = vmatmul.mubr.f32.gmra.mrb[0].mxu0 %v299
          %v549 = vpop.f32.mrb[0].mxu0
          %v550 = vadd.f32 %v416, %v549
          %v551 = vpop.f32.mrb[0].mxu0
          %552 = vmatprep.mubr.f32.mxu0 %v305
          %553 = vmatmul.mubr.f32.gmra.mrb[0].mxu0 %v304
          %v554 = vpop.f32.mrb[0].mxu0
          %v555 = vadd.f32 %v416, %v554
          %v556 = vpop.f32.mrb[0].mxu0
          %557 = vmatprep.mubr.f32.mxu0 %v310
          %558 = vmatmul.mubr.f32.gmra.mrb[0].mxu0 %v309
          %v559 = vpop.f32.mrb[0].mxu0
          %v560 = vadd.f32 %v416, %v559
          %v561 = vpop.f32.mrb[0].mxu0
          %562 = vmatprep.mubr.f32.mxu0 %v315
          %563 = vmatmul.mubr.f32.gmra.mrb[0].mxu0 %v314
          %v564 = vpop.f32.mrb[0].mxu0
          %v565 = vadd.f32 %v416, %v564
          %v566 = vpop.f32.mrb[0].mxu0
          %567 = vmatprep.mubr.f32.mxu0 %v320
          %568 = vmatmul.mubr.f32.gmra.mrb[0].mxu0 %v319
          %v569 = vpop.f32.mrb[0].mxu0
          %v570 = vadd.f32 %v416, %v569
          %v571 = vpop.f32.mrb[0].mxu0
          %572 = vmatprep.mubr.f32.mxu0 %v325
          %573 = vmatmul.mubr.f32.gmra.mrb[0].mxu0 %v324
          %v574 = vpop.f32.mrb[0].mxu0
          %v575 = vadd.f32 %v416, %v574
          %v576 = vpop.f32.mrb[0].mxu0
          %577 = vmatprep.mubr.f32.mxu0 %v330
          %578 = vmatmul.mubr.f32.gmra.mrb[0].mxu0 %v329
          %v579 = vpop.f32.mrb[0].mxu0
          %v580 = vadd.f32 %v416, %v579
          %v581 = vpop.f32.mrb[0].mxu0
          %582 = vmatprep.mubr.f32.mxu0 %v335
          %583 = vmatmul.mubr.f32.gmra.mrb[0].mxu0 %v334
          %v584 = vpop.f32.mrb[0].mxu0
          %v585 = vadd.f32 %v416, %v584
          %v586 = vpop.f32.mrb[0].mxu0
          %587 = vdwg.mxu0
          %588 = vmatprep.subr.mxu0 0.0
          %589 = vmatpush1.msra.mxu0 %v371
          %590 = vmatprep.subr.mxu0 0.0
          %591 = vmatpush1.msra.mxu0 %v372
          %592 = vmatprep.subr.mxu0 0.0
          %593 = vmatpush1.msra.mxu0 %v373
          %594 = vmatprep.subr.mxu0 0.0
          %595 = vmatpush1.msra.mxu0 %v374
          %596 = vmatprep.subr.mxu0 0.0
          %597 = vmatpush1.msra.mxu0 %v375
          %598 = vmatprep.subr.mxu0 0.0
          %599 = vmatpush1.msra.mxu0 %v376
          %600 = vmatprep.subr.mxu0 0.0
          %601 = vmatpush1.msra.mxu0 %v377
          %602 = vmatprep.subr.mxu0 0.0
          %603 = vmatpush1.msra.mxu0 %v378
          %604 = vmatprep.subr.mxu0 0.0
          %605 = vmatpush1.msra.mxu0 %v379
          %606 = vmatprep.subr.mxu0 0.0
          %607 = vmatpush1.msra.mxu0 %v380
          %608 = vmatprep.subr.mxu0 0.0
          %609 = vmatpush1.msra.mxu0 %v381
          %610 = vmatprep.subr.mxu0 0.0
          %611 = vmatpush1.msra.mxu0 %v382
          %612 = vmatprep.subr.mxu0 0.0
          %613 = vmatpush1.msra.mxu0 %v383
          %614 = vmatprep.subr.mxu0 0.0
          %615 = vmatpush1.msra.mxu0 %v384
          %616 = vmatprep.subr.mxu0 0.0
          %617 = vmatpush1.msra.mxu0 %v385
          %618 = vmatprep.subr.mxu0 0.0
          %619 = vmatpush1.msra.mxu0 %v386
          %620 = vmatprep.subr.mxu0 0.0
          %621 = vmatpush1.msra.mxu0 %v387
          %622 = vmatprep.subr.mxu0 0.0
          %623 = vmatpush1.msra.mxu0 %v388
          %624 = vmatprep.subr.mxu0 0.0
          %625 = vmatpush1.msra.mxu0 %v389
          %626 = vmatprep.subr.mxu0 0.0
          %627 = vmatpush1.msra.mxu0 %v390
          %628 = vmatprep.subr.mxu0 0.0
          %629 = vmatpush1.msra.mxu0 %v391
          %630 = vmatprep.subr.mxu0 0.0
          %631 = vmatpush1.msra.mxu0 %v392
          %632 = vmatprep.subr.mxu0 0.0
          %633 = vmatpush1.msra.mxu0 %v393
          %634 = vmatprep.subr.mxu0 0.0
          %635 = vmatpush1.msra.mxu0 %v394
          %636 = vmatprep.subr.mxu0 0.0
          %637 = vmatpush1.msra.mxu0 %v395
          %638 = vmatprep.subr.mxu0 0.0
          %639 = vmatpush1.msra.mxu0 %v396
          %640 = vmatprep.subr.mxu0 0.0
          %641 = vmatpush1.msra.mxu0 %v397
          %642 = vmatprep.subr.mxu0 0.0
          %643 = vmatpush1.msra.mxu0 %v398
          %644 = vmatprep.subr.mxu0 0.0
          %645 = vmatpush1.msra.mxu0 %v399
          %646 = vmatprep.subr.mxu0 0.0
          %647 = vmatpush1.msra.mxu0 %v400
          %648 = vmatprep.subr.mxu0 0.0
          %649 = vmatpush1.msra.mxu0 %v401
          %650 = vmatprep.subr.mxu0 0.0
          %651 = vmatpush1.msra.mxu0 %v402
          %652 = vmatprep.mubr.f32.mxu0 %v277
          %653 = vmatmul.mubr.f32.gmra.mrb[0].mxu0 %v276
          %v654 = vpop.f32.mrb[0].mxu0
          %v655 = vadd.f32 %v525, %v654
          %v656 = vpop.f32.mrb[0].mxu0
          %657 = vmatprep.mubr.f32.mxu0 %v282
          %658 = vmatmul.mubr.f32.gmra.mrb[0].mxu0 %v281
          %v659 = vpop.f32.mrb[0].mxu0
          %v660 = vadd.f32 %v530, %v659
          %v661 = vpop.f32.mrb[0].mxu0
          %662 = vmatprep.mubr.f32.mxu0 %v287
          %663 = vmatmul.mubr.f32.gmra.mrb[0].mxu0 %v286
          %v664 = vpop.f32.mrb[0].mxu0
          %v665 = vadd.f32 %v535, %v664
          %v666 = vpop.f32.mrb[0].mxu0
          %667 = vmatprep.mubr.f32.mxu0 %v292
          %668 = vmatmul.mubr.f32.gmra.mrb[0].mxu0 %v291
          %v669 = vpop.f32.mrb[0].mxu0
          %v670 = vadd.f32 %v540, %v669
          %v671 = vpop.f32.mrb[0].mxu0
          %672 = vmatprep.mubr.f32.mxu0 %v297
          %673 = vmatmul.mubr.f32.gmra.mrb[0].mxu0 %v296
          %v674 = vpop.f32.mrb[0].mxu0
          %v675 = vadd.f32 %v545, %v674
          %v676 = vpop.f32.mrb[0].mxu0
          %677 = vmatprep.mubr.f32.mxu0 %v302
          %678 = vmatmul.mubr.f32.gmra.mrb[0].mxu0 %v301
          %v679 = vpop.f32.mrb[0].mxu0
          %v680 = vadd.f32 %v550, %v679
          %v681 = vpop.f32.mrb[0].mxu0
          %682 = vmatprep.mubr.f32.mxu0 %v307
          %683 = vmatmul.mubr.f32.gmra.mrb[0].mxu0 %v306
          %v684 = vpop.f32.mrb[0].mxu0
          %v685 = vadd.f32 %v555, %v684
          %v686 = vpop.f32.mrb[0].mxu0
          %687 = vmatprep.mubr.f32.mxu0 %v312
          %688 = vmatmul.mubr.f32.gmra.mrb[0].mxu0 %v311
          %v689 = vpop.f32.mrb[0].mxu0
          %v690 = vadd.f32 %v560, %v689
          %v691 = vpop.f32.mrb[0].mxu0
          %692 = vmatprep.mubr.f32.mxu0 %v317
          %693 = vmatmul.mubr.f32.gmra.mrb[0].mxu0 %v316
          %v694 = vpop.f32.mrb[0].mxu0
          %v695 = vadd.f32 %v565, %v694
          %v696 = vpop.f32.mrb[0].mxu0
          %697 = vmatprep.mubr.f32.mxu0 %v322
          %698 = vmatmul.mubr.f32.gmra.mrb[0].mxu0 %v321
          %v699 = vpop.f32.mrb[0].mxu0
          %v700 = vadd.f32 %v570, %v699
          %v701 = vpop.f32.mrb[0].mxu0
          %702 = vmatprep.mubr.f32.mxu0 %v327
          %703 = vmatmul.mubr.f32.gmra.mrb[0].mxu0 %v326
          %v704 = vpop.f32.mrb[0].mxu0
          %v705 = vadd.f32 %v575, %v704
          %v706 = vpop.f32.mrb[0].mxu0
          %707 = vmatprep.mubr.f32.mxu0 %v332
          %708 = vmatmul.mubr.f32.gmra.mrb[0].mxu0 %v331
          %v709 = vpop.f32.mrb[0].mxu0
          %v710 = vadd.f32 %v580, %v709
          %v711 = vpop.f32.mrb[0].mxu0
          %712 = vmatprep.mubr.f32.mxu0 %v337
          %713 = vmatmul.mubr.f32.gmra.mrb[0].mxu0 %v336
          %v714 = vpop.f32.mrb[0].mxu0
          %v715 = vadd.f32 %v585, %v714
          %v716 = vpop.f32.mrb[0].mxu0
          %717 = vdwg.mxu0
          %718 = vmatprep.subr.mxu0 0.0
          %719 = vmatpush1.msra.mxu0 %v403
          %720 = vmatprep.subr.mxu0 0.0
          %721 = vmatpush1.msra.mxu0 %v404
          %722 = vmatprep.subr.mxu0 0.0
          %723 = vmatpush1.msra.mxu0 %v405
          %724 = vmatprep.subr.mxu0 0.0
          %725 = vmatpush1.msra.mxu0 %v406
          %726 = vmatprep.subr.mxu0 0.0
          %727 = vmatpush1.msra.mxu0 %v407
          %728 = vmatprep.subr.mxu0 0.0
          %729 = vmatpush1.msra.mxu0 %v408
          %730 = vmatprep.subr.mxu0 0.0
          %731 = vmatpush1.msra.mxu0 %v409
          %732 = vmatprep.subr.mxu0 0.0
          %733 = vmatpush1.msra.mxu0 %v410
          %734 = vmatprep.subr.mxu0 0.0
          %735 = vmatpush1.msra.mxu0 0.0
          %736 = vmatprep.subr.mxu0 0.0
          %737 = vmatpush1.msra.mxu0 0.0
          %738 = vmatprep.subr.mxu0 0.0
          %739 = vmatpush1.msra.mxu0 0.0
          %740 = vmatprep.subr.mxu0 0.0
          %741 = vmatpush1.msra.mxu0 0.0
          %742 = vmatprep.subr.mxu0 0.0
          %743 = vmatpush1.msra.mxu0 0.0
          %744 = vmatprep.subr.mxu0 0.0
          %745 = vmatpush1.msra.mxu0 0.0
          %746 = vmatprep.subr.mxu0 0.0
          %747 = vmatpush1.msra.mxu0 0.0
          %748 = vmatprep.subr.mxu0 0.0
          %749 = vmatpush1.msra.mxu0 0.0
          %750 = vmatprep.subr.mxu0 0.0
          %751 = vmatpush1.msra.mxu0 0.0
          %752 = vmatprep.subr.mxu0 0.0
          %753 = vmatpush1.msra.mxu0 0.0
          %754 = vmatprep.subr.mxu0 0.0
          %755 = vmatpush1.msra.mxu0 0.0
          %756 = vmatprep.subr.mxu0 0.0
          %757 = vmatpush1.msra.mxu0 0.0
          %758 = vmatprep.subr.mxu0 0.0
          %759 = vmatpush1.msra.mxu0 0.0
          %760 = vmatprep.subr.mxu0 0.0
          %761 = vmatpush1.msra.mxu0 0.0
          %762 = vmatprep.subr.mxu0 0.0
          %763 = vmatpush1.msra.mxu0 0.0
          %764 = vmatprep.subr.mxu0 0.0
          %765 = vmatpush1.msra.mxu0 0.0
          %766 = vmatprep.subr.mxu0 0.0
          %767 = vmatpush1.msra.mxu0 0.0
          %768 = vmatprep.subr.mxu0 0.0
          %769 = vmatpush1.msra.mxu0 0.0
          %770 = vmatprep.subr.mxu0 0.0
          %771 = vmatpush1.msra.mxu0 0.0
          %772 = vmatprep.subr.mxu0 0.0
          %773 = vmatpush1.msra.mxu0 0.0
          %774 = vmatprep.subr.mxu0 0.0
          %775 = vmatpush1.msra.mxu0 0.0
          %776 = vmatprep.subr.mxu0 0.0
          %777 = vmatpush1.msra.mxu0 0.0
          %778 = vmatprep.subr.mxu0 0.0
          %779 = vmatpush1.msra.mxu0 0.0
          %780 = vmatprep.subr.mxu0 0.0
          %781 = vmatpush1.msra.mxu0 0.0
          %782 = vmatprep.mubr.f32.mxu0 0.0
          %783 = vmatmul.mubr.f32.gmra.mrb[0].mxu0 %v420
          %v784 = vpop.f32.mrb[0].mxu0
          %v785 = vadd.f32 %v655, %v784
          %v786 = vpop.f32.mrb[0].mxu0
          %787 = vmatprep.mubr.f32.mxu0 0.0
          %788 = vmatmul.mubr.f32.gmra.mrb[0].mxu0 %v423
          %v789 = vpop.f32.mrb[0].mxu0
          %v790 = vadd.f32 %v660, %v789
          %v791 = vpop.f32.mrb[0].mxu0
          %792 = vmatprep.mubr.f32.mxu0 0.0
          %793 = vmatmul.mubr.f32.gmra.mrb[0].mxu0 %v426
          %v794 = vpop.f32.mrb[0].mxu0
          %v795 = vadd.f32 %v665, %v794
          %v796 = vpop.f32.mrb[0].mxu0
          %797 = vmatprep.mubr.f32.mxu0 0.0
          %798 = vmatmul.mubr.f32.gmra.mrb[0].mxu0 %v429
          %v799 = vpop.f32.mrb[0].mxu0
          %v800 = vadd.f32 %v670, %v799
          %v801 = vpop.f32.mrb[0].mxu0
          %802 = vmatprep.mubr.f32.mxu0 0.0
          %803 = vmatmul.mubr.f32.gmra.mrb[0].mxu0 %v432
          %v804 = vpop.f32.mrb[0].mxu0
          %v805 = vadd.f32 %v675, %v804
          %v806 = vpop.f32.mrb[0].mxu0
          %807 = vmatprep.mubr.f32.mxu0 0.0
          %808 = vmatmul.mubr.f32.gmra.mrb[0].mxu0 %v435
          %v809 = vpop.f32.mrb[0].mxu0
          %v810 = vadd.f32 %v680, %v809
          %v811 = vpop.f32.mrb[0].mxu0
          %812 = vmatprep.mubr.f32.mxu0 0.0
          %813 = vmatmul.mubr.f32.gmra.mrb[0].mxu0 %v438
          %v814 = vpop.f32.mrb[0].mxu0
          %v815 = vadd.f32 %v685, %v814
          %v816 = vpop.f32.mrb[0].mxu0
          %817 = vmatprep.mubr.f32.mxu0 0.0
          %818 = vmatmul.mubr.f32.gmra.mrb[0].mxu0 %v441
          %v819 = vpop.f32.mrb[0].mxu0
          %v820 = vadd.f32 %v690, %v819
          %v821 = vpop.f32.mrb[0].mxu0
          %822 = vmatprep.mubr.f32.mxu0 0.0
          %823 = vmatmul.mubr.f32.gmra.mrb[0].mxu0 %v444
          %v824 = vpop.f32.mrb[0].mxu0
          %v825 = vadd.f32 %v695, %v824
          %v826 = vpop.f32.mrb[0].mxu0
          %827 = vmatprep.mubr.f32.mxu0 0.0
          %828 = vmatmul.mubr.f32.gmra.mrb[0].mxu0 %v447
          %v829 = vpop.f32.mrb[0].mxu0
          %v830 = vadd.f32 %v700, %v829
          %v831 = vpop.f32.mrb[0].mxu0
          %832 = vmatprep.mubr.f32.mxu0 0.0
          %833 = vmatmul.mubr.f32.gmra.mrb[0].mxu0 %v450
          %v834 = vpop.f32.mrb[0].mxu0
          %v835 = vadd.f32 %v705, %v834
          %v836 = vpop.f32.mrb[0].mxu0
          %837 = vmatprep.mubr.f32.mxu0 0.0
          %838 = vmatmul.mubr.f32.gmra.mrb[0].mxu0 %v453
          %v839 = vpop.f32.mrb[0].mxu0
          %v840 = vadd.f32 %v710, %v839
          %v841 = vpop.f32.mrb[0].mxu0
          %842 = vmatprep.mubr.f32.mxu0 0.0
          %843 = vmatmul.mubr.f32.gmra.mrb[0].mxu0 %v456
          %v844 = vpop.f32.mrb[0].mxu0
          %v845 = vadd.f32 %v715, %v844
          %v846 = vpop.f32.mrb[0].mxu0
          %847 = vdwg.mxu0
          %v848 = vmax.f32 %v785, 0.0
          %v849 = vmax.f32 %v790, 0.0
          %v850 = vmax.f32 %v795, 0.0
          %v851 = vmax.f32 %v800, 0.0
          %v852 = vmax.f32 %v805, 0.0
          %v853 = vmax.f32 %v810, 0.0
          %v854 = vmax.f32 %v815, 0.0
          %v855 = vmax.f32 %v820, 0.0
          %v856 = vmax.f32 %v825, 0.0
          %v857 = vmax.f32 %v830, 0.0
          %v858 = vmax.f32 %v835, 0.0
          %v859 = vmax.f32 %v840, 0.0
          %v860 = vmax.f32 %v845, 0.0
          %vm861 = vcmask 516096
          %862 = vst.msk [vmem:[#allocation2] sm:$0x1] %vm861, %v848
          %v865 = vunpack.c.l.s4 1983009808
          %v866 = vunpack.c.0.s8 %v865
          %v867 = vlaneseq
          %v868 = vshrl.u32 %v867, 7
          %v869 = vsub.s32 %v866, %v868
          %v870 = vrot.slane %v848, %v869
          %v871 = vrot.slane %v870, 7
          %v872 = vrot.slane %v871, 2
          %873 = vrot.lane.b32.xlu0 %v872, 64
          %v874 = vpop.permute.xlu0 %873
          %vm876 = vcmask 1040896
          %877 = vst.msk [vmem:[#allocation2] sm:$0x1] %vm876, %v874
          %v878 = vcombine.high %v870, %v870
          %880 = vst.msk [vmem:[#allocation2 + $0x2] sm:$0x1] %vm861, %v878
          %v881 = vrot.slane %v878, 7
          %v882 = vrot.slane %v881, 2
          %883 = vrot.lane.b32.xlu0 %v882, 64
          %v884 = vpop.permute.xlu0 %883
          %886 = vst.msk [vmem:[#allocation2 + $0x2] sm:$0x1] %vm876, %v884
          %v887 = vcombine.high %v848, %v848
          %v889 = vunpack.c.l.s4 1983009808
          %v890 = vunpack.c.0.s8 %v889
          %v891 = vlaneseq
          %v892 = vshrl.u32 %v891, 7
          %v893 = vsub.s32 %v890, %v892
          %v894 = vrot.slane %v887, %v893
          %896 = vst.msk [vmem:[#allocation2 + $0x4] sm:$0x1] %vm861, %v894
          %v897 = vrot.slane %v894, 7
          %v898 = vrot.slane %v897, 2
          %899 = vrot.lane.b32.xlu0 %v898, 64
          %v900 = vpop.permute.xlu0 %899
          %902 = vst.msk [vmem:[#allocation2 + $0x4] sm:$0x1] %vm876, %v900
          %v903 = vcombine.high %v894, %v894
          %905 = vst.msk [vmem:[#allocation2 + $0x6] sm:$0x1] %vm861, %v903
          %v906 = vrot.slane %v903, 7
          %v907 = vrot.slane %v906, 2
          %s909 = scalar_lea.vmem [#allocation2], 8
          %910 = vst.msk [vmem:[%s909] sm:$0x1] %vm861, %v907
          %v913 = vunpack.c.l.s4 1983009808
          %v914 = vunpack.c.0.s8 %v913
          %v915 = vlaneseq
          %v916 = vshrl.u32 %v915, 7
          %v917 = vsub.s32 %v914, %v916
          %v918 = vrot.slane %v849, %v917
          %919 = vrot.lane.b32.xlu0 %v918, 64
          %v920 = vpop.permute.xlu0 %919
          %922 = vst.msk [vmem:[%s909] sm:$0x1] %vm876, %v920
          %v923 = vrot.slane %v918, 7
          %v924 = vrot.slane %v923, 2
          %926 = vst.msk [vmem:[%s909 + $0x2] sm:$0x1] %vm861, %v924
          %v927 = vcombine.high %v918, %v918
          %928 = vrot.lane.b32.xlu0 %v927, 64
          %v929 = vpop.permute.xlu0 %928
          %931 = vst.msk [vmem:[%s909 + $0x2] sm:$0x1] %vm876, %v929
          %v932 = vrot.slane %v927, 7
          %v933 = vrot.slane %v932, 2
          %935 = vst.msk [vmem:[%s909 + $0x4] sm:$0x1] %vm861, %v933
          %v936 = vcombine.high %v849, %v849
          %v938 = vunpack.c.l.s4 1983009808
          %v939 = vunpack.c.0.s8 %v938
          %v940 = vlaneseq
          %v941 = vshrl.u32 %v940, 7
          %v942 = vsub.s32 %v939, %v941
          %v943 = vrot.slane %v936, %v942
          %944 = vrot.lane.b32.xlu0 %v943, 64
          %v945 = vpop.permute.xlu0 %944
          %947 = vst.msk [vmem:[%s909 + $0x4] sm:$0x1] %vm876, %v945
          %v948 = vrot.slane %v943, 7
          %v949 = vrot.slane %v948, 2
          %951 = vst.msk [vmem:[%s909 + $0x6] sm:$0x1] %vm861, %v949
          %v952 = vcombine.high %v943, %v943
          %s954 = scalar_lea.vmem [#allocation2], 16
          %955 = vst.msk [vmem:[%s954] sm:$0x1] %vm861, %v952
          %v956 = vrot.slane %v952, 7
          %v957 = vrot.slane %v956, 2
          %958 = vrot.lane.b32.xlu0 %v957, 64
          %v959 = vpop.permute.xlu0 %958
          %961 = vst.msk [vmem:[%s954] sm:$0x1] %vm876, %v959
          %962 = vst.msk [vmem:[%s954 + $0x2] sm:$0x1] %vm861, %v850
          %v965 = vunpack.c.l.s4 1983009808
          %v966 = vunpack.c.0.s8 %v965
          %v967 = vlaneseq
          %v968 = vshrl.u32 %v967, 7
          %v969 = vsub.s32 %v966, %v968
          %v970 = vrot.slane %v850, %v969
          %v971 = vrot.slane %v970, 7
          %v972 = vrot.slane %v971, 2
          %973 = vrot.lane.b32.xlu0 %v972, 64
          %v974 = vpop.permute.xlu0 %973
          %976 = vst.msk [vmem:[%s954 + $0x2] sm:$0x1] %vm876, %v974
          %v977 = vcombine.high %v970, %v970
          %979 = vst.msk [vmem:[%s954 + $0x4] sm:$0x1] %vm861, %v977
          %v980 = vrot.slane %v977, 7
          %v981 = vrot.slane %v980, 2
          %982 = vrot.lane.b32.xlu0 %v981, 64
          %v983 = vpop.permute.xlu0 %982
          %985 = vst.msk [vmem:[%s954 + $0x4] sm:$0x1] %vm876, %v983
          %v986 = vcombine.high %v850, %v850
          %v988 = vunpack.c.l.s4 1983009808
          %v989 = vunpack.c.0.s8 %v988
          %v990 = vlaneseq
          %v991 = vshrl.u32 %v990, 7
          %v992 = vsub.s32 %v989, %v991
          %v993 = vrot.slane %v986, %v992
          %995 = vst.msk [vmem:[%s954 + $0x6] sm:$0x1] %vm861, %v993
          %v996 = vrot.slane %v993, 7
          %v997 = vrot.slane %v996, 2
          %s999 = scalar_lea.vmem [#allocation2], 24
          %1000 = vst.msk [vmem:[%s999] sm:$0x1] %vm861, %v997
          %v1001 = vcombine.high %v993, %v993
          %1002 = vrot.lane.b32.xlu0 %v1001, 64
          %v1003 = vpop.permute.xlu0 %1002
          %1005 = vst.msk [vmem:[%s999] sm:$0x1] %vm876, %v1003
          %v1006 = vrot.slane %v1001, 7
          %v1007 = vrot.slane %v1006, 2
          %1009 = vst.msk [vmem:[%s999 + $0x2] sm:$0x1] %vm861, %v1007
          %v1012 = vunpack.c.l.s4 1983009808
          %v1013 = vunpack.c.0.s8 %v1012
          %v1014 = vlaneseq
          %v1015 = vshrl.u32 %v1014, 7
          %v1016 = vsub.s32 %v1013, %v1015
          %v1017 = vrot.slane %v851, %v1016
          %1018 = vrot.lane.b32.xlu0 %v1017, 64
          %v1019 = vpop.permute.xlu0 %1018
          %1021 = vst.msk [vmem:[%s999 + $0x2] sm:$0x1] %vm876, %v1019
          %v1022 = vrot.slane %v1017, 7
          %v1023 = vrot.slane %v1022, 2
          %1025 = vst.msk [vmem:[%s999 + $0x4] sm:$0x1] %vm861, %v1023
          %v1026 = vcombine.high %v1017, %v1017
          %1027 = vrot.lane.b32.xlu0 %v1026, 64
          %v1028 = vpop.permute.xlu0 %1027
          %1030 = vst.msk [vmem:[%s999 + $0x4] sm:$0x1] %vm876, %v1028
          %v1031 = vrot.slane %v1026, 7
          %v1032 = vrot.slane %v1031, 2
          %1034 = vst.msk [vmem:[%s999 + $0x6] sm:$0x1] %vm861, %v1032
          %v1035 = vcombine.high %v851, %v851
          %v1037 = vunpack.c.l.s4 1983009808
          %v1038 = vunpack.c.0.s8 %v1037
          %v1039 = vlaneseq
          %v1040 = vshrl.u32 %v1039, 7
          %v1041 = vsub.s32 %v1038, %v1040
          %v1042 = vrot.slane %v1035, %v1041
          %s1044 = scalar_lea.vmem [#allocation2], 32
          %1045 = vst.msk [vmem:[%s1044] sm:$0x1] %vm861, %v1042
          %v1046 = vrot.slane %v1042, 7
          %v1047 = vrot.slane %v1046, 2
          %1048 = vrot.lane.b32.xlu0 %v1047, 64
          %v1049 = vpop.permute.xlu0 %1048
          %1051 = vst.msk [vmem:[%s1044] sm:$0x1] %vm876, %v1049
          %v1052 = vcombine.high %v1042, %v1042
          %1054 = vst.msk [vmem:[%s1044 + $0x2] sm:$0x1] %vm861, %v1052
          %v1055 = vrot.slane %v1052, 7
          %v1056 = vrot.slane %v1055, 2
          %1057 = vrot.lane.b32.xlu0 %v1056, 64
          %v1058 = vpop.permute.xlu0 %1057
          %1060 = vst.msk [vmem:[%s1044 + $0x2] sm:$0x1] %vm876, %v1058
          %1061 = vst.msk [vmem:[%s1044 + $0x4] sm:$0x1] %vm861, %v852
          %v1064 = vunpack.c.l.s4 1983009808
          %v1065 = vunpack.c.0.s8 %v1064
          %v1066 = vlaneseq
          %v1067 = vshrl.u32 %v1066, 7
          %v1068 = vsub.s32 %v1065, %v1067
          %v1069 = vrot.slane %v852, %v1068
          %v1070 = vrot.slane %v1069, 7
          %v1071 = vrot.slane %v1070, 2
          %1072 = vrot.lane.b32.xlu0 %v1071, 64
          %v1073 = vpop.permute.xlu0 %1072
          %1075 = vst.msk [vmem:[%s1044 + $0x4] sm:$0x1] %vm876, %v1073
          %v1076 = vcombine.high %v1069, %v1069
          %1078 = vst.msk [vmem:[%s1044 + $0x6] sm:$0x1] %vm861, %v1076
          %v1079 = vrot.slane %v1076, 7
          %v1080 = vrot.slane %v1079, 2
          %s1082 = scalar_lea.vmem [#allocation2], 40
          %1083 = vst.msk [vmem:[%s1082] sm:$0x1] %vm861, %v1080
          %v1084 = vcombine.high %v852, %v852
          %v1086 = vunpack.c.l.s4 1983009808
          %v1087 = vunpack.c.0.s8 %v1086
          %v1088 = vlaneseq
          %v1089 = vshrl.u32 %v1088, 7
          %v1090 = vsub.s32 %v1087, %v1089
          %v1091 = vrot.slane %v1084, %v1090
          %1092 = vrot.lane.b32.xlu0 %v1091, 64
          %v1093 = vpop.permute.xlu0 %1092
          %1095 = vst.msk [vmem:[%s1082] sm:$0x1] %vm876, %v1093
          %v1096 = vrot.slane %v1091, 7
          %v1097 = vrot.slane %v1096, 2
          %1099 = vst.msk [vmem:[%s1082 + $0x2] sm:$0x1] %vm861, %v1097
          %v1100 = vcombine.high %v1091, %v1091
          %1101 = vrot.lane.b32.xlu0 %v1100, 64
          %v1102 = vpop.permute.xlu0 %1101
          %1104 = vst.msk [vmem:[%s1082 + $0x2] sm:$0x1] %vm876, %v1102
          %v1105 = vrot.slane %v1100, 7
          %v1106 = vrot.slane %v1105, 2
          %1108 = vst.msk [vmem:[%s1082 + $0x4] sm:$0x1] %vm861, %v1106
          %v1111 = vunpack.c.l.s4 1983009808
          %v1112 = vunpack.c.0.s8 %v1111
          %v1113 = vlaneseq
          %v1114 = vshrl.u32 %v1113, 7
          %v1115 = vsub.s32 %v1112, %v1114
          %v1116 = vrot.slane %v853, %v1115
          %1117 = vrot.lane.b32.xlu0 %v1116, 64
          %v1118 = vpop.permute.xlu0 %1117
          %1120 = vst.msk [vmem:[%s1082 + $0x4] sm:$0x1] %vm876, %v1118
          %v1121 = vrot.slane %v1116, 7
          %v1122 = vrot.slane %v1121, 2
          %1124 = vst.msk [vmem:[%s1082 + $0x6] sm:$0x1] %vm861, %v1122
          %v1125 = vcombine.high %v1116, %v1116
          %s1127 = scalar_lea.vmem [#allocation2], 48
          %1128 = vst.msk [vmem:[%s1127] sm:$0x1] %vm861, %v1125
          %v1129 = vrot.slane %v1125, 7
          %v1130 = vrot.slane %v1129, 2
          %1131 = vrot.lane.b32.xlu0 %v1130, 64
          %v1132 = vpop.permute.xlu0 %1131
          %1134 = vst.msk [vmem:[%s1127] sm:$0x1] %vm876, %v1132
          %v1135 = vcombine.high %v853, %v853
          %v1137 = vunpack.c.l.s4 1983009808
          %v1138 = vunpack.c.0.s8 %v1137
          %v1139 = vlaneseq
          %v1140 = vshrl.u32 %v1139, 7
          %v1141 = vsub.s32 %v1138, %v1140
          %v1142 = vrot.slane %v1135, %v1141
          %1144 = vst.msk [vmem:[%s1127 + $0x2] sm:$0x1] %vm861, %v1142
          %v1145 = vrot.slane %v1142, 7
          %v1146 = vrot.slane %v1145, 2
          %1147 = vrot.lane.b32.xlu0 %v1146, 64
          %v1148 = vpop.permute.xlu0 %1147
          %1150 = vst.msk [vmem:[%s1127 + $0x2] sm:$0x1] %vm876, %v1148
          %v1151 = vcombine.high %v1142, %v1142
          %1153 = vst.msk [vmem:[%s1127 + $0x4] sm:$0x1] %vm861, %v1151
          %v1154 = vrot.slane %v1151, 7
          %v1155 = vrot.slane %v1154, 2
          %1156 = vrot.lane.b32.xlu0 %v1155, 64
          %v1157 = vpop.permute.xlu0 %1156
          %1159 = vst.msk [vmem:[%s1127 + $0x4] sm:$0x1] %vm876, %v1157
          %1160 = vst.msk [vmem:[%s1127 + $0x6] sm:$0x1] %vm861, %v854
          %v1163 = vunpack.c.l.s4 1983009808
          %v1164 = vunpack.c.0.s8 %v1163
          %v1165 = vlaneseq
          %v1166 = vshrl.u32 %v1165, 7
          %v1167 = vsub.s32 %v1164, %v1166
          %v1168 = vrot.slane %v854, %v1167
          %v1169 = vrot.slane %v1168, 7
          %v1170 = vrot.slane %v1169, 2
          %1172 = vst.msk [vmem:[#allocation2 + $0x1] sm:$0x1] %vm861, %v1170
          %v1173 = vcombine.high %v1168, %v1168
          %1174 = vrot.lane.b32.xlu0 %v1173, 64
          %v1175 = vpop.permute.xlu0 %1174
          %1177 = vst.msk [vmem:[#allocation2 + $0x1] sm:$0x1] %vm876, %v1175
          %v1178 = vrot.slane %v1173, 7
          %v1179 = vrot.slane %v1178, 2
          %1181 = vst.msk [vmem:[#allocation2 + $0x3] sm:$0x1] %vm861, %v1179
          %v1182 = vcombine.high %v854, %v854
          %v1184 = vunpack.c.l.s4 1983009808
          %v1185 = vunpack.c.0.s8 %v1184
          %v1186 = vlaneseq
          %v1187 = vshrl.u32 %v1186, 7
          %v1188 = vsub.s32 %v1185, %v1187
          %v1189 = vrot.slane %v1182, %v1188
          %1190 = vrot.lane.b32.xlu0 %v1189, 64
          %v1191 = vpop.permute.xlu0 %1190
          %1193 = vst.msk [vmem:[#allocation2 + $0x3] sm:$0x1] %vm876, %v1191
          %v1194 = vrot.slane %v1189, 7
          %v1195 = vrot.slane %v1194, 2
          %1197 = vst.msk [vmem:[#allocation2 + $0x5] sm:$0x1] %vm861, %v1195
          %v1198 = vcombine.high %v1189, %v1189
          %1199 = vrot.lane.b32.xlu0 %v1198, 64
          %v1200 = vpop.permute.xlu0 %1199
          %1202 = vst.msk [vmem:[#allocation2 + $0x5] sm:$0x1] %vm876, %v1200
          %v1203 = vrot.slane %v1198, 7
          %v1204 = vrot.slane %v1203, 2
          %1206 = vst.msk [vmem:[#allocation2 + $0x7] sm:$0x1] %vm861, %v1204
          %1207 = vst.msk [vmem:[%s909 + $0x1] sm:$0x1] %vm861, %v855
          %v1210 = vunpack.c.l.s4 1983009808
          %v1211 = vunpack.c.0.s8 %v1210
          %v1212 = vlaneseq
          %v1213 = vshrl.u32 %v1212, 7
          %v1214 = vsub.s32 %v1211, %v1213
          %v1215 = vrot.slane %v855, %v1214
          %v1216 = vrot.slane %v1215, 7
          %v1217 = vrot.slane %v1216, 2
          %1218 = vrot.lane.b32.xlu0 %v1217, 64
          %v1219 = vpop.permute.xlu0 %1218
          %1221 = vst.msk [vmem:[%s909 + $0x1] sm:$0x1] %vm876, %v1219
          %v1222 = vcombine.high %v1215, %v1215
          %1224 = vst.msk [vmem:[%s909 + $0x3] sm:$0x1] %vm861, %v1222
          %v1225 = vrot.slane %v1222, 7
          %v1226 = vrot.slane %v1225, 2
          %1227 = vrot.lane.b32.xlu0 %v1226, 64
          %v1228 = vpop.permute.xlu0 %1227
          %1230 = vst.msk [vmem:[%s909 + $0x3] sm:$0x1] %vm876, %v1228
          %v1231 = vcombine.high %v855, %v855
          %v1233 = vunpack.c.l.s4 1983009808
          %v1234 = vunpack.c.0.s8 %v1233
          %v1235 = vlaneseq
          %v1236 = vshrl.u32 %v1235, 7
          %v1237 = vsub.s32 %v1234, %v1236
          %v1238 = vrot.slane %v1231, %v1237
          %1240 = vst.msk [vmem:[%s909 + $0x5] sm:$0x1] %vm861, %v1238
          %v1241 = vrot.slane %v1238, 7
          %v1242 = vrot.slane %v1241, 2
          %1243 = vrot.lane.b32.xlu0 %v1242, 64
          %v1244 = vpop.permute.xlu0 %1243
          %1246 = vst.msk [vmem:[%s909 + $0x5] sm:$0x1] %vm876, %v1244
          %v1247 = vcombine.high %v1238, %v1238
          %1249 = vst.msk [vmem:[%s909 + $0x7] sm:$0x1] %vm861, %v1247
          %v1250 = vrot.slane %v1247, 7
          %v1251 = vrot.slane %v1250, 2
          %1253 = vst.msk [vmem:[%s954 + $0x1] sm:$0x1] %vm861, %v1251
          %v1256 = vunpack.c.l.s4 1983009808
          %v1257 = vunpack.c.0.s8 %v1256
          %v1258 = vlaneseq
          %v1259 = vshrl.u32 %v1258, 7
          %v1260 = vsub.s32 %v1257, %v1259
          %v1261 = vrot.slane %v856, %v1260
          %1262 = vrot.lane.b32.xlu0 %v1261, 64
          %v1263 = vpop.permute.xlu0 %1262
          %1265 = vst.msk [vmem:[%s954 + $0x1] sm:$0x1] %vm876, %v1263
          %v1266 = vrot.slane %v1261, 7
          %v1267 = vrot.slane %v1266, 2
          %1269 = vst.msk [vmem:[%s954 + $0x3] sm:$0x1] %vm861, %v1267
          %v1270 = vcombine.high %v1261, %v1261
          %1271 = vrot.lane.b32.xlu0 %v1270, 64
          %v1272 = vpop.permute.xlu0 %1271
          %1274 = vst.msk [vmem:[%s954 + $0x3] sm:$0x1] %vm876, %v1272
          %v1275 = vrot.slane %v1270, 7
          %v1276 = vrot.slane %v1275, 2
          %1278 = vst.msk [vmem:[%s954 + $0x5] sm:$0x1] %vm861, %v1276
          %v1279 = vcombine.high %v856, %v856
          %v1281 = vunpack.c.l.s4 1983009808
          %v1282 = vunpack.c.0.s8 %v1281
          %v1283 = vlaneseq
          %v1284 = vshrl.u32 %v1283, 7
          %v1285 = vsub.s32 %v1282, %v1284
          %v1286 = vrot.slane %v1279, %v1285
          %1287 = vrot.lane.b32.xlu0 %v1286, 64
          %v1288 = vpop.permute.xlu0 %1287
          %1290 = vst.msk [vmem:[%s954 + $0x5] sm:$0x1] %vm876, %v1288
          %v1291 = vrot.slane %v1286, 7
          %v1292 = vrot.slane %v1291, 2
          %1294 = vst.msk [vmem:[%s954 + $0x7] sm:$0x1] %vm861, %v1292
          %v1295 = vcombine.high %v1286, %v1286
          %1297 = vst.msk [vmem:[%s999 + $0x1] sm:$0x1] %vm861, %v1295
          %v1298 = vrot.slane %v1295, 7
          %v1299 = vrot.slane %v1298, 2
          %1300 = vrot.lane.b32.xlu0 %v1299, 64
          %v1301 = vpop.permute.xlu0 %1300
          %1303 = vst.msk [vmem:[%s999 + $0x1] sm:$0x1] %vm876, %v1301
          %1304 = vst.msk [vmem:[%s999 + $0x3] sm:$0x1] %vm861, %v857
          %v1307 = vunpack.c.l.s4 1983009808
          %v1308 = vunpack.c.0.s8 %v1307
          %v1309 = vlaneseq
          %v1310 = vshrl.u32 %v1309, 7
          %v1311 = vsub.s32 %v1308, %v1310
          %v1312 = vrot.slane %v857, %v1311
          %v1313 = vrot.slane %v1312, 7
          %v1314 = vrot.slane %v1313, 2
          %1315 = vrot.lane.b32.xlu0 %v1314, 64
          %v1316 = vpop.permute.xlu0 %1315
          %1318 = vst.msk [vmem:[%s999 + $0x3] sm:$0x1] %vm876, %v1316
          %v1319 = vcombine.high %v1312, %v1312
          %1321 = vst.msk [vmem:[%s999 + $0x5] sm:$0x1] %vm861, %v1319
          %v1322 = vrot.slane %v1319, 7
          %v1323 = vrot.slane %v1322, 2
          %1324 = vrot.lane.b32.xlu0 %v1323, 64
          %v1325 = vpop.permute.xlu0 %1324
          %1327 = vst.msk [vmem:[%s999 + $0x5] sm:$0x1] %vm876, %v1325
          %v1328 = vcombine.high %v857, %v857
          %v1330 = vunpack.c.l.s4 1983009808
          %v1331 = vunpack.c.0.s8 %v1330
          %v1332 = vlaneseq
          %v1333 = vshrl.u32 %v1332, 7
          %v1334 = vsub.s32 %v1331, %v1333
          %v1335 = vrot.slane %v1328, %v1334
          %1337 = vst.msk [vmem:[%s999 + $0x7] sm:$0x1] %vm861, %v1335
          %v1338 = vrot.slane %v1335, 7
          %v1339 = vrot.slane %v1338, 2
          %1341 = vst.msk [vmem:[%s1044 + $0x1] sm:$0x1] %vm861, %v1339
          %v1342 = vcombine.high %v1335, %v1335
          %1343 = vrot.lane.b32.xlu0 %v1342, 64
          %v1344 = vpop.permute.xlu0 %1343
          %1346 = vst.msk [vmem:[%s1044 + $0x1] sm:$0x1] %vm876, %v1344
          %v1347 = vrot.slane %v1342, 7
          %v1348 = vrot.slane %v1347, 2
          %1350 = vst.msk [vmem:[%s1044 + $0x3] sm:$0x1] %vm861, %v1348
          %v1353 = vunpack.c.l.s4 1983009808
          %v1354 = vunpack.c.0.s8 %v1353
          %v1355 = vlaneseq
          %v1356 = vshrl.u32 %v1355, 7
          %v1357 = vsub.s32 %v1354, %v1356
          %v1358 = vrot.slane %v858, %v1357
          %1359 = vrot.lane.b32.xlu0 %v1358, 64
          %v1360 = vpop.permute.xlu0 %1359
          %1362 = vst.msk [vmem:[%s1044 + $0x3] sm:$0x1] %vm876, %v1360
          %v1363 = vrot.slane %v1358, 7
          %v1364 = vrot.slane %v1363, 2
          %1366 = vst.msk [vmem:[%s1044 + $0x5] sm:$0x1] %vm861, %v1364
          %v1367 = vcombine.high %v1358, %v1358
          %1368 = vrot.lane.b32.xlu0 %v1367, 64
          %v1369 = vpop.permute.xlu0 %1368
          %1371 = vst.msk [vmem:[%s1044 + $0x5] sm:$0x1] %vm876, %v1369
          %v1372 = vrot.slane %v1367, 7
          %v1373 = vrot.slane %v1372, 2
          %1375 = vst.msk [vmem:[%s1044 + $0x7] sm:$0x1] %vm861, %v1373
          %v1376 = vcombine.high %v858, %v858
          %v1378 = vunpack.c.l.s4 1983009808
          %v1379 = vunpack.c.0.s8 %v1378
          %v1380 = vlaneseq
          %v1381 = vshrl.u32 %v1380, 7
          %v1382 = vsub.s32 %v1379, %v1381
          %v1383 = vrot.slane %v1376, %v1382
          %1385 = vst.msk [vmem:[%s1082 + $0x1] sm:$0x1] %vm861, %v1383
          %v1386 = vrot.slane %v1383, 7
          %v1387 = vrot.slane %v1386, 2
          %1388 = vrot.lane.b32.xlu0 %v1387, 64
          %v1389 = vpop.permute.xlu0 %1388
          %1391 = vst.msk [vmem:[%s1082 + $0x1] sm:$0x1] %vm876, %v1389
          %v1392 = vcombine.high %v1383, %v1383
          %1394 = vst.msk [vmem:[%s1082 + $0x3] sm:$0x1] %vm861, %v1392
          %v1395 = vrot.slane %v1392, 7
          %v1396 = vrot.slane %v1395, 2
          %1397 = vrot.lane.b32.xlu0 %v1396, 64
          %v1398 = vpop.permute.xlu0 %1397
          %1400 = vst.msk [vmem:[%s1082 + $0x3] sm:$0x1] %vm876, %v1398
          %1401 = vst.msk [vmem:[%s1082 + $0x5] sm:$0x1] %vm861, %v859
          %v1404 = vunpack.c.l.s4 1983009808
          %v1405 = vunpack.c.0.s8 %v1404
          %v1406 = vlaneseq
          %v1407 = vshrl.u32 %v1406, 7
          %v1408 = vsub.s32 %v1405, %v1407
          %v1409 = vrot.slane %v859, %v1408
          %v1410 = vrot.slane %v1409, 7
          %v1411 = vrot.slane %v1410, 2
          %1412 = vrot.lane.b32.xlu0 %v1411, 64
          %v1413 = vpop.permute.xlu0 %1412
          %1415 = vst.msk [vmem:[%s1082 + $0x5] sm:$0x1] %vm876, %v1413
          %v1416 = vcombine.high %v1409, %v1409
          %1418 = vst.msk [vmem:[%s1082 + $0x7] sm:$0x1] %vm861, %v1416
          %v1419 = vrot.slane %v1416, 7
          %v1420 = vrot.slane %v1419, 2
          %1422 = vst.msk [vmem:[%s1127 + $0x1] sm:$0x1] %vm861, %v1420
          %v1423 = vcombine.high %v859, %v859
          %v1425 = vunpack.c.l.s4 1983009808
          %v1426 = vunpack.c.0.s8 %v1425
          %v1427 = vlaneseq
          %v1428 = vshrl.u32 %v1427, 7
          %v1429 = vsub.s32 %v1426, %v1428
          %v1430 = vrot.slane %v1423, %v1429
          %1431 = vrot.lane.b32.xlu0 %v1430, 64
          %v1432 = vpop.permute.xlu0 %1431
          %1434 = vst.msk [vmem:[%s1127 + $0x1] sm:$0x1] %vm876, %v1432
          %v1435 = vrot.slane %v1430, 7
          %v1436 = vrot.slane %v1435, 2
          %1438 = vst.msk [vmem:[%s1127 + $0x3] sm:$0x1] %vm861, %v1436
          %v1439 = vcombine.high %v1430, %v1430
          %1440 = vrot.lane.b32.xlu0 %v1439, 64
          %v1441 = vpop.permute.xlu0 %1440
          %1443 = vst.msk [vmem:[%s1127 + $0x3] sm:$0x1] %vm876, %v1441
          %v1444 = vrot.slane %v1439, 7
          %v1445 = vrot.slane %v1444, 2
          %1447 = vst.msk [vmem:[%s1127 + $0x5] sm:$0x1] %vm861, %v1445
          %v1450 = vunpack.c.l.s4 1983009808
          %v1451 = vunpack.c.0.s8 %v1450
          %v1452 = vlaneseq
          %v1453 = vshrl.u32 %v1452, 7
          %v1454 = vsub.s32 %v1451, %v1453
          %v1455 = vrot.slane %v860, %v1454
          %1456 = vrot.lane.b32.xlu0 %v1455, 64
          %v1457 = vpop.permute.xlu0 %1456
          %1459 = vst.msk [vmem:[%s1127 + $0x5] sm:$0x1] %vm876, %v1457
          %v1460 = vrot.slane %v1455, 7
          %v1461 = vrot.slane %v1460, 2
          %1463 = vst.msk [vmem:[%s1127 + $0x7] sm:$0x1] %vm861, %v1461
          %1464 = vst [vmem:[#allocation3] sm:$0xff] 0.0
        $region52: #{qnetwork_forward.5} parent=47 // pred_fallthru
          _
        %v1465 = vld [vmem:[#allocation3] sm:$0xff]
        %s1466 = smul.u32 %s19, 4
        %s1467 = smul.addr %s1466, 2
        %s1468 = scalar_lea.vmem [#allocation2], %s1467
        %v1469 = vld [vmem:[%s1468] sm:$0xff]
        %v1470 = vld [vmem:[%s268] sm:$0xff]
        %v1471 = vld [vmem:[%s268 + $0x8] sm:$0xff]
        %v1472 = vld [vmem:[%s268 + $0x10] sm:$0xff]
        %v1473 = vld [vmem:[%s268 + $0x18] sm:$0xff]
        %v1474 = vld [vmem:[%s268 + $0x20] sm:$0xff]
        %v1475 = vld [vmem:[%s268 + $0x28] sm:$0xff]
        %v1476 = vld [vmem:[%s268 + $0x30] sm:$0xff]
        %v1477 = vld [vmem:[%s268 + $0x38] sm:$0xff]
        %v1478 = vld [vmem:[%s268 + $0x40] sm:$0xff]
        %v1479 = vld [vmem:[%s268 + $0x48] sm:$0xff]
        %v1480 = vld [vmem:[%s268 + $0x50] sm:$0xff]
        %v1481 = vld [vmem:[%s268 + $0x58] sm:$0xff]
        %v1482 = vld [vmem:[%s268 + $0x60] sm:$0xff]
        %v1483 = vld [vmem:[%s268 + $0x68] sm:$0xff]
        %v1484 = vld [vmem:[%s268 + $0x70] sm:$0xff]
        %v1485 = vld [vmem:[%s268 + $0x78] sm:$0xff]
        %v1486 = vld [vmem:[%s268 + $0x80] sm:$0xff]
        %v1487 = vld [vmem:[%s268 + $0x88] sm:$0xff]
        %v1488 = vld [vmem:[%s268 + $0x90] sm:$0xff]
        %v1489 = vld [vmem:[%s268 + $0x98] sm:$0xff]
        %v1490 = vld [vmem:[%s268 + $0xa0] sm:$0xff]
        %v1491 = vld [vmem:[%s268 + $0xa8] sm:$0xff]
        %v1492 = vld [vmem:[%s268 + $0xb0] sm:$0xff]
        %v1493 = vld [vmem:[%s268 + $0xb8] sm:$0xff]
        %v1494 = vld [vmem:[%s268 + $0xc0] sm:$0xff]
        %v1495 = vld [vmem:[%s268 + $0xc8] sm:$0xff]
        %v1496 = vld [vmem:[%s268 + $0xd0] sm:$0xff]
        %v1497 = vld [vmem:[%s268 + $0xd8] sm:$0xff]
        %v1498 = vld [vmem:[%s268 + $0xe0] sm:$0xff]
        %v1499 = vld [vmem:[%s268 + $0xe8] sm:$0xff]
        %v1500 = vld [vmem:[%s268 + $0xf0] sm:$0xff]
        %v1501 = vld [vmem:[%s268 + $0xf8] sm:$0xff]
        %v1502 = vld [vmem:[%s268 + $0x100] sm:$0xff]
        %v1503 = vld [vmem:[%s268 + $0x108] sm:$0xff]
        %v1504 = vld [vmem:[%s268 + $0x110] sm:$0xff]
        %v1505 = vld [vmem:[%s268 + $0x118] sm:$0xff]
        %v1506 = vld [vmem:[%s268 + $0x120] sm:$0xff]
        %v1507 = vld [vmem:[%s268 + $0x128] sm:$0xff]
        %v1508 = vld [vmem:[%s268 + $0x130] sm:$0xff]
        %v1509 = vld [vmem:[%s268 + $0x138] sm:$0xff]
        %v1510 = vld [vmem:[%s268 + $0x140] sm:$0xff]
        %v1511 = vld [vmem:[%s268 + $0x148] sm:$0xff]
        %v1512 = vld [vmem:[%s268 + $0x150] sm:$0xff]
        %v1513 = vld [vmem:[%s268 + $0x158] sm:$0xff]
        %v1514 = vld [vmem:[%s268 + $0x160] sm:$0xff]
        %v1515 = vld [vmem:[%s268 + $0x168] sm:$0xff]
        %v1516 = vld [vmem:[%s268 + $0x170] sm:$0xff]
        %v1517 = vld [vmem:[%s268 + $0x178] sm:$0xff]
        %v1518 = vld [vmem:[%s268 + $0x180] sm:$0xff]
        %v1519 = vld [vmem:[%s268 + $0x188] sm:$0xff]
        %v1520 = vld [vmem:[%s268 + $0x190] sm:$0xff]
        %v1521 = vld [vmem:[%s268 + $0x198] sm:$0xff]
        %v1522 = vld [vmem:[%s268 + $0x1a0] sm:$0xff]
        %v1523 = vld [vmem:[%s268 + $0x1a8] sm:$0xff]
        %v1524 = vld [vmem:[%s268 + $0x1b0] sm:$0xff]
        %v1525 = vld [vmem:[%s268 + $0x1b8] sm:$0xff]
        %v1526 = vld [vmem:[%s268 + $0x1c0] sm:$0xff]
        %v1527 = vld [vmem:[%s268 + $0x1c8] sm:$0xff]
        %v1528 = vld [vmem:[%s268 + $0x1d0] sm:$0xff]
        %v1529 = vld [vmem:[%s268 + $0x1d8] sm:$0xff]
        %v1530 = vld [vmem:[%s268 + $0x1e0] sm:$0xff]
        %v1531 = vld [vmem:[%s268 + $0x1e8] sm:$0xff]
        %v1532 = vld [vmem:[%s268 + $0x1f0] sm:$0xff]
        %v1533 = vld [vmem:[%s268 + $0x1f8] sm:$0xff]
        %v1534 = vld [vmem:[%s268 + $0x200] sm:$0xff]
        %v1535 = vld [vmem:[%s268 + $0x208] sm:$0xff]
        %v1536 = vld [vmem:[%s268 + $0x210] sm:$0xff]
        %v1537 = vld [vmem:[%s268 + $0x218] sm:$0xff]
        %v1538 = vld [vmem:[%s268 + $0x220] sm:$0xff]
        %v1539 = vld [vmem:[%s268 + $0x228] sm:$0xff]
        %v1540 = vld [vmem:[%s268 + $0x230] sm:$0xff]
        %v1541 = vld [vmem:[%s268 + $0x238] sm:$0xff]
        %v1542 = vld [vmem:[%s268 + $0x240] sm:$0xff]
        %v1543 = vld [vmem:[%s268 + $0x248] sm:$0xff]
        %v1544 = vld [vmem:[%s268 + $0x250] sm:$0xff]
        %v1545 = vld [vmem:[%s268 + $0x258] sm:$0xff]
        %v1546 = vld [vmem:[%s268 + $0x260] sm:$0xff]
        %v1547 = vld [vmem:[%s268 + $0x268] sm:$0xff]
        %v1548 = vld [vmem:[%s268 + $0x270] sm:$0xff]
        %v1549 = vld [vmem:[%s268 + $0x278] sm:$0xff]
        %v1550 = vld [vmem:[%s268 + $0x280] sm:$0xff]
        %v1551 = vld [vmem:[%s268 + $0x288] sm:$0xff]
        %v1552 = vld [vmem:[%s268 + $0x290] sm:$0xff]
        %v1553 = vld [vmem:[%s268 + $0x298] sm:$0xff]
        %v1554 = vld [vmem:[%s268 + $0x2a0] sm:$0xff]
        %v1555 = vld [vmem:[%s268 + $0x2a8] sm:$0xff]
        %v1556 = vld [vmem:[%s268 + $0x2b0] sm:$0xff]
        %v1557 = vld [vmem:[%s268 + $0x2b8] sm:$0xff]
        %v1558 = vld [vmem:[%s268 + $0x2c0] sm:$0xff]
        %v1559 = vld [vmem:[%s268 + $0x2c8] sm:$0xff]
        %v1560 = vld [vmem:[%s268 + $0x2d0] sm:$0xff]
        %v1561 = vld [vmem:[%s268 + $0x2d8] sm:$0xff]
        %v1562 = vld [vmem:[%s268 + $0x2e0] sm:$0xff]
        %v1563 = vld [vmem:[%s268 + $0x2e8] sm:$0xff]
        %v1564 = vld [vmem:[%s268 + $0x2f0] sm:$0xff]
        %v1565 = vld [vmem:[%s268 + $0x2f8] sm:$0xff]
        %v1566 = vld [vmem:[%s268 + $0x300] sm:$0xff]
        %v1567 = vld [vmem:[%s268 + $0x308] sm:$0xff]
        %v1568 = vld [vmem:[%s268 + $0x310] sm:$0xff]
        %v1569 = vld [vmem:[%s268 + $0x318] sm:$0xff]
        %v1570 = vld [vmem:[%s268 + $0x320] sm:$0xff]
        %v1571 = vld [vmem:[%s268 + $0x328] sm:$0xff]
        %v1572 = vld [vmem:[%s268 + $0x330] sm:$0xff]
        %v1573 = vld [vmem:[%s268 + $0x338] sm:$0xff]
        %v1574 = vld [vmem:[%s268 + $0x340] sm:$0xff]
        %v1575 = vld [vmem:[%s268 + $0x348] sm:$0xff]
        %v1576 = vld [vmem:[%s268 + $0x350] sm:$0xff]
        %v1577 = vld [vmem:[%s268 + $0x358] sm:$0xff]
        %v1578 = vld [vmem:[%s268 + $0x360] sm:$0xff]
        %v1579 = vld [vmem:[%s268 + $0x368] sm:$0xff]
        %v1580 = vld [vmem:[%s268 + $0x370] sm:$0xff]
        %v1581 = vld [vmem:[%s268 + $0x378] sm:$0xff]
        %v1582 = vld [vmem:[%s268 + $0x380] sm:$0xff]
        %v1583 = vld [vmem:[%s268 + $0x388] sm:$0xff]
        %v1584 = vld [vmem:[%s268 + $0x390] sm:$0xff]
        %v1585 = vld [vmem:[%s268 + $0x398] sm:$0xff]
        %v1586 = vld [vmem:[%s268 + $0x3a0] sm:$0xff]
        %v1587 = vld [vmem:[%s268 + $0x3a8] sm:$0xff]
        %v1588 = vld [vmem:[%s268 + $0x3b0] sm:$0xff]
        %v1589 = vld [vmem:[%s268 + $0x3b8] sm:$0xff]
        %v1590 = vld [vmem:[%s268 + $0x3c0] sm:$0xff]
        %v1591 = vld [vmem:[%s268 + $0x3c8] sm:$0xff]
        %v1592 = vld [vmem:[%s268 + $0x3d0] sm:$0xff]
        %v1593 = vld [vmem:[%s268 + $0x3d8] sm:$0xff]
        %v1594 = vld [vmem:[%s268 + $0x3e0] sm:$0xff]
        %v1595 = vld [vmem:[%s268 + $0x3e8] sm:$0xff]
        %v1596 = vld [vmem:[%s268 + $0x3f0] sm:$0xff]
        %v1597 = vld [vmem:[%s268 + $0x3f8] sm:$0xff]
        %v1598 = vld [vmem:[%s268 + $0x400] sm:$0xff]
        %v1599 = vld [vmem:[%s268 + $0x408] sm:$0xff]
        %v1600 = vld [vmem:[%s268 + $0x410] sm:$0xff]
        %v1601 = vld [vmem:[%s268 + $0x418] sm:$0xff]
        %v1602 = vld [vmem:[%s268 + $0x420] sm:$0xff]
        %v1603 = vld [vmem:[%s268 + $0x428] sm:$0xff]
        %v1604 = vld [vmem:[%s268 + $0x430] sm:$0xff]
        %v1605 = vld [vmem:[%s268 + $0x438] sm:$0xff]
        %v1606 = vld [vmem:[%s268 + $0x440] sm:$0xff]
        %v1607 = vld [vmem:[%s268 + $0x448] sm:$0xff]
        %v1608 = vld [vmem:[%s268 + $0x450] sm:$0xff]
        %v1609 = vld [vmem:[%s268 + $0x458] sm:$0xff]
        %v1610 = vld [vmem:[%s268 + $0x460] sm:$0xff]
        %v1611 = vld [vmem:[%s268 + $0x468] sm:$0xff]
        %v1612 = vld [vmem:[%s268 + $0x470] sm:$0xff]
        %v1613 = vld [vmem:[%s268 + $0x478] sm:$0xff]
        %v1614 = vld [vmem:[%s268 + $0x480] sm:$0xff]
        %v1615 = vld [vmem:[%s268 + $0x488] sm:$0xff]
        %v1616 = vld [vmem:[%s268 + $0x490] sm:$0xff]
        %v1617 = vld [vmem:[%s268 + $0x498] sm:$0xff]
        %v1618 = vld [vmem:[%s268 + $0x4a0] sm:$0xff]
        %v1619 = vld [vmem:[%s268 + $0x4a8] sm:$0xff]
        %v1620 = vld [vmem:[%s268 + $0x4b0] sm:$0xff]
        %v1621 = vld [vmem:[%s268 + $0x4b8] sm:$0xff]
        %v1622 = vld [vmem:[%s268 + $0x4c0] sm:$0xff]
        %v1623 = vld [vmem:[%s268 + $0x4c8] sm:$0xff]
        %v1624 = vld [vmem:[%s268 + $0x4d0] sm:$0xff]
        %v1625 = vld [vmem:[%s268 + $0x4d8] sm:$0xff]
        %v1626 = vld [vmem:[%s268 + $0x4e0] sm:$0xff]
        %v1627 = vld [vmem:[%s268 + $0x4e8] sm:$0xff]
        %v1628 = vld [vmem:[%s268 + $0x4f0] sm:$0xff]
        %v1629 = vld [vmem:[%s268 + $0x4f8] sm:$0xff]
        %v1630 = vld [vmem:[%s268 + $0x500] sm:$0xff]
        %v1631 = vld [vmem:[%s268 + $0x508] sm:$0xff]
        %v1632 = vld [vmem:[%s268 + $0x510] sm:$0xff]
        %v1633 = vld [vmem:[%s268 + $0x518] sm:$0xff]
        %v1634 = vld [vmem:[%s268 + $0x520] sm:$0xff]
        %v1635 = vld [vmem:[%s268 + $0x528] sm:$0xff]
        %v1636 = vld [vmem:[%s268 + $0x530] sm:$0xff]
        %v1637 = vld [vmem:[%s268 + $0x538] sm:$0xff]
        %v1638 = vld [vmem:[%s268 + $0x540] sm:$0xff]
        %v1639 = vld [vmem:[%s268 + $0x548] sm:$0xff]
        %v1640 = vld [vmem:[%s268 + $0x550] sm:$0xff]
        %v1641 = vld [vmem:[%s268 + $0x558] sm:$0xff]
        %v1642 = vld [vmem:[%s268 + $0x560] sm:$0xff]
        %v1643 = vld [vmem:[%s268 + $0x568] sm:$0xff]
        %v1644 = vld [vmem:[%s268 + $0x570] sm:$0xff]
        %v1645 = vld [vmem:[%s268 + $0x578] sm:$0xff]
        %v1646 = vld [vmem:[%s268 + $0x580] sm:$0xff]
        %v1647 = vld [vmem:[%s268 + $0x588] sm:$0xff]
        %v1648 = vld [vmem:[%s268 + $0x590] sm:$0xff]
        %v1649 = vld [vmem:[%s268 + $0x598] sm:$0xff]
        %v1650 = vld [vmem:[%s268 + $0x5a0] sm:$0xff]
        %v1651 = vld [vmem:[%s268 + $0x5a8] sm:$0xff]
        %v1652 = vld [vmem:[%s268 + $0x5b0] sm:$0xff]
        %v1653 = vld [vmem:[%s268 + $0x5b8] sm:$0xff]
        %v1654 = vld [vmem:[%s268 + $0x5c0] sm:$0xff]
        %v1655 = vld [vmem:[%s268 + $0x5c8] sm:$0xff]
        %v1656 = vld [vmem:[%s268 + $0x5d0] sm:$0xff]
        %v1657 = vld [vmem:[%s268 + $0x5d8] sm:$0xff]
        %v1658 = vld [vmem:[%s268 + $0x5e0] sm:$0xff]
        %v1659 = vld [vmem:[%s268 + $0x5e8] sm:$0xff]
        %v1660 = vld [vmem:[%s268 + $0x5f0] sm:$0xff]
        %v1661 = vld [vmem:[%s268 + $0x5f8] sm:$0xff]
        %v1662 = vld [vmem:[%s268 + $0x600] sm:$0xff]
        %v1663 = vld [vmem:[%s268 + $0x608] sm:$0xff]
        %v1664 = vld [vmem:[%s268 + $0x610] sm:$0xff]
        %v1665 = vld [vmem:[%s268 + $0x618] sm:$0xff]
        %v1666 = vld [vmem:[%s268 + $0x620] sm:$0xff]
        %v1667 = vld [vmem:[%s268 + $0x628] sm:$0xff]
        %v1668 = vld [vmem:[%s268 + $0x630] sm:$0xff]
        %v1669 = vld [vmem:[%s268 + $0x638] sm:$0xff]
        %v1670 = vld [vmem:[%s268 + $0x640] sm:$0xff]
        %v1671 = vld [vmem:[%s268 + $0x648] sm:$0xff]
        %v1672 = vld [vmem:[%s268 + $0x650] sm:$0xff]
        %v1673 = vld [vmem:[%s268 + $0x658] sm:$0xff]
        %v1674 = vld [vmem:[%s268 + $0x660] sm:$0xff]
        %v1675 = vld [vmem:[%s268 + $0x668] sm:$0xff]
        %v1676 = vld [vmem:[%s268 + $0x670] sm:$0xff]
        %v1677 = vld [vmem:[%s268 + $0x678] sm:$0xff]
        %v1678 = vld [vmem:[%s268 + $0x680] sm:$0xff]
        %v1679 = vld [vmem:[%s268 + $0x688] sm:$0xff]
        %v1680 = vld [vmem:[%s268 + $0x690] sm:$0xff]
        %v1681 = vld [vmem:[%s268 + $0x698] sm:$0xff]
        %v1682 = vld [vmem:[%s268 + $0x6a0] sm:$0xff]
        %v1683 = vld [vmem:[%s268 + $0x6a8] sm:$0xff]
        %v1684 = vld [vmem:[%s268 + $0x6b0] sm:$0xff]
        %v1685 = vld [vmem:[%s268 + $0x6b8] sm:$0xff]
        %v1686 = vld [vmem:[%s268 + $0x6c0] sm:$0xff]
        %v1687 = vld [vmem:[%s268 + $0x6c8] sm:$0xff]
        %v1688 = vld [vmem:[%s268 + $0x6d0] sm:$0xff]
        %v1689 = vld [vmem:[%s268 + $0x6d8] sm:$0xff]
        %v1690 = vld [vmem:[%s268 + $0x6e0] sm:$0xff]
        %v1691 = vld [vmem:[%s268 + $0x6e8] sm:$0xff]
        %v1692 = vld [vmem:[%s268 + $0x6f0] sm:$0xff]
        %v1693 = vld [vmem:[%s268 + $0x6f8] sm:$0xff]
        %v1695 = vcombine.high %v1469, %v1469
        %v1697 = vunpack.c.l.s4 1983009808
        %v1698 = vunpack.c.0.s8 %v1697
        %v1699 = vlaneseq
        %v1700 = vshrl.u32 %v1699, 7
        %v1701 = vsub.s32 %v1698, %v1700
        %v1702 = vrot.slane %v1469, %v1701
        %v1704 = vunpack.c.l.s4 1983009808
        %v1705 = vunpack.c.0.s8 %v1704
        %v1706 = vlaneseq
        %v1707 = vshrl.u32 %v1706, 7
        %v1708 = vsub.s32 %v1705, %v1707
        %v1709 = vrot.slane %v1695, %v1708
        %v1710 = vcombine.high %v1702, %v1702
        %v1711 = vcombine.high %v1709, %v1709
        %vm1715 = vcmask 523264
        %v1716 = vsel %vm1715, %v1711, 0
        %1718 = vmatprep.subr.mxu0 %v1471
        %1719 = vmatpush1.msra.mxu0 %v1470
        %1720 = vmatprep.subr.mxu0 %v1475
        %1721 = vmatpush1.msra.mxu0 %v1474
        %1722 = vmatprep.subr.mxu0 %v1479
        %1723 = vmatpush1.msra.mxu0 %v1478
        %1724 = vmatprep.subr.mxu0 %v1483
        %1725 = vmatpush1.msra.mxu0 %v1482
        %1726 = vmatprep.subr.mxu0 %v1487
        %1727 = vmatpush1.msra.mxu0 %v1486
        %1728 = vmatprep.subr.mxu0 %v1491
        %1729 = vmatpush1.msra.mxu0 %v1490
        %1730 = vmatprep.subr.mxu0 %v1495
        %1731 = vmatpush1.msra.mxu0 %v1494
        %1732 = vmatprep.subr.mxu0 %v1499
        %1733 = vmatpush1.msra.mxu0 %v1498
        %1734 = vmatprep.subr.mxu0 %v1503
        %1735 = vmatpush1.msra.mxu0 %v1502
        %1736 = vmatprep.subr.mxu0 %v1507
        %1737 = vmatpush1.msra.mxu0 %v1506
        %1738 = vmatprep.subr.mxu0 %v1511
        %1739 = vmatpush1.msra.mxu0 %v1510
        %1740 = vmatprep.subr.mxu0 %v1515
        %1741 = vmatpush1.msra.mxu0 %v1514
        %1742 = vmatprep.subr.mxu0 %v1519
        %1743 = vmatpush1.msra.mxu0 %v1518
        %1744 = vmatprep.subr.mxu0 %v1523
        %1745 = vmatpush1.msra.mxu0 %v1522
        %1746 = vmatprep.subr.mxu0 %v1527
        %1747 = vmatpush1.msra.mxu0 %v1526
        %1748 = vmatprep.subr.mxu0 %v1531
        %1749 = vmatpush1.msra.mxu0 %v1530
        %1750 = vmatprep.subr.mxu0 %v1535
        %1751 = vmatpush1.msra.mxu0 %v1534
        %1752 = vmatprep.subr.mxu0 %v1539
        %1753 = vmatpush1.msra.mxu0 %v1538
        %1754 = vmatprep.subr.mxu0 %v1543
        %1755 = vmatpush1.msra.mxu0 %v1542
        %1756 = vmatprep.subr.mxu0 %v1547
        %1757 = vmatpush1.msra.mxu0 %v1546
        %1758 = vmatprep.subr.mxu0 %v1551
        %1759 = vmatpush1.msra.mxu0 %v1550
        %1760 = vmatprep.subr.mxu0 %v1555
        %1761 = vmatpush1.msra.mxu0 %v1554
        %1762 = vmatprep.subr.mxu0 %v1559
        %1763 = vmatpush1.msra.mxu0 %v1558
        %1764 = vmatprep.subr.mxu0 %v1563
        %1765 = vmatpush1.msra.mxu0 %v1562
        %1766 = vmatprep.subr.mxu0 %v1567
        %1767 = vmatpush1.msra.mxu0 %v1566
        %1768 = vmatprep.subr.mxu0 %v1571
        %1769 = vmatpush1.msra.mxu0 %v1570
        %1770 = vmatprep.subr.mxu0 %v1575
        %1771 = vmatpush1.msra.mxu0 %v1574
        %1772 = vmatprep.subr.mxu0 %v1579
        %1773 = vmatpush1.msra.mxu0 %v1578
        %1774 = vmatprep.subr.mxu0 %v1583
        %1775 = vmatpush1.msra.mxu0 %v1582
        %1776 = vmatprep.subr.mxu0 %v1587
        %1777 = vmatpush1.msra.mxu0 %v1586
        %1778 = vmatprep.subr.mxu0 %v1591
        %1779 = vmatpush1.msra.mxu0 %v1590
        %1780 = vmatprep.subr.mxu0 %v1595
        %1781 = vmatpush1.msra.mxu0 %v1594
        %1782 = vmatprep.mubr.f32.mxu0 %v1710
        %1783 = vmatmul.mubr.f32.gmra.mrb[0].mxu0 %v1702
        %v1784 = vpop.f32.mrb[0].mxu0
        %v1785 = vadd.f32 0.0, %v1784
        %v1786 = vpop.f32.mrb[0].mxu0
        %v1787 = vadd.f32 0.0, %v1786
        %1788 = vdwg.mxu0
        %1789 = vmatprep.subr.mxu0 %v1599
        %1790 = vmatpush1.msra.mxu0 %v1598
        %1791 = vmatprep.subr.mxu0 %v1603
        %1792 = vmatpush1.msra.mxu0 %v1602
        %1793 = vmatprep.subr.mxu0 %v1607
        %1794 = vmatpush1.msra.mxu0 %v1606
        %1795 = vmatprep.subr.mxu0 %v1611
        %1796 = vmatpush1.msra.mxu0 %v1610
        %1797 = vmatprep.subr.mxu0 %v1615
        %1798 = vmatpush1.msra.mxu0 %v1614
        %1799 = vmatprep.subr.mxu0 %v1619
        %1800 = vmatpush1.msra.mxu0 %v1618
        %1801 = vmatprep.subr.mxu0 %v1623
        %1802 = vmatpush1.msra.mxu0 %v1622
        %1803 = vmatprep.subr.mxu0 %v1627
        %1804 = vmatpush1.msra.mxu0 %v1626
        %1805 = vmatprep.subr.mxu0 %v1631
        %1806 = vmatpush1.msra.mxu0 %v1630
        %1807 = vmatprep.subr.mxu0 %v1635
        %1808 = vmatpush1.msra.mxu0 %v1634
        %1809 = vmatprep.subr.mxu0 %v1639
        %1810 = vmatpush1.msra.mxu0 %v1638
        %1811 = vmatprep.subr.mxu0 %v1643
        %1812 = vmatpush1.msra.mxu0 %v1642
        %1813 = vmatprep.subr.mxu0 %v1647
        %1814 = vmatpush1.msra.mxu0 %v1646
        %1815 = vmatprep.subr.mxu0 %v1651
        %1816 = vmatpush1.msra.mxu0 %v1650
        %1817 = vmatprep.subr.mxu0 %v1655
        %1818 = vmatpush1.msra.mxu0 %v1654
        %1819 = vmatprep.subr.mxu0 %v1659
        %1820 = vmatpush1.msra.mxu0 %v1658
        %1821 = vmatprep.subr.mxu0 %v1663
        %1822 = vmatpush1.msra.mxu0 %v1662
        %1823 = vmatprep.subr.mxu0 %v1667
        %1824 = vmatpush1.msra.mxu0 %v1666
        %1825 = vmatprep.subr.mxu0 %v1671
        %1826 = vmatpush1.msra.mxu0 %v1670
        %1827 = vmatprep.subr.mxu0 %v1675
        %1828 = vmatpush1.msra.mxu0 %v1674
        %1829 = vmatprep.subr.mxu0 %v1679
        %1830 = vmatpush1.msra.mxu0 %v1678
        %1831 = vmatprep.subr.mxu0 %v1683
        %1832 = vmatpush1.msra.mxu0 %v1682
        %1833 = vmatprep.subr.mxu0 %v1687
        %1834 = vmatpush1.msra.mxu0 %v1686
        %1835 = vmatprep.subr.mxu0 %v1691
        %1836 = vmatpush1.msra.mxu0 %v1690
        %1837 = vmatprep.subr.mxu0 0.0
        %1838 = vmatpush1.msra.mxu0 0.0
        %1839 = vmatprep.subr.mxu0 0.0
        %1840 = vmatpush1.msra.mxu0 0.0
        %1841 = vmatprep.subr.mxu0 0.0
        %1842 = vmatpush1.msra.mxu0 0.0
        %1843 = vmatprep.subr.mxu0 0.0
        %1844 = vmatpush1.msra.mxu0 0.0
        %1845 = vmatprep.subr.mxu0 0.0
        %1846 = vmatpush1.msra.mxu0 0.0
        %1847 = vmatprep.subr.mxu0 0.0
        %1848 = vmatpush1.msra.mxu0 0.0
        %1849 = vmatprep.subr.mxu0 0.0
        %1850 = vmatpush1.msra.mxu0 0.0
        %1851 = vmatprep.subr.mxu0 0.0
        %1852 = vmatpush1.msra.mxu0 0.0
        %1853 = vmatprep.mubr.f32.mxu0 %v1716
        %1854 = vmatmul.mubr.f32.gmra.mrb[0].mxu0 %v1709
        %v1855 = vpop.f32.mrb[0].mxu0
        %v1856 = vadd.f32 %v1785, %v1855
        %v1857 = vpop.f32.mrb[0].mxu0
        %v1858 = vadd.f32 %v1787, %v1857
        %1859 = vdwg.mxu0
        %1860 = vmatprep.subr.mxu0 %v1473
        %1861 = vmatpush1.msra.mxu0 %v1472
        %1862 = vmatprep.subr.mxu0 %v1477
        %1863 = vmatpush1.msra.mxu0 %v1476
        %1864 = vmatprep.subr.mxu0 %v1481
        %1865 = vmatpush1.msra.mxu0 %v1480
        %1866 = vmatprep.subr.mxu0 %v1485
        %1867 = vmatpush1.msra.mxu0 %v1484
        %1868 = vmatprep.subr.mxu0 %v1489
        %1869 = vmatpush1.msra.mxu0 %v1488
        %1870 = vmatprep.subr.mxu0 %v1493
        %1871 = vmatpush1.msra.mxu0 %v1492
        %1872 = vmatprep.subr.mxu0 %v1497
        %1873 = vmatpush1.msra.mxu0 %v1496
        %1874 = vmatprep.subr.mxu0 %v1501
        %1875 = vmatpush1.msra.mxu0 %v1500
        %1876 = vmatprep.subr.mxu0 %v1505
        %1877 = vmatpush1.msra.mxu0 %v1504
        %1878 = vmatprep.subr.mxu0 %v1509
        %1879 = vmatpush1.msra.mxu0 %v1508
        %1880 = vmatprep.subr.mxu0 %v1513
        %1881 = vmatpush1.msra.mxu0 %v1512
        %1882 = vmatprep.subr.mxu0 %v1517
        %1883 = vmatpush1.msra.mxu0 %v1516
        %1884 = vmatprep.subr.mxu0 %v1521
        %1885 = vmatpush1.msra.mxu0 %v1520
        %1886 = vmatprep.subr.mxu0 %v1525
        %1887 = vmatpush1.msra.mxu0 %v1524
        %1888 = vmatprep.subr.mxu0 %v1529
        %1889 = vmatpush1.msra.mxu0 %v1528
        %1890 = vmatprep.subr.mxu0 %v1533
        %1891 = vmatpush1.msra.mxu0 %v1532
        %1892 = vmatprep.subr.mxu0 %v1537
        %1893 = vmatpush1.msra.mxu0 %v1536
        %1894 = vmatprep.subr.mxu0 %v1541
        %1895 = vmatpush1.msra.mxu0 %v1540
        %1896 = vmatprep.subr.mxu0 %v1545
        %1897 = vmatpush1.msra.mxu0 %v1544
        %1898 = vmatprep.subr.mxu0 %v1549
        %1899 = vmatpush1.msra.mxu0 %v1548
        %1900 = vmatprep.subr.mxu0 %v1553
        %1901 = vmatpush1.msra.mxu0 %v1552
        %1902 = vmatprep.subr.mxu0 %v1557
        %1903 = vmatpush1.msra.mxu0 %v1556
        %1904 = vmatprep.subr.mxu0 %v1561
        %1905 = vmatpush1.msra.mxu0 %v1560
        %1906 = vmatprep.subr.mxu0 %v1565
        %1907 = vmatpush1.msra.mxu0 %v1564
        %1908 = vmatprep.subr.mxu0 %v1569
        %1909 = vmatpush1.msra.mxu0 %v1568
        %1910 = vmatprep.subr.mxu0 %v1573
        %1911 = vmatpush1.msra.mxu0 %v1572
        %1912 = vmatprep.subr.mxu0 %v1577
        %1913 = vmatpush1.msra.mxu0 %v1576
        %1914 = vmatprep.subr.mxu0 %v1581
        %1915 = vmatpush1.msra.mxu0 %v1580
        %1916 = vmatprep.subr.mxu0 %v1585
        %1917 = vmatpush1.msra.mxu0 %v1584
        %1918 = vmatprep.subr.mxu0 %v1589
        %1919 = vmatpush1.msra.mxu0 %v1588
        %1920 = vmatprep.subr.mxu0 %v1593
        %1921 = vmatpush1.msra.mxu0 %v1592
        %1922 = vmatprep.subr.mxu0 %v1597
        %1923 = vmatpush1.msra.mxu0 %v1596
        %1924 = vmatprep.mubr.f32.mxu0 %v1710
        %1925 = vmatmul.mubr.f32.gmra.mrb[0].mxu0 %v1702
        %v1926 = vpop.f32.mrb[0].mxu0
        %v1927 = vadd.f32 0.0, %v1926
        %v1928 = vpop.f32.mrb[0].mxu0
        %v1929 = vadd.f32 0.0, %v1928
        %1930 = vdwg.mxu0
        %1931 = vmatprep.subr.mxu0 %v1601
        %1932 = vmatpush1.msra.mxu0 %v1600
        %1933 = vmatprep.subr.mxu0 %v1605
        %1934 = vmatpush1.msra.mxu0 %v1604
        %1935 = vmatprep.subr.mxu0 %v1609
        %1936 = vmatpush1.msra.mxu0 %v1608
        %1937 = vmatprep.subr.mxu0 %v1613
        %1938 = vmatpush1.msra.mxu0 %v1612
        %1939 = vmatprep.subr.mxu0 %v1617
        %1940 = vmatpush1.msra.mxu0 %v1616
        %1941 = vmatprep.subr.mxu0 %v1621
        %1942 = vmatpush1.msra.mxu0 %v1620
        %1943 = vmatprep.subr.mxu0 %v1625
        %1944 = vmatpush1.msra.mxu0 %v1624
        %1945 = vmatprep.subr.mxu0 %v1629
        %1946 = vmatpush1.msra.mxu0 %v1628
        %1947 = vmatprep.subr.mxu0 %v1633
        %1948 = vmatpush1.msra.mxu0 %v1632
        %1949 = vmatprep.subr.mxu0 %v1637
        %1950 = vmatpush1.msra.mxu0 %v1636
        %1951 = vmatprep.subr.mxu0 %v1641
        %1952 = vmatpush1.msra.mxu0 %v1640
        %1953 = vmatprep.subr.mxu0 %v1645
        %1954 = vmatpush1.msra.mxu0 %v1644
        %1955 = vmatprep.subr.mxu0 %v1649
        %1956 = vmatpush1.msra.mxu0 %v1648
        %1957 = vmatprep.subr.mxu0 %v1653
        %1958 = vmatpush1.msra.mxu0 %v1652
        %1959 = vmatprep.subr.mxu0 %v1657
        %1960 = vmatpush1.msra.mxu0 %v1656
        %1961 = vmatprep.subr.mxu0 %v1661
        %1962 = vmatpush1.msra.mxu0 %v1660
        %1963 = vmatprep.subr.mxu0 %v1665
        %1964 = vmatpush1.msra.mxu0 %v1664
        %1965 = vmatprep.subr.mxu0 %v1669
        %1966 = vmatpush1.msra.mxu0 %v1668
        %1967 = vmatprep.subr.mxu0 %v1673
        %1968 = vmatpush1.msra.mxu0 %v1672
        %1969 = vmatprep.subr.mxu0 %v1677
        %1970 = vmatpush1.msra.mxu0 %v1676
        %1971 = vmatprep.subr.mxu0 %v1681
        %1972 = vmatpush1.msra.mxu0 %v1680
        %1973 = vmatprep.subr.mxu0 %v1685
        %1974 = vmatpush1.msra.mxu0 %v1684
        %1975 = vmatprep.subr.mxu0 %v1689
        %1976 = vmatpush1.msra.mxu0 %v1688
        %1977 = vmatprep.subr.mxu0 %v1693
        %1978 = vmatpush1.msra.mxu0 %v1692
        %1979 = vmatprep.subr.mxu0 0.0
        %1980 = vmatpush1.msra.mxu0 0.0
        %1981 = vmatprep.subr.mxu0 0.0
        %1982 = vmatpush1.msra.mxu0 0.0
        %1983 = vmatprep.subr.mxu0 0.0
        %1984 = vmatpush1.msra.mxu0 0.0
        %1985 = vmatprep.subr.mxu0 0.0
        %1986 = vmatpush1.msra.mxu0 0.0
        %1987 = vmatprep.subr.mxu0 0.0
        %1988 = vmatpush1.msra.mxu0 0.0
        %1989 = vmatprep.subr.mxu0 0.0
        %1990 = vmatpush1.msra.mxu0 0.0
        %1991 = vmatprep.subr.mxu0 0.0
        %1992 = vmatpush1.msra.mxu0 0.0
        %1993 = vmatprep.subr.mxu0 0.0
        %1994 = vmatpush1.msra.mxu0 0.0
        %1995 = vmatprep.mubr.f32.mxu0 %v1716
        %1996 = vmatmul.mubr.f32.gmra.mrb[0].mxu0 %v1709
        %v1997 = vpop.f32.mrb[0].mxu0
        %v1998 = vadd.f32 %v1927, %v1997
        %v1999 = vpop.f32.mrb[0].mxu0
        %v2000 = vadd.f32 %v1929, %v1999
        %2001 = vdwg.mxu0
        %v2006 = vcombine.low %v1856, %v1858
        %v2007 = vcombine.low %v1998, %v2000
        %v2009 = vunpack.c.l.s4 1983009808
        %v2010 = vunpack.c.0.s8 %v2009
        %v2011 = vlaneseq
        %v2012 = vshrl.u32 %v2011, 7
        %v2013 = vsub.s32 %v2010, %v2012
        %v2014 = vrot.slane %v2006, %v2013
        %v2016 = vunpack.c.l.s4 1983009808
        %v2017 = vunpack.c.0.s8 %v2016
        %v2018 = vlaneseq
        %v2019 = vshrl.u32 %v2018, 7
        %v2020 = vsub.s32 %v2017, %v2019
        %v2021 = vrot.slane %v2007, %v2020
        %v2022 = vcombine.low %v2014, %v2021
        %v2024 = vadd.f32 %v1465, %v2022
        %2025 = vst [vmem:[#allocation3] sm:$0xff] %v2024
        %p2026 = scmp.eq.s32.totalorder %s19, 6
        // Predicated region
        $region53: #{qnetwork_forward.5} parent=47 // pred_check
          %p2027 = pneg %p2026
        $region54: #{qnetwork_forward.5} parent=47 // pred_check_branch
          %2029 = sbr.rel (%p2027) target = $region56
        $region55: #{qnetwork_forward.5} parent=47 // pred_region
          %v2030 = vld [vmem:[#allocation3] sm:$0xff]
          %v2031 = vld [vmem:[%s4] sm:$0xf]
          %v2033 = vlaneseq
          %v2034 = vshrl.u32 %v2033, 7
          %v2035 = vsub.s32 0, %v2034
          %v2036 = vrot.slane %v2031, %v2035
          %v2037 = vlaneseq
          %v2038 = vshrl.u32 %v2037, 7
          %v2039 = vsub.s32 1, %v2038
          %v2040 = vrot.slane %v2031, %v2039
          %v2041 = vlaneseq
          %v2042 = vshrl.u32 %v2041, 7
          %v2043 = vsub.s32 2, %v2042
          %v2044 = vrot.slane %v2031, %v2043
          %v2045 = vlaneseq
          %v2046 = vshrl.u32 %v2045, 7
          %v2047 = vsub.s32 3, %v2046
          %v2048 = vrot.slane %v2031, %v2047
          %v2049 = vcombine.low %v2036, %v2040
          %v2050 = vcombine.low %v2044, %v2048
          %v2052 = vunpack.c.l.s4 1983009808
          %v2053 = vunpack.c.0.s8 %v2052
          %v2054 = vlaneseq
          %v2055 = vshrl.u32 %v2054, 7
          %v2056 = vsub.s32 %v2053, %v2055
          %v2057 = vrot.slane %v2049, %v2056
          %v2059 = vunpack.c.l.s4 1983009808
          %v2060 = vunpack.c.0.s8 %v2059
          %v2061 = vlaneseq
          %v2062 = vshrl.u32 %v2061, 7
          %v2063 = vsub.s32 %v2060, %v2062
          %v2064 = vrot.slane %v2050, %v2063
          %v2065 = vcombine.low %v2057, %v2064
          %v2067 = vadd.f32 %v2030, %v2065
          %v2068 = vmax.f32 %v2067, 0.0
          %v2069 = vld [vmem:[%s5] sm:$0xff]
          %v2070 = vld [vmem:[%s5 + $0x8] sm:$0xff]
          %v2071 = vld [vmem:[%s5 + $0x10] sm:$0xff]
          %v2072 = vld [vmem:[%s5 + $0x18] sm:$0xff]
          %v2073 = vld [vmem:[%s5 + $0x20] sm:$0xff]
          %v2074 = vld [vmem:[%s5 + $0x28] sm:$0xff]
          %v2075 = vld [vmem:[%s5 + $0x30] sm:$0xff]
          %v2076 = vld [vmem:[%s5 + $0x38] sm:$0xff]
          %v2077 = vld [vmem:[%s5 + $0x40] sm:$0xff]
          %v2078 = vld [vmem:[%s5 + $0x48] sm:$0xff]
          %v2079 = vld [vmem:[%s5 + $0x50] sm:$0xff]
          %v2080 = vld [vmem:[%s5 + $0x58] sm:$0xff]
          %v2081 = vld [vmem:[%s5 + $0x60] sm:$0xff]
          %v2082 = vld [vmem:[%s5 + $0x68] sm:$0xff]
          %v2083 = vld [vmem:[%s5 + $0x70] sm:$0xff]
          %v2084 = vld [vmem:[%s5 + $0x78] sm:$0xff]
          %v2085 = vld [vmem:[%s5 + $0x80] sm:$0xff]
          %v2086 = vld [vmem:[%s5 + $0x88] sm:$0xff]
          %v2087 = vld [vmem:[%s5 + $0x90] sm:$0xff]
          %v2088 = vld [vmem:[%s5 + $0x98] sm:$0xff]
          %v2089 = vld [vmem:[%s5 + $0xa0] sm:$0xff]
          %v2090 = vld [vmem:[%s5 + $0xa8] sm:$0xff]
          %v2091 = vld [vmem:[%s5 + $0xb0] sm:$0xff]
          %v2092 = vld [vmem:[%s5 + $0xb8] sm:$0xff]
          %v2093 = vld [vmem:[%s5 + $0xc0] sm:$0xff]
          %v2094 = vld [vmem:[%s5 + $0xc8] sm:$0xff]
          %v2095 = vld [vmem:[%s5 + $0xd0] sm:$0xff]
          %v2096 = vld [vmem:[%s5 + $0xd8] sm:$0xff]
          %v2097 = vld [vmem:[%s5 + $0xe0] sm:$0xff]
          %v2098 = vld [vmem:[%s5 + $0xe8] sm:$0xff]
          %v2099 = vld [vmem:[%s5 + $0xf0] sm:$0xff]
          %v2100 = vld [vmem:[%s5 + $0xf8] sm:$0xff]
          %v2101 = vld [vmem:[%s5 + $0x100] sm:$0xff]
          %v2102 = vld [vmem:[%s5 + $0x108] sm:$0xff]
          %v2103 = vld [vmem:[%s5 + $0x110] sm:$0xff]
          %v2104 = vld [vmem:[%s5 + $0x118] sm:$0xff]
          %v2105 = vld [vmem:[%s5 + $0x120] sm:$0xff]
          %v2106 = vld [vmem:[%s5 + $0x128] sm:$0xff]
          %v2107 = vld [vmem:[%s5 + $0x130] sm:$0xff]
          %v2108 = vld [vmem:[%s5 + $0x138] sm:$0xff]
          %v2109 = vld [vmem:[%s5 + $0x140] sm:$0xff]
          %v2110 = vld [vmem:[%s5 + $0x148] sm:$0xff]
          %v2111 = vld [vmem:[%s5 + $0x150] sm:$0xff]
          %v2112 = vld [vmem:[%s5 + $0x158] sm:$0xff]
          %v2113 = vld [vmem:[%s5 + $0x160] sm:$0xff]
          %v2114 = vld [vmem:[%s5 + $0x168] sm:$0xff]
          %v2115 = vld [vmem:[%s5 + $0x170] sm:$0xff]
          %v2116 = vld [vmem:[%s5 + $0x178] sm:$0xff]
          %v2117 = vld [vmem:[%s5 + $0x180] sm:$0xff]
          %v2118 = vld [vmem:[%s5 + $0x188] sm:$0xff]
          %v2119 = vld [vmem:[%s5 + $0x190] sm:$0xff]
          %v2120 = vld [vmem:[%s5 + $0x198] sm:$0xff]
          %v2121 = vld [vmem:[%s5 + $0x1a0] sm:$0xff]
          %v2122 = vld [vmem:[%s5 + $0x1a8] sm:$0xff]
          %v2123 = vld [vmem:[%s5 + $0x1b0] sm:$0xff]
          %v2124 = vld [vmem:[%s5 + $0x1b8] sm:$0xff]
          %v2125 = vld [vmem:[%s5 + $0x1c0] sm:$0xff]
          %v2126 = vld [vmem:[%s5 + $0x1c8] sm:$0xff]
          %v2127 = vld [vmem:[%s5 + $0x1d0] sm:$0xff]
          %v2128 = vld [vmem:[%s5 + $0x1d8] sm:$0xff]
          %v2129 = vld [vmem:[%s5 + $0x1e0] sm:$0xff]
          %v2130 = vld [vmem:[%s5 + $0x1e8] sm:$0xff]
          %v2131 = vld [vmem:[%s5 + $0x1f0] sm:$0xff]
          %v2132 = vld [vmem:[%s5 + $0x1f8] sm:$0xff]
          %v2133 = vld [vmem:[%s6] sm:$0x1]
          %v2135 = vlaneseq
          %v2136 = vshrl.u32 %v2135, 7
          %v2137 = vsub.s32 0, %v2136
          %v2138 = vrot.slane %v2133, %v2137
          %v2141 = vcombine.high %v2068, %v2068
          %v2143 = vunpack.c.l.s4 1983009808
          %v2144 = vunpack.c.0.s8 %v2143
          %v2145 = vlaneseq
          %v2146 = vshrl.u32 %v2145, 7
          %v2147 = vsub.s32 %v2144, %v2146
          %v2148 = vrot.slane %v2068, %v2147
          %v2150 = vunpack.c.l.s4 1983009808
          %v2151 = vunpack.c.0.s8 %v2150
          %v2152 = vlaneseq
          %v2153 = vshrl.u32 %v2152, 7
          %v2154 = vsub.s32 %v2151, %v2153
          %v2155 = vrot.slane %v2141, %v2154
          %v2156 = vcombine.high %v2148, %v2148
          %v2157 = vcombine.high %v2155, %v2155
          %2162 = vmatprep.subr.mxu0 0.0
          %2163 = vmatpush1.msra.mxu0 %v2069
          %2164 = vmatprep.subr.mxu0 0.0
          %2165 = vmatpush1.msra.mxu0 %v2070
          %2166 = vmatprep.subr.mxu0 0.0
          %2167 = vmatpush1.msra.mxu0 %v2071
          %2168 = vmatprep.subr.mxu0 0.0
          %2169 = vmatpush1.msra.mxu0 %v2072
          %2170 = vmatprep.subr.mxu0 0.0
          %2171 = vmatpush1.msra.mxu0 %v2073
          %2172 = vmatprep.subr.mxu0 0.0
          %2173 = vmatpush1.msra.mxu0 %v2074
          %2174 = vmatprep.subr.mxu0 0.0
          %2175 = vmatpush1.msra.mxu0 %v2075
          %2176 = vmatprep.subr.mxu0 0.0
          %2177 = vmatpush1.msra.mxu0 %v2076
          %2178 = vmatprep.subr.mxu0 0.0
          %2179 = vmatpush1.msra.mxu0 %v2077
          %2180 = vmatprep.subr.mxu0 0.0
          %2181 = vmatpush1.msra.mxu0 %v2078
          %2182 = vmatprep.subr.mxu0 0.0
          %2183 = vmatpush1.msra.mxu0 %v2079
          %2184 = vmatprep.subr.mxu0 0.0
          %2185 = vmatpush1.msra.mxu0 %v2080
          %2186 = vmatprep.subr.mxu0 0.0
          %2187 = vmatpush1.msra.mxu0 %v2081
          %2188 = vmatprep.subr.mxu0 0.0
          %2189 = vmatpush1.msra.mxu0 %v2082
          %2190 = vmatprep.subr.mxu0 0.0
          %2191 = vmatpush1.msra.mxu0 %v2083
          %2192 = vmatprep.subr.mxu0 0.0
          %2193 = vmatpush1.msra.mxu0 %v2084
          %2194 = vmatprep.subr.mxu0 0.0
          %2195 = vmatpush1.msra.mxu0 %v2085
          %2196 = vmatprep.subr.mxu0 0.0
          %2197 = vmatpush1.msra.mxu0 %v2086
          %2198 = vmatprep.subr.mxu0 0.0
          %2199 = vmatpush1.msra.mxu0 %v2087
          %2200 = vmatprep.subr.mxu0 0.0
          %2201 = vmatpush1.msra.mxu0 %v2088
          %2202 = vmatprep.subr.mxu0 0.0
          %2203 = vmatpush1.msra.mxu0 %v2089
          %2204 = vmatprep.subr.mxu0 0.0
          %2205 = vmatpush1.msra.mxu0 %v2090
          %2206 = vmatprep.subr.mxu0 0.0
          %2207 = vmatpush1.msra.mxu0 %v2091
          %2208 = vmatprep.subr.mxu0 0.0
          %2209 = vmatpush1.msra.mxu0 %v2092
          %2210 = vmatprep.subr.mxu0 0.0
          %2211 = vmatpush1.msra.mxu0 %v2093
          %2212 = vmatprep.subr.mxu0 0.0
          %2213 = vmatpush1.msra.mxu0 %v2094
          %2214 = vmatprep.subr.mxu0 0.0
          %2215 = vmatpush1.msra.mxu0 %v2095
          %2216 = vmatprep.subr.mxu0 0.0
          %2217 = vmatpush1.msra.mxu0 %v2096
          %2218 = vmatprep.subr.mxu0 0.0
          %2219 = vmatpush1.msra.mxu0 %v2097
          %2220 = vmatprep.subr.mxu0 0.0
          %2221 = vmatpush1.msra.mxu0 %v2098
          %2222 = vmatprep.subr.mxu0 0.0
          %2223 = vmatpush1.msra.mxu0 %v2099
          %2224 = vmatprep.subr.mxu0 0.0
          %2225 = vmatpush1.msra.mxu0 %v2100
          %2226 = vmatprep.mubr.f32.mxu0 %v2156
          %2227 = vmatmul.mubr.f32.gmra.mrb[0].mxu0 %v2148
          %v2228 = vpop.f32.mrb[0].mxu0
          %v2229 = vadd.f32 %v2138, %v2228
          %v2230 = vpop.f32.mrb[0].mxu0
          %2231 = vdwg.mxu0
          %2232 = vmatprep.subr.mxu0 0.0
          %2233 = vmatpush1.msra.mxu0 %v2101
          %2234 = vmatprep.subr.mxu0 0.0
          %2235 = vmatpush1.msra.mxu0 %v2102
          %2236 = vmatprep.subr.mxu0 0.0
          %2237 = vmatpush1.msra.mxu0 %v2103
          %2238 = vmatprep.subr.mxu0 0.0
          %2239 = vmatpush1.msra.mxu0 %v2104
          %2240 = vmatprep.subr.mxu0 0.0
          %2241 = vmatpush1.msra.mxu0 %v2105
          %2242 = vmatprep.subr.mxu0 0.0
          %2243 = vmatpush1.msra.mxu0 %v2106
          %2244 = vmatprep.subr.mxu0 0.0
          %2245 = vmatpush1.msra.mxu0 %v2107
          %2246 = vmatprep.subr.mxu0 0.0
          %2247 = vmatpush1.msra.mxu0 %v2108
          %2248 = vmatprep.subr.mxu0 0.0
          %2249 = vmatpush1.msra.mxu0 %v2109
          %2250 = vmatprep.subr.mxu0 0.0
          %2251 = vmatpush1.msra.mxu0 %v2110
          %2252 = vmatprep.subr.mxu0 0.0
          %2253 = vmatpush1.msra.mxu0 %v2111
          %2254 = vmatprep.subr.mxu0 0.0
          %2255 = vmatpush1.msra.mxu0 %v2112
          %2256 = vmatprep.subr.mxu0 0.0
          %2257 = vmatpush1.msra.mxu0 %v2113
          %2258 = vmatprep.subr.mxu0 0.0
          %2259 = vmatpush1.msra.mxu0 %v2114
          %2260 = vmatprep.subr.mxu0 0.0
          %2261 = vmatpush1.msra.mxu0 %v2115
          %2262 = vmatprep.subr.mxu0 0.0
          %2263 = vmatpush1.msra.mxu0 %v2116
          %2264 = vmatprep.subr.mxu0 0.0
          %2265 = vmatpush1.msra.mxu0 %v2117
          %2266 = vmatprep.subr.mxu0 0.0
          %2267 = vmatpush1.msra.mxu0 %v2118
          %2268 = vmatprep.subr.mxu0 0.0
          %2269 = vmatpush1.msra.mxu0 %v2119
          %2270 = vmatprep.subr.mxu0 0.0
          %2271 = vmatpush1.msra.mxu0 %v2120
          %2272 = vmatprep.subr.mxu0 0.0
          %2273 = vmatpush1.msra.mxu0 %v2121
          %2274 = vmatprep.subr.mxu0 0.0
          %2275 = vmatpush1.msra.mxu0 %v2122
          %2276 = vmatprep.subr.mxu0 0.0
          %2277 = vmatpush1.msra.mxu0 %v2123
          %2278 = vmatprep.subr.mxu0 0.0
          %2279 = vmatpush1.msra.mxu0 %v2124
          %2280 = vmatprep.subr.mxu0 0.0
          %2281 = vmatpush1.msra.mxu0 %v2125
          %2282 = vmatprep.subr.mxu0 0.0
          %2283 = vmatpush1.msra.mxu0 %v2126
          %2284 = vmatprep.subr.mxu0 0.0
          %2285 = vmatpush1.msra.mxu0 %v2127
          %2286 = vmatprep.subr.mxu0 0.0
          %2287 = vmatpush1.msra.mxu0 %v2128
          %2288 = vmatprep.subr.mxu0 0.0
          %2289 = vmatpush1.msra.mxu0 %v2129
          %2290 = vmatprep.subr.mxu0 0.0
          %2291 = vmatpush1.msra.mxu0 %v2130
          %2292 = vmatprep.subr.mxu0 0.0
          %2293 = vmatpush1.msra.mxu0 %v2131
          %2294 = vmatprep.subr.mxu0 0.0
          %2295 = vmatpush1.msra.mxu0 %v2132
          %2296 = vmatprep.mubr.f32.mxu0 %v2157
          %2297 = vmatmul.mubr.f32.gmra.mrb[0].mxu0 %v2155
          %v2298 = vpop.f32.mrb[0].mxu0
          %v2299 = vadd.f32 %v2229, %v2298
          %v2300 = vpop.f32.mrb[0].mxu0
          %2301 = vdwg.mxu0
          %vm2302 = vcmask 41984
          %2303 = vst.msk [vmem:[#allocation4] sm:$0x3] %vm2302, %v2299
        $region56: #{qnetwork_forward.5} parent=47 // pred_fallthru
          _
        // Predicated region
        $region57: #{qnetwork_forward.5} parent=47 // pred_check
          %p2304 = pneg %p184
        $region58: #{qnetwork_forward.5} parent=47 // pred_check_branch
          %2306 = sbr.rel (%p2304) target = $region60
        $region59: #{qnetwork_forward.5} parent=47 // pred_region
          %s2308 = ssub.s32 32, 32
          %2309 = vsyncadd [#allocation5], %s2308
          %s2311 = sshll.u32 [#allocation4], 4
          %s2312 = int_to_ptr.vmem [resolvable:$true] %s2311
          %2314 = dma.vmem_to_hbm [thread:$0]  %s2312, 32, %s7, [#allocation5]
        $region60: #{qnetwork_forward.5} parent=47 // pred_fallthru
          _
        // Predicated region
        $region61: #{qnetwork_forward.5} parent=47 // pred_check
          %p2315 = pneg %p184
        $region62: #{qnetwork_forward.5} parent=47 // pred_check_branch
          %2317 = sbr.rel (%p2315) target = $region64
        $region63: #{qnetwork_forward.5} parent=47 // pred_region
          %2318 = dma.done [#allocation5], 32
        $region64: #{qnetwork_forward.5} parent=47 // pred_fallthru
          _
      $region48: #{qnetwork_forward.5} parent=5 // pred_fallthru
        _
      %p2319 = scmp.le.s32.totalorder 2, %s14
      // Predicated region
      $region65: #{qnetwork_forward.5} parent=5 // pred_check
        %p2320 = pneg %p2319
      $region66: #{qnetwork_forward.5} parent=5 // pred_check_branch
        %2322 = sbr.rel (%p2320) target = $region68
      $region67: #{qnetwork_forward.5} parent=5 // pred_region
        %s2323 = ssub.s32 %s14, 2
      $region68: #{qnetwork_forward.5} parent=5 // pred_fallthru
        _
    $region6: #{qnetwork_forward.5} parent=1 // loop_footer
      %s18 = sadd.s32 1, %s14
    $region7: #{qnetwork_forward.5} parent=1 // loop_footer_branch
      %13 = sbr.rel target = $region3
    $region8: #{qnetwork_forward.5} parent=1 // loop_exit
      _
    %2324 = vsyncpa [#allocation5], 1
    %s2325 = scalar_lea.sflag [#allocation5], 1
    %2326 = vsyncpa %s2325, 1

</llo_original>
